<compile_context>
chip_gen: v6e
topology: v6e:2x2x1
jax: 0.10.0
libtpu: 0.0.40
codegen_flags: <defaults>
</compile_context>

<pallas_src>
import functools

import numpy as np
import jax
import jax.numpy as jnp
from jax.experimental import pallas as pl
from jax.experimental.pallas import tpu as pltpu

LANE = 128
MATMUL_OPERAND_DTYPE = jnp.bfloat16   # jnp.float32 for exact-f32 conv operands
BN_EPS = 1e-5


def _round_up(x, m):
    return (x + m - 1) // m * m


# ---------------------------------------------------------------------------
# Kernel 1: PixLevelModule (1x1 convs + channel mean/max + 3->6->1 MLP gate)
# ---------------------------------------------------------------------------
def _pixlevel_kernel(x_ref, wavg_ref, wmax_ref, w1_ref, b1_ref, w2_ref, b2_ref,
                     y_ref):
    x = x_ref[...]                                            # (T, Cs) f32
    a = jnp.maximum(
        jnp.dot(x, wavg_ref[...], preferred_element_type=jnp.float32), 0.0)
    m = jnp.maximum(
        jnp.dot(x, wmax_ref[...], preferred_element_type=jnp.float32), 0.0)
    c = x.shape[-1]
    avg = jnp.sum(a, axis=-1, keepdims=True) * (1.0 / c)      # mean over channels
    mx = jnp.max(m, axis=-1, keepdims=True)                   # max  over channels
    feats = jnp.concatenate([avg, mx, avg + mx], axis=-1)     # (T, 3)
    h = jnp.maximum(
        jnp.dot(feats, w1_ref[...], preferred_element_type=jnp.float32)
        + b1_ref[...], 0.0)                                   # (T, 6)
    # Linear(6, 1) as broadcast-mul + lane reduce (avoids a width-1 matmul).
    gate = jnp.sum(h * w2_ref[...], axis=-1, keepdims=True) + b2_ref[...]
    y_ref[...] = gate * x


def pixlevel_forward(skip_x, wavg, wmax, w1, b1, w2, b2, row_tile=256):
    """skip_x: (B, Cs, H, W) NCHW f32 -> gated skip connection, NHWC (B,H,W,Cs)."""
    B, Cs, H, W = skip_x.shape
    N = B * H * W
    tile = min(row_tile, N)
    x_flat = jnp.transpose(skip_x, (0, 2, 3, 1)).reshape(N, Cs)

    full2 = lambda i: (0, 0)
    y = pl.pallas_call(
        _pixlevel_kernel,
        out_shape=jax.ShapeDtypeStruct((N, Cs), jnp.float32),
        grid=(pl.cdiv(N, tile),),
        in_specs=[
            pl.BlockSpec((tile, Cs), lambda i: (i, 0)),
            pl.BlockSpec(wavg.shape, full2),
            pl.BlockSpec(wmax.shape, full2),
            pl.BlockSpec(w1.shape, full2),
            pl.BlockSpec(b1.shape, full2),
            pl.BlockSpec(w2.shape, full2),
            pl.BlockSpec(b2.shape, full2),
        ],
        out_specs=pl.BlockSpec((tile, Cs), lambda i: (i, 0)),
        compiler_params=pltpu.CompilerParams(
            dimension_semantics=("parallel",),
            vmem_limit_bytes=32 * 1024 * 1024),
    )(x_flat, wavg, wmax, w1, b1, w2, b2)
    return y.reshape(B, H, W, Cs)


# ---------------------------------------------------------------------------
# Kernel 2: Conv3x3 as a single im2col matmul + per-batch-item partial BN stats
# ---------------------------------------------------------------------------
def _conv_im2col_kernel(xpad_ref, w_ref, acc_ref, part_ref, *, ksize):
    _, Hp, Wp, C = xpad_ref.shape
    H = Hp - (ksize - 1)
    W = Wp - (ksize - 1)
    x = xpad_ref[0]                                           # (Hp, Wp, C)
    # im2col slab: one (H*W, ksize*ksize*C) block -> a single full-depth matmul.
    cols = [x[ki:ki + H, kj:kj + W, :]
            for ki in range(ksize) for kj in range(ksize)]
    patches = jnp.concatenate(cols, axis=-1).reshape(H * W, ksize * ksize * C)
    acc = jnp.dot(patches.astype(MATMUL_OPERAND_DTYPE), w_ref[...],
                  preferred_element_type=jnp.float32)         # (H*W, Cp_out) f32
    acc_ref[0] = acc
    # single-pass partial statistics for this grid step (f32 accumulation)
    part_ref[0] = jnp.concatenate(
        [jnp.sum(acc, axis=0, keepdims=True),
         jnp.sum(acc * acc, axis=0, keepdims=True)], axis=0)  # (2, Cp_out)


# ---------------------------------------------------------------------------
# Kernel 3: BatchNorm finalize (global batch stats) folded to scale/shift + ReLU
# ---------------------------------------------------------------------------
def _bn_relu_kernel(acc_ref, part_ref, gamma_ref, beta_ref, y_ref, *, inv_n, eps):
    tot = jnp.sum(part_ref[...], axis=0)                      # (2, Cp_out)
    mean = tot[0:1, :] * inv_n
    var = jnp.maximum(tot[1:2, :] * inv_n - mean * mean, 0.0)  # biased variance
    scale = gamma_ref[...] * jax.lax.rsqrt(var + eps)
    shift = beta_ref[...] - mean * scale
    y_ref[0] = jnp.maximum(acc_ref[0] * scale + shift, 0.0)   # BN + ReLU


def conv_bn_relu(x_nhwc, w2d, gamma_p, beta_p, ksize=3):
    """One ConvBatchNorm block on channel-padded NHWC input.

    x_nhwc : (B, H, W, Cp)  NHWC, Cp multiple of 128, padded channels are zero
    w2d    : (ksize*ksize*Cp, Cp_out) flattened HWIO conv weight (Cin/Cout padded)
    gamma_p, beta_p : (1, Cp_out) BN affine params (zero in padded columns)
    returns (B, H, W, Cp_out) f32 (padded output channels stay zero)
    """
    B, H, W, Cp = x_nhwc.shape
    Cp_out = w2d.shape[1]
    pad = (ksize - 1) // 2                 # PyTorch: padding=1 for kernel_size=3
    xpad = jnp.pad(x_nhwc, ((0, 0), (pad, pad), (pad, pad), (0, 0)))
    Hp, Wp = H + 2 * pad, W + 2 * pad
    Ho, Wo = Hp - ksize + 1, Wp - ksize + 1

    cparams = pltpu.CompilerParams(
        dimension_semantics=("parallel",),      # batch axis -> megacore / 2 TCs
        vmem_limit_bytes=32 * 1024 * 1024)

    # Phase 1: conv (single im2col matmul) + per-batch-item sum / sum-of-squares.
    acc, part = pl.pallas_call(
        functools.partial(_conv_im2col_kernel, ksize=ksize),
        out_shape=(jax.ShapeDtypeStruct((B, Ho * Wo, Cp_out), jnp.float32),
                   jax.ShapeDtypeStruct((B, 2, Cp_out), jnp.float32)),
        grid=(B,),
        in_specs=[
            pl.BlockSpec((1, Hp, Wp, Cp), lambda b: (b, 0, 0, 0)),
            pl.BlockSpec(w2d.shape, lambda b: (0, 0)),
        ],
        out_specs=(pl.BlockSpec((1, Ho * Wo, Cp_out), lambda b: (b, 0, 0)),
                   pl.BlockSpec((1, 2, Cp_out), lambda b: (b, 0, 0))),
        compiler_params=cparams,
    )(xpad, w2d)

    # Phase 2: finalize BN stats over the FULL (B, H, W) extent, apply + ReLU.
    inv_n = 1.0 / float(B * Ho * Wo)
    y = pl.pallas_call(
        functools.partial(_bn_relu_kernel, inv_n=inv_n, eps=BN_EPS),
        out_shape=jax.ShapeDtypeStruct((B, Ho * Wo, Cp_out), jnp.float32),
        grid=(B,),
        in_specs=[
            pl.BlockSpec((1, Ho * Wo, Cp_out), lambda b: (b, 0, 0)),
            pl.BlockSpec((B, 2, Cp_out), lambda b: (0, 0, 0)),
            pl.BlockSpec((1, Cp_out), lambda b: (0, 0)),
            pl.BlockSpec((1, Cp_out), lambda b: (0, 0)),
        ],
        out_specs=pl.BlockSpec((1, Ho * Wo, Cp_out), lambda b: (b, 0, 0)),
        compiler_params=cparams,
    )(acc, part, gamma_p, beta_p)
    return y.reshape(B, Ho, Wo, Cp_out)


# ---------------------------------------------------------------------------
# UpblockAttention forward
# ---------------------------------------------------------------------------
def upblock_attention_forward(x, skip_x, params, out_channels):
    """x: (B, Cx, h, w); skip_x: (B, Cs, 2h, 2w).  Returns (B, out_ch, 2h, 2w)."""
    B, Cx, h, w = x.shape
    _, Cs, H, W = skip_x.shape
    assert H == 2 * h and W == 2 * w

    # PixLevelModule gating of the skip connection (Pallas kernel 1).
    skip_att = pixlevel_forward(skip_x, params["pix_wavg"], params["pix_wmax"],
                                params["pix_w1"], params["pix_b1"],
                                params["pix_w2"], params["pix_b2"])  # (B,H,W,Cs)

    # nn.Upsample(scale_factor=2, mode='nearest') + channel concat + pad to 128
    # channels.  Pure data movement: XLA fuses repeat/concat/pad into the single
    # materialization of the first conv's input (no extra HBM round trip).
    x_nhwc = jnp.transpose(x, (0, 2, 3, 1))
    up = jnp.repeat(jnp.repeat(x_nhwc, 2, axis=1), 2, axis=2)        # (B,H,W,Cx)
    cin = Cs + Cx
    cp_in = _round_up(cin, LANE)
    feat = jnp.concatenate([skip_att, up], axis=-1)                  # (B,H,W,cin)
    feat = jnp.pad(feat, ((0, 0), (0, 0), (0, 0), (0, cp_in - cin)))

    # nb_Conv x (Conv3x3 -> BatchNorm(batch stats) -> ReLU), lane-dense channels.
    for layer in params["convs"]:
        feat = conv_bn_relu(feat, layer["w2d"], layer["gamma"], layer["beta"])

    out = feat[..., :out_channels]                                   # (B,H,W,out)
    return jnp.transpose(out, (0, 3, 1, 2))                          # NCHW


def _prep_conv_layer(w_oihw, gamma, beta, cin_pad, cout_pad):
    cout, cin, kh, kw = w_oihw.shape
    w = jnp.transpose(w_oihw, (2, 3, 1, 0))                          # OIHW -> HWIO
    w = jnp.pad(w, ((0, 0), (0, 0), (0, cin_pad - cin), (0, cout_pad - cout)))
    w2d = w.reshape(kh * kw * cin_pad, cout_pad).astype(MATMUL_OPERAND_DTYPE)
    g = jnp.pad(gamma, (0, cout_pad - cout)).reshape(1, cout_pad)
    bt = jnp.pad(beta, (0, cout_pad - cout)).reshape(1, cout_pad)
    return {"w2d": w2d, "gamma": g, "beta": bt}


if __name__ == "__main__":
    # UpblockAttention(in_channels=8, out_channels=8, nb_Conv=2)
    #   x      : (B, in_channels//2, h, w)   = (2, 4, 8, 8)
    #   skip_x : (B, in_channels//2, 2h, 2w) = (2, 4, 16, 16)
    #   output : (B, out_channels, 2h, 2w)   = (2, 8, 16, 16)
    B, in_channels, out_channels, nb_conv = 2, 8, 8, 2
    h = w = 8
    Cs = Cx = in_channels // 2

    key = jax.random.PRNGKey(0)
    keys = jax.random.split(key, 8 + 3 * nb_conv)

    def unif(k, shape, fan_in):
        bound = 1.0 / float(np.sqrt(fan_in))
        return jax.random.uniform(k, shape, minval=-bound, maxval=bound,
                                  dtype=jnp.float32)

    x = jax.random.normal(keys[0], (B, Cx, h, w), dtype=jnp.float32)
    skip_x = jax.random.normal(keys[1], (B, Cs, 2 * h, 2 * w), dtype=jnp.float32)

    # PixLevelModule params: two bias-free 1x1 convs + Linear(3,6) / Linear(6,1).
    wavg = unif(keys[2], (Cs, Cs), Cs).T                 # (Cin, Cout) for x @ W^T
    wmax = unif(keys[3], (Cs, Cs), Cs).T
    w1 = unif(keys[4], (6, 3), 3).T                      # Linear(3,6) -> (3, 6)
    b1 = unif(keys[5], (6,), 3).reshape(1, 6)
    w2 = unif(keys[6], (1, 6), 6)                        # kept (1,6): mul + reduce
    b2 = unif(keys[7], (1,), 6).reshape(1, 1)

    # nb_Conv x ConvBatchNorm params.  Conv bias is omitted: it is exactly
    # cancelled by the training-mode BatchNorm mean subtraction (folded away).
    cp_in = _round_up(in_channels, LANE)
    cp_out = _round_up(out_channels, LANE)
    convs = []
    cin, cin_pad = in_channels, cp_in
    ki = 8
    for _ in range(nb_conv):
        w_oihw = unif(keys[ki], (out_channels, cin, 3, 3), cin * 9)
        gamma = 1.0 + 0.01 * jax.random.normal(keys[ki + 1], (out_channels,),
                                               dtype=jnp.float32)
        beta = 0.01 * jax.random.normal(keys[ki + 2], (out_channels,),
                                        dtype=jnp.float32)
        convs.append(_prep_conv_layer(w_oihw, gamma, beta, cin_pad, cp_out))
        cin, cin_pad = out_channels, cp_out
        ki += 3

    params = {"pix_wavg": wavg, "pix_wmax": wmax, "pix_w1": w1, "pix_b1": b1,
              "pix_w2": w2, "pix_b2": b2, "convs": convs}

    fwd = jax.jit(functools.partial(upblock_attention_forward,
                                    out_channels=out_channels))
    out = jax.block_until_ready(fwd(x, skip_x, params))
    assert out.shape == (B, out_channels, 2 * h, 2 * w), out.shape
    assert bool(jnp.all(jnp.isfinite(out)))
    print("KERNEL_OK")
</pallas_src>

<mosaic_0001>
module attributes {stable_mosaic.version = 11 : i64} {
  func.func @_pixlevel_kernel(%arg0: i32, %arg1: memref<256x4xf32, #tpu.memory_space<vmem>>, %arg2: memref<4x4xf32, #tpu.memory_space<vmem>>, %arg3: memref<4x4xf32, #tpu.memory_space<vmem>>, %arg4: memref<3x6xf32, #tpu.memory_space<vmem>>, %arg5: memref<1x6xf32, #tpu.memory_space<vmem>>, %arg6: memref<1x6xf32, #tpu.memory_space<vmem>>, %arg7: memref<1x1xf32, #tpu.memory_space<vmem>>, %arg8: memref<256x4xf32, #tpu.memory_space<vmem>>) attributes {dimension_semantics = [#tpu.dimension_semantics<parallel>], iteration_bounds = array<i64: 2>, scalar_prefetch = 0 : i64, scratch_operands = 0 : i64, tpu.core_type = #tpu.core_type<tc>, window_params = [{transform_indices = @transform_0, window_bounds = array<i64: 256, 4>}, {pipeline_mode = #tpu.pipeline_mode<synchronous>, transform_indices = @transform_1, window_bounds = array<i64: 4, 4>}, {pipeline_mode = #tpu.pipeline_mode<synchronous>, transform_indices = @transform_2, window_bounds = array<i64: 4, 4>}, {pipeline_mode = #tpu.pipeline_mode<synchronous>, transform_indices = @transform_3, window_bounds = array<i64: 3, 6>}, {pipeline_mode = #tpu.pipeline_mode<synchronous>, transform_indices = @transform_4, window_bounds = array<i64: 1, 6>}, {pipeline_mode = #tpu.pipeline_mode<synchronous>, transform_indices = @transform_5, window_bounds = array<i64: 1, 6>}, {pipeline_mode = #tpu.pipeline_mode<synchronous>, transform_indices = @transform_6, window_bounds = array<i64: 1, 1>}, {transform_indices = @transform_7, window_bounds = array<i64: 256, 4>}]} {
    %c0 = arith.constant 0 : index
    %c0_0 = arith.constant 0 : index
    %0 = vector.load %arg1[%c0, %c0_0] : memref<256x4xf32, #tpu.memory_space<vmem>>, vector<256x4xf32>
    %c0_1 = arith.constant 0 : index
    %c0_2 = arith.constant 0 : index
    %1 = vector.load %arg2[%c0_1, %c0_2] : memref<4x4xf32, #tpu.memory_space<vmem>>, vector<4x4xf32>
    %cst = arith.constant dense<0.000000e+00> : vector<256x4xf32>
    %2 = tpu.matmul %0, %1, %cst {dimension_numbers = #tpu.dot_dimension_numbers<[1], [0], [0], [1], [0, 0, 1, 1], [], []>} : vector<256x4xf32>, vector<4x4xf32>, vector<256x4xf32> -> vector<256x4xf32>
    %cst_3 = arith.constant 0.000000e+00 : f32
    %3 = vector.broadcast %cst_3 : f32 to vector<256x4xf32>
    %4 = arith.maximumf %2, %3 : vector<256x4xf32>
    %c0_4 = arith.constant 0 : index
    %c0_5 = arith.constant 0 : index
    %5 = vector.load %arg3[%c0_4, %c0_5] : memref<4x4xf32, #tpu.memory_space<vmem>>, vector<4x4xf32>
    %cst_6 = arith.constant dense<0.000000e+00> : vector<256x4xf32>
    %6 = tpu.matmul %0, %5, %cst_6 {dimension_numbers = #tpu.dot_dimension_numbers<[1], [0], [0], [1], [0, 0, 1, 1], [], []>} : vector<256x4xf32>, vector<4x4xf32>, vector<256x4xf32> -> vector<256x4xf32>
    %cst_7 = arith.constant 0.000000e+00 : f32
    %7 = vector.broadcast %cst_7 : f32 to vector<256x4xf32>
    %8 = arith.maximumf %6, %7 : vector<256x4xf32>
    %cst_8 = arith.constant dense<0.000000e+00> : vector<256xf32>
    %9 = vector.multi_reduction <add>, %4, %cst_8 [1] : vector<256x4xf32> to vector<256xf32>
    %10 = vector.shape_cast %9 : vector<256xf32> to vector<256x1xf32>
    %cst_9 = arith.constant 2.500000e-01 : f32
    %11 = vector.broadcast %cst_9 : f32 to vector<256x1xf32>
    %12 = arith.mulf %10, %11 : vector<256x1xf32>
    %cst_10 = arith.constant dense<0xFF800000> : vector<256xf32>
    %13 = vector.multi_reduction <maximumf>, %8, %cst_10 [1] : vector<256x4xf32> to vector<256xf32>
    %14 = vector.shape_cast %13 : vector<256xf32> to vector<256x1xf32>
    %15 = arith.addf %12, %14 : vector<256x1xf32>
    %16 = tpu.concatenate %12, %14, %15 in 1 : vector<256x1xf32>, vector<256x1xf32>, vector<256x1xf32> -> vector<256x3xf32>
    %c0_11 = arith.constant 0 : index
    %c0_12 = arith.constant 0 : index
    %17 = vector.load %arg4[%c0_11, %c0_12] : memref<3x6xf32, #tpu.memory_space<vmem>>, vector<3x6xf32>
    %cst_13 = arith.constant dense<0.000000e+00> : vector<256x6xf32>
    %18 = tpu.matmul %16, %17, %cst_13 {dimension_numbers = #tpu.dot_dimension_numbers<[1], [0], [0], [1], [0, 0, 1, 1], [], []>} : vector<256x3xf32>, vector<3x6xf32>, vector<256x6xf32> -> vector<256x6xf32>
    %c0_14 = arith.constant 0 : index
    %c0_15 = arith.constant 0 : index
    %19 = vector.load %arg5[%c0_14, %c0_15] : memref<1x6xf32, #tpu.memory_space<vmem>>, vector<1x6xf32>
    %20 = vector.broadcast %19 : vector<1x6xf32> to vector<256x6xf32>
    %21 = arith.addf %18, %20 : vector<256x6xf32>
    %cst_16 = arith.constant 0.000000e+00 : f32
    %22 = vector.broadcast %cst_16 : f32 to vector<256x6xf32>
    %23 = arith.maximumf %21, %22 : vector<256x6xf32>
    %c0_17 = arith.constant 0 : index
    %c0_18 = arith.constant 0 : index
    %24 = vector.load %arg6[%c0_17, %c0_18] : memref<1x6xf32, #tpu.memory_space<vmem>>, vector<1x6xf32>
    %25 = vector.broadcast %24 : vector<1x6xf32> to vector<256x6xf32>
    %26 = arith.mulf %23, %25 : vector<256x6xf32>
    %cst_19 = arith.constant dense<0.000000e+00> : vector<256xf32>
    %27 = vector.multi_reduction <add>, %26, %cst_19 [1] : vector<256x6xf32> to vector<256xf32>
    %28 = vector.shape_cast %27 : vector<256xf32> to vector<256x1xf32>
    %c0_20 = arith.constant 0 : index
    %c0_21 = arith.constant 0 : index
    %29 = vector.load %arg7[%c0_20, %c0_21] : memref<1x1xf32, #tpu.memory_space<vmem>>, vector<1x1xf32>
    %30 = vector.broadcast %29 : vector<1x1xf32> to vector<256x1xf32>
    %31 = arith.addf %28, %30 : vector<256x1xf32>
    %32 = vector.broadcast %31 : vector<256x1xf32> to vector<256x4xf32>
    %33 = arith.mulf %32, %0 : vector<256x4xf32>
    %c0_22 = arith.constant 0 : index
    %c0_23 = arith.constant 0 : index
    %34 = vector.load %arg8[%c0_22, %c0_23] : memref<256x4xf32, #tpu.memory_space<vmem>>, vector<256x4xf32>
    tpu.vector_store %arg8[%c0_22, %c0_23], %33 {strides = array<i32>} : memref<256x4xf32, #tpu.memory_space<vmem>>, vector<256x4xf32>,
    return
  }
  func.func @transform_0(%arg0: i32) -> (i32, i32) {
    %c0_i32 = arith.constant 0 : i32
    %c0_i32_0 = arith.constant 0 : i32
    return %arg0, %c0_i32 : i32, i32
  }
  func.func @transform_1(%arg0: i32) -> (i32, i32) {
    %c0_i32 = arith.constant 0 : i32
    %c0_i32_0 = arith.constant 0 : i32
    %c0_i32_1 = arith.constant 0 : i32
    return %c0_i32, %c0_i32_0 : i32, i32
  }
  func.func @transform_2(%arg0: i32) -> (i32, i32) {
    %c0_i32 = arith.constant 0 : i32
    %c0_i32_0 = arith.constant 0 : i32
    %c0_i32_1 = arith.constant 0 : i32
    return %c0_i32, %c0_i32_0 : i32, i32
  }
  func.func @transform_3(%arg0: i32) -> (i32, i32) {
    %c0_i32 = arith.constant 0 : i32
    %c0_i32_0 = arith.constant 0 : i32
    %c0_i32_1 = arith.constant 0 : i32
    return %c0_i32, %c0_i32_0 : i32, i32
  }
  func.func @transform_4(%arg0: i32) -> (i32, i32) {
    %c0_i32 = arith.constant 0 : i32
    %c0_i32_0 = arith.constant 0 : i32
    %c0_i32_1 = arith.constant 0 : i32
    return %c0_i32, %c0_i32_0 : i32, i32
  }
  func.func @transform_5(%arg0: i32) -> (i32, i32) {
    %c0_i32 = arith.constant 0 : i32
    %c0_i32_0 = arith.constant 0 : i32
    %c0_i32_1 = arith.constant 0 : i32
    return %c0_i32, %c0_i32_0 : i32, i32
  }
  func.func @transform_6(%arg0: i32) -> (i32, i32) {
    %c0_i32 = arith.constant 0 : i32
    %c0_i32_0 = arith.constant 0 : i32
    %c0_i32_1 = arith.constant 0 : i32
    return %c0_i32, %c0_i32_0 : i32, i32
  }
  func.func @transform_7(%arg0: i32) -> (i32, i32) {
    %c0_i32 = arith.constant 0 : i32
    %c0_i32_0 = arith.constant 0 : i32
    return %arg0, %c0_i32 : i32, i32
  }
}

module attributes {stable_mosaic.version = 11 : i64} {
  func.func @_conv_im2col_kernel(%arg0: i32, %arg1: memref<1x18x18x128xf32, #tpu.memory_space<vmem>>, %arg2: memref<1152x128xbf16, #tpu.memory_space<vmem>>, %arg3: memref<1x256x128xf32, #tpu.memory_space<vmem>>, %arg4: memref<1x2x128xf32, #tpu.memory_space<vmem>>) attributes {dimension_semantics = [#tpu.dimension_semantics<parallel>], iteration_bounds = array<i64: 2>, scalar_prefetch = 0 : i64, scratch_operands = 0 : i64, tpu.core_type = #tpu.core_type<tc>, window_params = [{transform_indices = @transform_0, window_bounds = array<i64: 1, 18, 18, 128>}, {pipeline_mode = #tpu.pipeline_mode<synchronous>, transform_indices = @transform_1, window_bounds = array<i64: 1152, 128>}, {transform_indices = @transform_2, window_bounds = array<i64: 1, 256, 128>}, {transform_indices = @transform_3, window_bounds = array<i64: 1, 2, 128>}]} {
    %c0 = arith.constant 0 : index
    %c0_0 = arith.constant 0 : index
    %c0_1 = arith.constant 0 : index
    %c0_2 = arith.constant 0 : index
    %0 = vector.load %arg1[%c0, %c0_0, %c0_1, %c0_2] : memref<1x18x18x128xf32, #tpu.memory_space<vmem>>, vector<1x18x18x128xf32>
    %1 = vector.shape_cast %0 : vector<1x18x18x128xf32> to vector<18x18x128xf32>
    %2 = vector.extract_strided_slice %1 {offsets = [0, 0, 0], sizes = [16, 16, 128], strides = [1, 1, 1]} : vector<18x18x128xf32> to vector<16x16x128xf32>
    %3 = vector.extract_strided_slice %1 {offsets = [0, 1, 0], sizes = [16, 16, 128], strides = [1, 1, 1]} : vector<18x18x128xf32> to vector<16x16x128xf32>
    %4 = vector.extract_strided_slice %1 {offsets = [0, 2, 0], sizes = [16, 16, 128], strides = [1, 1, 1]} : vector<18x18x128xf32> to vector<16x16x128xf32>
    %5 = vector.extract_strided_slice %1 {offsets = [1, 0, 0], sizes = [16, 16, 128], strides = [1, 1, 1]} : vector<18x18x128xf32> to vector<16x16x128xf32>
    %6 = vector.extract_strided_slice %1 {offsets = [1, 1, 0], sizes = [16, 16, 128], strides = [1, 1, 1]} : vector<18x18x128xf32> to vector<16x16x128xf32>
    %7 = vector.extract_strided_slice %1 {offsets = [1, 2, 0], sizes = [16, 16, 128], strides = [1, 1, 1]} : vector<18x18x128xf32> to vector<16x16x128xf32>
    %8 = vector.extract_strided_slice %1 {offsets = [2, 0, 0], sizes = [16, 16, 128], strides = [1, 1, 1]} : vector<18x18x128xf32> to vector<16x16x128xf32>
    %9 = vector.extract_strided_slice %1 {offsets = [2, 1, 0], sizes = [16, 16, 128], strides = [1, 1, 1]} : vector<18x18x128xf32> to vector<16x16x128xf32>
    %10 = vector.extract_strided_slice %1 {offsets = [2, 2, 0], sizes = [16, 16, 128], strides = [1, 1, 1]} : vector<18x18x128xf32> to vector<16x16x128xf32>
    %11 = tpu.concatenate %2, %3, %4, %5, %6, %7, %8, %9, %10 in 2 : vector<16x16x128xf32>, vector<16x16x128xf32>, vector<16x16x128xf32>, vector<16x16x128xf32>, vector<16x16x128xf32>, vector<16x16x128xf32>, vector<16x16x128xf32>, vector<16x16x128xf32>, vector<16x16x128xf32> -> vector<16x16x1152xf32>
    %12 = vector.shape_cast %11 : vector<16x16x1152xf32> to vector<256x1152xf32>
    %13 = arith.truncf %12 : vector<256x1152xf32> to vector<256x1152xbf16>
    %c0_3 = arith.constant 0 : index
    %c0_4 = arith.constant 0 : index
    %14 = vector.load %arg2[%c0_3, %c0_4] : memref<1152x128xbf16, #tpu.memory_space<vmem>>, vector<1152x128xbf16>
    %cst = arith.constant dense<0.000000e+00> : vector<256x128xf32>
    %15 = tpu.matmul %13, %14, %cst {dimension_numbers = #tpu.dot_dimension_numbers<[1], [0], [0], [1], [0, 0, 1, 1], [], []>} : vector<256x1152xbf16>, vector<1152x128xbf16>, vector<256x128xf32> -> vector<256x128xf32>
    %c0_5 = arith.constant 0 : index
    %c0_6 = arith.constant 0 : index
    %c0_7 = arith.constant 0 : index
    %16 = vector.load %arg3[%c0_5, %c0_6, %c0_7] : memref<1x256x128xf32, #tpu.memory_space<vmem>>, vector<1x256x128xf32>
    %17 = vector.shape_cast %16 : vector<1x256x128xf32> to vector<256x128xf32>
    %18 = vector.shape_cast %15 : vector<256x128xf32> to vector<1x256x128xf32>
    tpu.vector_store %arg3[%c0_5, %c0_6, %c0_7], %18 {strides = array<i32>} : memref<1x256x128xf32, #tpu.memory_space<vmem>>, vector<1x256x128xf32>,
    %cst_8 = arith.constant dense<0.000000e+00> : vector<128xf32>
    %19 = vector.multi_reduction <add>, %15, %cst_8 [0] : vector<256x128xf32> to vector<128xf32>
    %20 = vector.shape_cast %19 : vector<128xf32> to vector<1x128xf32>
    %21 = arith.mulf %15, %15 : vector<256x128xf32>
    %cst_9 = arith.constant dense<0.000000e+00> : vector<128xf32>
    %22 = vector.multi_reduction <add>, %21, %cst_9 [0] : vector<256x128xf32> to vector<128xf32>
    %23 = vector.shape_cast %22 : vector<128xf32> to vector<1x128xf32>
    %24 = tpu.concatenate %20, %23 in 0 : vector<1x128xf32>, vector<1x128xf32> -> vector<2x128xf32>
    %c0_10 = arith.constant 0 : index
    %c0_11 = arith.constant 0 : index
    %c0_12 = arith.constant 0 : index
    %25 = vector.load %arg4[%c0_10, %c0_11, %c0_12] : memref<1x2x128xf32, #tpu.memory_space<vmem>>, vector<1x2x128xf32>
    %26 = vector.shape_cast %25 : vector<1x2x128xf32> to vector<2x128xf32>
    %27 = vector.shape_cast %24 : vector<2x128xf32> to vector<1x2x128xf32>
    tpu.vector_store %arg4[%c0_10, %c0_11, %c0_12], %27 {strides = array<i32>} : memref<1x2x128xf32, #tpu.memory_space<vmem>>, vector<1x2x128xf32>,
    return
  }
  func.func @transform_0(%arg0: i32) -> (i32, i32, i32, i32) {
    %c0_i32 = arith.constant 0 : i32
    %c0_i32_0 = arith.constant 0 : i32
    %c0_i32_1 = arith.constant 0 : i32
    %c0_i32_2 = arith.constant 0 : i32
    return %arg0, %c0_i32, %c0_i32_0, %c0_i32_1 : i32, i32, i32, i32
  }
  func.func @transform_1(%arg0: i32) -> (i32, i32) {
    %c0_i32 = arith.constant 0 : i32
    %c0_i32_0 = arith.constant 0 : i32
    %c0_i32_1 = arith.constant 0 : i32
    return %c0_i32, %c0_i32_0 : i32, i32
  }
  func.func @transform_2(%arg0: i32) -> (i32, i32, i32) {
    %c0_i32 = arith.constant 0 : i32
    %c0_i32_0 = arith.constant 0 : i32
    %c0_i32_1 = arith.constant 0 : i32
    return %arg0, %c0_i32, %c0_i32_0 : i32, i32, i32
  }
  func.func @transform_3(%arg0: i32) -> (i32, i32, i32) {
    %c0_i32 = arith.constant 0 : i32
    %c0_i32_0 = arith.constant 0 : i32
    %c0_i32_1 = arith.constant 0 : i32
    return %arg0, %c0_i32, %c0_i32_0 : i32, i32, i32
  }
}

module attributes {stable_mosaic.version = 11 : i64} {
  func.func @_bn_relu_kernel(%arg0: i32, %arg1: memref<1x256x128xf32, #tpu.memory_space<vmem>>, %arg2: memref<2x2x128xf32, #tpu.memory_space<vmem>>, %arg3: memref<1x128xf32, #tpu.memory_space<vmem>>, %arg4: memref<1x128xf32, #tpu.memory_space<vmem>>, %arg5: memref<1x256x128xf32, #tpu.memory_space<vmem>>) attributes {dimension_semantics = [#tpu.dimension_semantics<parallel>], iteration_bounds = array<i64: 2>, scalar_prefetch = 0 : i64, scratch_operands = 0 : i64, tpu.core_type = #tpu.core_type<tc>, window_params = [{transform_indices = @transform_0, window_bounds = array<i64: 1, 256, 128>}, {pipeline_mode = #tpu.pipeline_mode<synchronous>, transform_indices = @transform_1, window_bounds = array<i64: 2, 2, 128>}, {pipeline_mode = #tpu.pipeline_mode<synchronous>, transform_indices = @transform_2, window_bounds = array<i64: 1, 128>}, {pipeline_mode = #tpu.pipeline_mode<synchronous>, transform_indices = @transform_3, window_bounds = array<i64: 1, 128>}, {transform_indices = @transform_4, window_bounds = array<i64: 1, 256, 128>}]} {
    %c0 = arith.constant 0 : index
    %c0_0 = arith.constant 0 : index
    %c0_1 = arith.constant 0 : index
    %0 = vector.load %arg2[%c0, %c0_0, %c0_1] : memref<2x2x128xf32, #tpu.memory_space<vmem>>, vector<2x2x128xf32>
    %cst = arith.constant dense<0.000000e+00> : vector<2x128xf32>
    %1 = vector.multi_reduction <add>, %0, %cst [0] : vector<2x2x128xf32> to vector<2x128xf32>
    %2 = vector.extract_strided_slice %1 {offsets = [0, 0], sizes = [1, 128], strides = [1, 1]} : vector<2x128xf32> to vector<1x128xf32>
    %cst_2 = arith.constant 0.001953125 : f32
    %3 = vector.broadcast %cst_2 : f32 to vector<1x128xf32>
    %4 = arith.mulf %2, %3 : vector<1x128xf32>
    %5 = vector.extract_strided_slice %1 {offsets = [1, 0], sizes = [1, 128], strides = [1, 1]} : vector<2x128xf32> to vector<1x128xf32>
    %cst_3 = arith.constant 0.001953125 : f32
    %6 = vector.broadcast %cst_3 : f32 to vector<1x128xf32>
    %7 = arith.mulf %5, %6 : vector<1x128xf32>
    %8 = arith.mulf %4, %4 : vector<1x128xf32>
    %9 = arith.subf %7, %8 : vector<1x128xf32>
    %cst_4 = arith.constant 0.000000e+00 : f32
    %10 = vector.broadcast %cst_4 : f32 to vector<1x128xf32>
    %11 = arith.maximumf %9, %10 : vector<1x128xf32>
    %c0_5 = arith.constant 0 : index
    %c0_6 = arith.constant 0 : index
    %12 = vector.load %arg3[%c0_5, %c0_6] : memref<1x128xf32, #tpu.memory_space<vmem>>, vector<1x128xf32>
    %cst_7 = arith.constant 9.99999974E-6 : f32
    %13 = vector.broadcast %cst_7 : f32 to vector<1x128xf32>
    %14 = arith.addf %11, %13 : vector<1x128xf32>
    %15 = math.rsqrt %14 : vector<1x128xf32>
    %16 = arith.mulf %12, %15 : vector<1x128xf32>
    %c0_8 = arith.constant 0 : index
    %c0_9 = arith.constant 0 : index
    %17 = vector.load %arg4[%c0_8, %c0_9] : memref<1x128xf32, #tpu.memory_space<vmem>>, vector<1x128xf32>
    %18 = arith.mulf %4, %16 : vector<1x128xf32>
    %19 = arith.subf %17, %18 : vector<1x128xf32>
    %c0_10 = arith.constant 0 : index
    %c0_11 = arith.constant 0 : index
    %c0_12 = arith.constant 0 : index
    %20 = vector.load %arg1[%c0_10, %c0_11, %c0_12] : memref<1x256x128xf32, #tpu.memory_space<vmem>>, vector<1x256x128xf32>
    %21 = vector.shape_cast %20 : vector<1x256x128xf32> to vector<256x128xf32>
    %22 = vector.broadcast %16 : vector<1x128xf32> to vector<256x128xf32>
    %23 = arith.mulf %21, %22 : vector<256x128xf32>
    %24 = vector.broadcast %19 : vector<1x128xf32> to vector<256x128xf32>
    %25 = arith.addf %23, %24 : vector<256x128xf32>
    %cst_13 = arith.constant 0.000000e+00 : f32
    %26 = vector.broadcast %cst_13 : f32 to vector<256x128xf32>
    %27 = arith.maximumf %25, %26 : vector<256x128xf32>
    %c0_14 = arith.constant 0 : index
    %c0_15 = arith.constant 0 : index
    %c0_16 = arith.constant 0 : index
    %28 = vector.load %arg5[%c0_14, %c0_15, %c0_16] : memref<1x256x128xf32, #tpu.memory_space<vmem>>, vector<1x256x128xf32>
    %29 = vector.shape_cast %28 : vector<1x256x128xf32> to vector<256x128xf32>
    %30 = vector.shape_cast %27 : vector<256x128xf32> to vector<1x256x128xf32>
    tpu.vector_store %arg5[%c0_14, %c0_15, %c0_16], %30 {strides = array<i32>} : memref<1x256x128xf32, #tpu.memory_space<vmem>>, vector<1x256x128xf32>,
    return
  }
  func.func @transform_0(%arg0: i32) -> (i32, i32, i32) {
    %c0_i32 = arith.constant 0 : i32
    %c0_i32_0 = arith.constant 0 : i32
    %c0_i32_1 = arith.constant 0 : i32
    return %arg0, %c0_i32, %c0_i32_0 : i32, i32, i32
  }
  func.func @transform_1(%arg0: i32) -> (i32, i32, i32) {
    %c0_i32 = arith.constant 0 : i32
    %c0_i32_0 = arith.constant 0 : i32
    %c0_i32_1 = arith.constant 0 : i32
    %c0_i32_2 = arith.constant 0 : i32
    return %c0_i32, %c0_i32_0, %c0_i32_1 : i32, i32, i32
  }
  func.func @transform_2(%arg0: i32) -> (i32, i32) {
    %c0_i32 = arith.constant 0 : i32
    %c0_i32_0 = arith.constant 0 : i32
    %c0_i32_1 = arith.constant 0 : i32
    return %c0_i32, %c0_i32_0 : i32, i32
  }
  func.func @transform_3(%arg0: i32) -> (i32, i32) {
    %c0_i32 = arith.constant 0 : i32
    %c0_i32_0 = arith.constant 0 : i32
    %c0_i32_1 = arith.constant 0 : i32
    return %c0_i32, %c0_i32_0 : i32, i32
  }
  func.func @transform_4(%arg0: i32) -> (i32, i32, i32) {
    %c0_i32 = arith.constant 0 : i32
    %c0_i32_0 = arith.constant 0 : i32
    %c0_i32_1 = arith.constant 0 : i32
    return %arg0, %c0_i32, %c0_i32_0 : i32, i32, i32
  }
}

</mosaic_0001>

<llo_original>
// kernel: upblock_attention_forward.5
$region0: #{upblock_attention_forward.5}
  #allocation0 [shape = 'u32[]', space=smem, size = 0x4, offset = 0x4, fixed_abs, tag = 'smem constant byte address 0x4 - core index']
  #allocation1 [shape = 'u32[144,128]{1,0:T(1,128)}', space=vmem, size = 0x12000, scoped, tag = 'internal scratch']
  #allocation2 [shape = 'f32[1,1]{1,0:T(1,128)S(1)}', space=vmem, size = 0x200, scoped, tag = 'scoped memory for upblock_attention_forward.5']
  %s0 = inlined_call_operand.vmem [shape: f32[512,4], index: 0, kind: input, shape index: {}]
  %s1 = inlined_call_operand.vmem [shape: f32[4,4], index: 1, kind: input, shape index: {}]
  %s2 = inlined_call_operand.vmem [shape: f32[4,4], index: 2, kind: input, shape index: {}]
  %s3 = inlined_call_operand.vmem [shape: f32[3,6], index: 3, kind: input, shape index: {}]
  %s4 = inlined_call_operand.vmem [shape: f32[1,6], index: 4, kind: input, shape index: {}]
  %s5 = inlined_call_operand.vmem [shape: f32[1,6], index: 5, kind: input, shape index: {}]
  %s6 = inlined_call_operand.<no memory space> [shape: f32[1,1], index: 6, kind: input, shape index: {}]
  %s7 = inlined_call_operand.vmem [shape: f32[512,4], index: 7, kind: output, shape index: {}]
  %s8 = sld [smem:[#allocation0]]
  $region61: #{upblock_attention_forward.5} parent=0
    _
  %s10 = ssub.s32 1, %s8
  %s11 = scalar_select 0, %s10, %s8
  %v12 = vstv %s6
  %13 = vst [vmem:[#allocation2] sm:$0x1] %v12
  loop: start=0, step=1, limit=4
  $region2: #{upblock_attention_forward.5} parent=0 // loop_pre_header
    _
  $region3: #{upblock_attention_forward.5} parent=0 // loop_header
    %s15 = sphi 0, %s19
    %p16 = scmp.ge.s32.totalorder %s15, 4
    %s25 = sphi 0, %s27
    %s28 = sphi 0, %s25
    %s29 = sphi 0, %s28
    %s45 = sphi 0, %s29
    %s49 = sphi 0, %s49
    %s51 = sphi 0, %s49
    %s52 = sphi 0, %s51
    %s66 = sphi 0, %s52
    %s70 = sphi 0, %s70
    %s72 = sphi 0, %s70
    %s73 = sphi 0, %s72
    %s87 = sphi 0, %s73
    %s91 = sphi 0, %s91
    %s93 = sphi 0, %s91
    %s94 = sphi 0, %s93
    %s108 = sphi 0, %s94
    %s112 = sphi 0, %s112
    %s114 = sphi 0, %s112
    %s115 = sphi 0, %s114
    %s129 = sphi 0, %s115
    %s133 = sphi 0, %s133
    %s135 = sphi 0, %s133
    %s136 = sphi 0, %s135
    %s150 = sphi 0, %s136
    %s154 = sphi 0, %s154
    %s156 = sphi 0, %s154
    %s157 = sphi 0, %s156
    %s171 = sphi 0, %s157
    %s177 = sphi 0, %s179
    %s180 = sphi 0, %s177
    %s181 = sphi 0, %s180
    %s197 = sphi 0, %s181
  $region4: #{upblock_attention_forward.5} parent=0 // loop_header_branch
    %18 = sbr.rel (%p16) target = $region8
  $region5: #{upblock_attention_forward.5} parent=0 // loop_body
    %s20 = ssub.s32 %s15, 1
    %s21 = ssub.s32 %s15, 2
    %s22 = sadd.s32 %s15, 1
    %s23 = ssub.s32 %s15, %s22
    %p24 = scmp.eq.s32.totalorder %s23, 0
    %s26 = sadd.s32 %s25, 1
    %s27 = scalar_select %p24, %s25, %s26
    %p30 = pneg %p24
    %p31 = scmp.eq.s32.totalorder %s15, 1
    %p32 = por %p30, %p31
    %p33 = scmp.ne.s32.totalorder %s25, %s28
    %p34 = scmp.eq.s32.totalorder %s15, 0
    %p35 = por %p33, %p34
    %p36 = scmp.ne.s32.totalorder %s25, %s28
    %p37 = scmp.eq.s32.totalorder %s20, 1
    %p38 = por %p36, %p37
    %p39 = scmp.ne.s32.totalorder %s28, %s29
    %p40 = scmp.eq.s32.totalorder %s20, 0
    %p41 = por %p39, %p40
    %p42 = scmp.ne.s32.totalorder %s28, %s29
    %p43 = scmp.eq.s32.totalorder %s21, 1
    %p44 = por %p42, %p43
    %p46 = scmp.ne.s32.totalorder %s29, %s45
    %p47 = scmp.eq.s32.totalorder %s21, 0
    %p48 = por %p46, %p47
    %s50 = sadd.s32 %s49, 1
    %p53 = scmp.eq.s32.totalorder %s15, 1
    %p54 = scmp.ne.s32.totalorder %s49, %s51
    %p55 = scmp.eq.s32.totalorder %s15, 0
    %p56 = por %p54, %p55
    %p57 = scmp.ne.s32.totalorder %s49, %s51
    %p58 = scmp.eq.s32.totalorder %s20, 1
    %p59 = por %p57, %p58
    %p60 = scmp.ne.s32.totalorder %s51, %s52
    %p61 = scmp.eq.s32.totalorder %s20, 0
    %p62 = por %p60, %p61
    %p63 = scmp.ne.s32.totalorder %s51, %s52
    %p64 = scmp.eq.s32.totalorder %s21, 1
    %p65 = por %p63, %p64
    %p67 = scmp.ne.s32.totalorder %s52, %s66
    %p68 = scmp.eq.s32.totalorder %s21, 0
    %p69 = por %p67, %p68
    %s71 = sadd.s32 %s70, 1
    %p74 = scmp.eq.s32.totalorder %s15, 1
    %p75 = scmp.ne.s32.totalorder %s70, %s72
    %p76 = scmp.eq.s32.totalorder %s15, 0
    %p77 = por %p75, %p76
    %p78 = scmp.ne.s32.totalorder %s70, %s72
    %p79 = scmp.eq.s32.totalorder %s20, 1
    %p80 = por %p78, %p79
    %p81 = scmp.ne.s32.totalorder %s72, %s73
    %p82 = scmp.eq.s32.totalorder %s20, 0
    %p83 = por %p81, %p82
    %p84 = scmp.ne.s32.totalorder %s72, %s73
    %p85 = scmp.eq.s32.totalorder %s21, 1
    %p86 = por %p84, %p85
    %p88 = scmp.ne.s32.totalorder %s73, %s87
    %p89 = scmp.eq.s32.totalorder %s21, 0
    %p90 = por %p88, %p89
    %s92 = sadd.s32 %s91, 1
    %p95 = scmp.eq.s32.totalorder %s15, 1
    %p96 = scmp.ne.s32.totalorder %s91, %s93
    %p97 = scmp.eq.s32.totalorder %s15, 0
    %p98 = por %p96, %p97
    %p99 = scmp.ne.s32.totalorder %s91, %s93
    %p100 = scmp.eq.s32.totalorder %s20, 1
    %p101 = por %p99, %p100
    %p102 = scmp.ne.s32.totalorder %s93, %s94
    %p103 = scmp.eq.s32.totalorder %s20, 0
    %p104 = por %p102, %p103
    %p105 = scmp.ne.s32.totalorder %s93, %s94
    %p106 = scmp.eq.s32.totalorder %s21, 1
    %p107 = por %p105, %p106
    %p109 = scmp.ne.s32.totalorder %s94, %s108
    %p110 = scmp.eq.s32.totalorder %s21, 0
    %p111 = por %p109, %p110
    %s113 = sadd.s32 %s112, 1
    %p116 = scmp.eq.s32.totalorder %s15, 1
    %p117 = scmp.ne.s32.totalorder %s112, %s114
    %p118 = scmp.eq.s32.totalorder %s15, 0
    %p119 = por %p117, %p118
    %p120 = scmp.ne.s32.totalorder %s112, %s114
    %p121 = scmp.eq.s32.totalorder %s20, 1
    %p122 = por %p120, %p121
    %p123 = scmp.ne.s32.totalorder %s114, %s115
    %p124 = scmp.eq.s32.totalorder %s20, 0
    %p125 = por %p123, %p124
    %p126 = scmp.ne.s32.totalorder %s114, %s115
    %p127 = scmp.eq.s32.totalorder %s21, 1
    %p128 = por %p126, %p127
    %p130 = scmp.ne.s32.totalorder %s115, %s129
    %p131 = scmp.eq.s32.totalorder %s21, 0
    %p132 = por %p130, %p131
    %s134 = sadd.s32 %s133, 1
    %p137 = scmp.eq.s32.totalorder %s15, 1
    %p138 = scmp.ne.s32.totalorder %s133, %s135
    %p139 = scmp.eq.s32.totalorder %s15, 0
    %p140 = por %p138, %p139
    %p141 = scmp.ne.s32.totalorder %s133, %s135
    %p142 = scmp.eq.s32.totalorder %s20, 1
    %p143 = por %p141, %p142
    %p144 = scmp.ne.s32.totalorder %s135, %s136
    %p145 = scmp.eq.s32.totalorder %s20, 0
    %p146 = por %p144, %p145
    %p147 = scmp.ne.s32.totalorder %s135, %s136
    %p148 = scmp.eq.s32.totalorder %s21, 1
    %p149 = por %p147, %p148
    %p151 = scmp.ne.s32.totalorder %s136, %s150
    %p152 = scmp.eq.s32.totalorder %s21, 0
    %p153 = por %p151, %p152
    %s155 = sadd.s32 %s154, 1
    %p158 = scmp.eq.s32.totalorder %s15, 1
    %p159 = scmp.ne.s32.totalorder %s154, %s156
    %p160 = scmp.eq.s32.totalorder %s15, 0
    %p161 = por %p159, %p160
    %p162 = scmp.ne.s32.totalorder %s154, %s156
    %p163 = scmp.eq.s32.totalorder %s20, 1
    %p164 = por %p162, %p163
    %p165 = scmp.ne.s32.totalorder %s156, %s157
    %p166 = scmp.eq.s32.totalorder %s20, 0
    %p167 = por %p165, %p166
    %p168 = scmp.ne.s32.totalorder %s156, %s157
    %p169 = scmp.eq.s32.totalorder %s21, 1
    %p170 = por %p168, %p169
    %p172 = scmp.ne.s32.totalorder %s157, %s171
    %p173 = scmp.eq.s32.totalorder %s21, 0
    %p174 = por %p172, %p173
    %s175 = ssub.s32 %s15, %s22
    %p176 = scmp.eq.s32.totalorder %s175, 0
    %s178 = sadd.s32 %s177, 1
    %s179 = scalar_select %p176, %s177, %s178
    %p182 = pneg %p176
    %p183 = scmp.eq.s32.totalorder %s15, 1
    %p184 = por %p182, %p183
    %p185 = scmp.ne.s32.totalorder %s177, %s180
    %p186 = scmp.eq.s32.totalorder %s15, 0
    %p187 = por %p185, %p186
    %p188 = scmp.ne.s32.totalorder %s177, %s180
    %p189 = scmp.eq.s32.totalorder %s20, 1
    %p190 = por %p188, %p189
    %p191 = scmp.ne.s32.totalorder %s180, %s181
    %p192 = scmp.eq.s32.totalorder %s20, 0
    %p193 = por %p191, %p192
    %p194 = scmp.ne.s32.totalorder %s180, %s181
    %p195 = scmp.eq.s32.totalorder %s21, 1
    %p196 = por %p194, %p195
    %p198 = scmp.ne.s32.totalorder %s181, %s197
    %p199 = scmp.eq.s32.totalorder %s21, 0
    %p200 = por %p198, %p199
    %p201 = scmp.le.s32.totalorder 1, %s15
    %p202 = scmp.lt.s32.totalorder %s15, 3
    %p203 = pnand %p201, %p202
    %p204 = pneg %p203
    // Predicated region
    $region9: #{upblock_attention_forward.5} parent=5 // pred_check
      _
    $region10: #{upblock_attention_forward.5} parent=5 // pred_check_branch
      %206 = sbr.rel (%p203) target = $region12
    $region11: #{upblock_attention_forward.5} parent=5 // pred_region
      %s207 = ssub.s32 %s15, 1
      // Predicated region
      $region13: #{upblock_attention_forward.5} parent=11 // pred_check
        %p208 = pneg %p62
      $region14: #{upblock_attention_forward.5} parent=11 // pred_check_branch
        %210 = sbr.rel (%p208) target = $region16
      $region15: #{upblock_attention_forward.5} parent=11 // pred_region
        _
      $region16: #{upblock_attention_forward.5} parent=11 // pred_fallthru
        _
      // Predicated region
      $region17: #{upblock_attention_forward.5} parent=11 // pred_check
        %p211 = pneg %p83
      $region18: #{upblock_attention_forward.5} parent=11 // pred_check_branch
        %213 = sbr.rel (%p211) target = $region20
      $region19: #{upblock_attention_forward.5} parent=11 // pred_region
        _
      $region20: #{upblock_attention_forward.5} parent=11 // pred_fallthru
        _
      // Predicated region
      $region21: #{upblock_attention_forward.5} parent=11 // pred_check
        %p214 = pneg %p104
      $region22: #{upblock_attention_forward.5} parent=11 // pred_check_branch
        %216 = sbr.rel (%p214) target = $region24
      $region23: #{upblock_attention_forward.5} parent=11 // pred_region
        _
      $region24: #{upblock_attention_forward.5} parent=11 // pred_fallthru
        _
      // Predicated region
      $region25: #{upblock_attention_forward.5} parent=11 // pred_check
        %p217 = pneg %p125
      $region26: #{upblock_attention_forward.5} parent=11 // pred_check_branch
        %219 = sbr.rel (%p217) target = $region28
      $region27: #{upblock_attention_forward.5} parent=11 // pred_region
        _
      $region28: #{upblock_attention_forward.5} parent=11 // pred_fallthru
        _
      // Predicated region
      $region29: #{upblock_attention_forward.5} parent=11 // pred_check
        %p220 = pneg %p146
      $region30: #{upblock_attention_forward.5} parent=11 // pred_check_branch
        %222 = sbr.rel (%p220) target = $region32
      $region31: #{upblock_attention_forward.5} parent=11 // pred_region
        _
      $region32: #{upblock_attention_forward.5} parent=11 // pred_fallthru
        _
      // Predicated region
      $region33: #{upblock_attention_forward.5} parent=11 // pred_check
        %p223 = pneg %p167
      $region34: #{upblock_attention_forward.5} parent=11 // pred_check_branch
        %225 = sbr.rel (%p223) target = $region36
      $region35: #{upblock_attention_forward.5} parent=11 // pred_region
        _
      $region36: #{upblock_attention_forward.5} parent=11 // pred_fallthru
        _
    $region12: #{upblock_attention_forward.5} parent=5 // pred_fallthru
      _
    %p226 = scmp.lt.s32.totalorder %s15, 2
    // Predicated region
    $region37: #{upblock_attention_forward.5} parent=5 // pred_check
      %p227 = pneg %p226
    $region38: #{upblock_attention_forward.5} parent=5 // pred_check_branch
      %229 = sbr.rel (%p227) target = $region40
    $region39: #{upblock_attention_forward.5} parent=5 // pred_region
      // Predicated region
      $region41: #{upblock_attention_forward.5} parent=39 // pred_check
        %p230 = pneg %p35
      $region42: #{upblock_attention_forward.5} parent=39 // pred_check_branch
        %232 = sbr.rel (%p230) target = $region44
      $region43: #{upblock_attention_forward.5} parent=39 // pred_region
        %s233 = smul.u32 32, %s15
        %p234 = scmp.lt.s32.totalorder %s233, 63
        %s235 = scalar_select %p234, %s233, 63
        %s236 = smul.addr %s235, 8
        %s237 = scalar_lea.vmem %s0, %s236
        %s238 = smul.u32 32, %s15
      $region44: #{upblock_attention_forward.5} parent=39 // pred_fallthru
        _
    $region40: #{upblock_attention_forward.5} parent=5 // pred_fallthru
      _
    %p239 = scmp.le.s32.totalorder 1, %s15
    %p240 = scmp.lt.s32.totalorder %s15, 3
    %p241 = pnand %p239, %p240
    %p242 = pneg %p241
    // Predicated region
    $region45: #{upblock_attention_forward.5} parent=5 // pred_check
      _
    $region46: #{upblock_attention_forward.5} parent=5 // pred_check_branch
      %244 = sbr.rel (%p241) target = $region48
    $region47: #{upblock_attention_forward.5} parent=5 // pred_region
      %s245 = ssub.s32 %s15, 1
      %s246 = smul.u32 32, %s20
      %p247 = scmp.lt.s32.totalorder %s246, 63
      %s248 = scalar_select %p247, %s246, 63
      %s249 = smul.addr %s248, 8
      %s250 = scalar_lea.vmem %s0, %s249
      %p251 = pneg %p41
      %p252 = pneg %p38
      %p253 = pneg %p62
      %p254 = pneg %p59
      %p255 = pneg %p83
      %p256 = pneg %p80
      %p257 = pneg %p104
      %p258 = pneg %p101
      %p259 = pneg %p125
      %p260 = pneg %p122
      %p261 = pneg %p146
      %p262 = pneg %p143
      %p263 = pneg %p167
      %p264 = pneg %p164
      %p265 = pneg %p193
      %p266 = pneg %p190
      %s267 = smul.u32 32, %s20
      %p268 = scmp.lt.s32.totalorder %s267, 63
      %s269 = scalar_select %p268, %s267, 63
      %s270 = smul.addr %s269, 8
      %s271 = scalar_lea.vmem %s7, %s270
      %s272 = smul.u32 32, %s20
      %p273 = scmp.lt.s32.totalorder %s272, 63
      %s274 = scalar_select %p273, %s272, 63
      %s275 = smul.addr %s274, 8
      %s276 = scalar_lea.vmem %s0, %s275
      %s277 = smul.u32 32, %s20
      %s278 = smul.u32 32, %s20
      %p279 = scmp.lt.s32.totalorder %s278, 63
      %s280 = scalar_select %p279, %s278, 63
      %s281 = smul.addr %s280, 8
      %s282 = scalar_lea.vmem %s7, %s281
      %s283 = smul.u32 32, %s20
      %v284 = vld [vmem:[%s276] sm:$0xff]
      %v285 = vld [vmem:[%s276 + $0x8] sm:$0xff]
      %v286 = vld [vmem:[%s276 + $0x10] sm:$0xff]
      %v287 = vld [vmem:[%s276 + $0x18] sm:$0xff]
      %v288 = vld [vmem:[%s276 + $0x20] sm:$0xff]
      %v289 = vld [vmem:[%s276 + $0x28] sm:$0xff]
      %v290 = vld [vmem:[%s276 + $0x30] sm:$0xff]
      %v291 = vld [vmem:[%s276 + $0x38] sm:$0xff]
      %v292 = vld [vmem:[%s276 + $0x40] sm:$0xff]
      %v293 = vld [vmem:[%s276 + $0x48] sm:$0xff]
      %v294 = vld [vmem:[%s276 + $0x50] sm:$0xff]
      %v295 = vld [vmem:[%s276 + $0x58] sm:$0xff]
      %v296 = vld [vmem:[%s276 + $0x60] sm:$0xff]
      %v297 = vld [vmem:[%s276 + $0x68] sm:$0xff]
      %v298 = vld [vmem:[%s276 + $0x70] sm:$0xff]
      %v299 = vld [vmem:[%s276 + $0x78] sm:$0xff]
      %v300 = vld [vmem:[%s276 + $0x80] sm:$0xff]
      %v301 = vld [vmem:[%s276 + $0x88] sm:$0xff]
      %v302 = vld [vmem:[%s276 + $0x90] sm:$0xff]
      %v303 = vld [vmem:[%s276 + $0x98] sm:$0xff]
      %v304 = vld [vmem:[%s276 + $0xa0] sm:$0xff]
      %v305 = vld [vmem:[%s276 + $0xa8] sm:$0xff]
      %v306 = vld [vmem:[%s276 + $0xb0] sm:$0xff]
      %v307 = vld [vmem:[%s276 + $0xb8] sm:$0xff]
      %v308 = vld [vmem:[%s276 + $0xc0] sm:$0xff]
      %v309 = vld [vmem:[%s276 + $0xc8] sm:$0xff]
      %v310 = vld [vmem:[%s276 + $0xd0] sm:$0xff]
      %v311 = vld [vmem:[%s276 + $0xd8] sm:$0xff]
      %v312 = vld [vmem:[%s276 + $0xe0] sm:$0xff]
      %v313 = vld [vmem:[%s276 + $0xe8] sm:$0xff]
      %v314 = vld [vmem:[%s276 + $0xf0] sm:$0xff]
      %v315 = vld [vmem:[%s276 + $0xf8] sm:$0xff]
      %v316 = vld [vmem:[%s1] sm:$0xf]
      %vm317 = vcmask 31744
      %v319 = vsel %vm317, %v284, 0
      %v322 = vsel %vm317, %v285, 0
      %v325 = vsel %vm317, %v286, 0
      %v328 = vsel %vm317, %v287, 0
      %v331 = vsel %vm317, %v288, 0
      %v334 = vsel %vm317, %v289, 0
      %v337 = vsel %vm317, %v290, 0
      %v340 = vsel %vm317, %v291, 0
      %v343 = vsel %vm317, %v292, 0
      %v346 = vsel %vm317, %v293, 0
      %v349 = vsel %vm317, %v294, 0
      %v352 = vsel %vm317, %v295, 0
      %v355 = vsel %vm317, %v296, 0
      %v358 = vsel %vm317, %v297, 0
      %v361 = vsel %vm317, %v298, 0
      %v364 = vsel %vm317, %v299, 0
      %v367 = vsel %vm317, %v300, 0
      %v370 = vsel %vm317, %v301, 0
      %v373 = vsel %vm317, %v302, 0
      %v376 = vsel %vm317, %v303, 0
      %v379 = vsel %vm317, %v304, 0
      %v382 = vsel %vm317, %v305, 0
      %v385 = vsel %vm317, %v306, 0
      %v388 = vsel %vm317, %v307, 0
      %v391 = vsel %vm317, %v308, 0
      %v394 = vsel %vm317, %v309, 0
      %v397 = vsel %vm317, %v310, 0
      %v400 = vsel %vm317, %v311, 0
      %v403 = vsel %vm317, %v312, 0
      %v406 = vsel %vm317, %v313, 0
      %v409 = vsel %vm317, %v314, 0
      %v412 = vsel %vm317, %v315, 0
      %vm414 = vcmask 1043456
      %v416 = vsel %vm414, %v316, 0
      %418 = vmatprep.subr.mxu0 0.0
      %419 = vmatpush1.msra.mxu0 0.0
      %420 = vmatprep.subr.mxu0 0.0
      %421 = vmatpush1.msra.mxu0 0.0
      %422 = vmatprep.subr.mxu0 0.0
      %423 = vmatpush1.msra.mxu0 0.0
      %424 = vmatprep.subr.mxu0 0.0
      %425 = vmatpush1.msra.mxu0 0.0
      %426 = vmatprep.subr.mxu0 0.0
      %427 = vmatpush1.msra.mxu0 0.0
      %428 = vmatprep.subr.mxu0 0.0
      %429 = vmatpush1.msra.mxu0 0.0
      %430 = vmatprep.subr.mxu0 0.0
      %431 = vmatpush1.msra.mxu0 0.0
      %432 = vmatprep.subr.mxu0 0.0
      %433 = vmatpush1.msra.mxu0 0.0
      %434 = vmatprep.subr.mxu0 0.0
      %435 = vmatpush1.msra.mxu0 0.0
      %436 = vmatprep.subr.mxu0 0.0
      %437 = vmatpush1.msra.mxu0 0.0
      %438 = vmatprep.subr.mxu0 0.0
      %439 = vmatpush1.msra.mxu0 0.0
      %440 = vmatprep.subr.mxu0 0.0
      %441 = vmatpush1.msra.mxu0 0.0
      %442 = vmatprep.subr.mxu0 0.0
      %443 = vmatpush1.msra.mxu0 0.0
      %444 = vmatprep.subr.mxu0 0.0
      %445 = vmatpush1.msra.mxu0 0.0
      %446 = vmatprep.subr.mxu0 0.0
      %447 = vmatpush1.msra.mxu0 0.0
      %448 = vmatprep.subr.mxu0 0.0
      %449 = vmatpush1.msra.mxu0 %v416
      %450 = vmatprep.subr.mxu0 0.0
      %451 = vmatpush2.msra.mxu0 0.0
      %452 = vmatprep.subr.mxu0 0.0
      %453 = vmatpush2.msra.mxu0 0.0
      %454 = vmatprep.subr.mxu0 0.0
      %455 = vmatpush2.msra.mxu0 0.0
      %456 = vmatprep.subr.mxu0 0.0
      %457 = vmatpush2.msra.mxu0 0.0
      %458 = vmatprep.subr.mxu0 0.0
      %459 = vmatpush2.msra.mxu0 0.0
      %460 = vmatprep.subr.mxu0 0.0
      %461 = vmatpush2.msra.mxu0 0.0
      %462 = vmatprep.subr.mxu0 0.0
      %463 = vmatpush2.msra.mxu0 0.0
      %464 = vmatprep.subr.mxu0 0.0
      %465 = vmatpush2.msra.mxu0 0.0
      %466 = vmatprep.subr.mxu0 0.0
      %467 = vmatpush2.msra.mxu0 0.0
      %468 = vmatprep.subr.mxu0 0.0
      %469 = vmatpush2.msra.mxu0 0.0
      %470 = vmatprep.subr.mxu0 0.0
      %471 = vmatpush2.msra.mxu0 0.0
      %472 = vmatprep.subr.mxu0 0.0
      %473 = vmatpush2.msra.mxu0 0.0
      %474 = vmatprep.subr.mxu0 0.0
      %475 = vmatpush2.msra.mxu0 0.0
      %476 = vmatprep.subr.mxu0 0.0
      %477 = vmatpush2.msra.mxu0 0.0
      %478 = vmatprep.subr.mxu0 0.0
      %479 = vmatpush2.msra.mxu0 0.0
      %480 = vmatprep.subr.mxu0 0.0
      %481 = vmatpush2.msra.mxu0 0.0
      %482 = vmatprep.mubr.f32.mxu0 0.0
      %483 = vmatmul.mubr.f32.gmra.mxu0 %v319
      %v484 = vpop.f32.mrf.mxu0
      %v485 = vadd.f32 0.0, %v484
      %v486 = vpop.f32.mrf.mxu0
      %487 = vmatprep.mubr.f32.mxu0 0.0
      %488 = vmatmul.mubr.f32.gmra.mxu0 %v322
      %v489 = vpop.f32.mrf.mxu0
      %v490 = vadd.f32 0.0, %v489
      %v491 = vpop.f32.mrf.mxu0
      %492 = vmatprep.mubr.f32.mxu0 0.0
      %493 = vmatmul.mubr.f32.gmra.mxu0 %v325
      %v494 = vpop.f32.mrf.mxu0
      %v495 = vadd.f32 0.0, %v494
      %v496 = vpop.f32.mrf.mxu0
      %497 = vmatprep.mubr.f32.mxu0 0.0
      %498 = vmatmul.mubr.f32.gmra.mxu0 %v328
      %v499 = vpop.f32.mrf.mxu0
      %v500 = vadd.f32 0.0, %v499
      %v501 = vpop.f32.mrf.mxu0
      %502 = vmatprep.mubr.f32.mxu0 0.0
      %503 = vmatmul.mubr.f32.gmra.mxu0 %v331
      %v504 = vpop.f32.mrf.mxu0
      %v505 = vadd.f32 0.0, %v504
      %v506 = vpop.f32.mrf.mxu0
      %507 = vmatprep.mubr.f32.mxu0 0.0
      %508 = vmatmul.mubr.f32.gmra.mxu0 %v334
      %v509 = vpop.f32.mrf.mxu0
      %v510 = vadd.f32 0.0, %v509
      %v511 = vpop.f32.mrf.mxu0
      %512 = vmatprep.mubr.f32.mxu0 0.0
      %513 = vmatmul.mubr.f32.gmra.mxu0 %v337
      %v514 = vpop.f32.mrf.mxu0
      %v515 = vadd.f32 0.0, %v514
      %v516 = vpop.f32.mrf.mxu0
      %517 = vmatprep.mubr.f32.mxu0 0.0
      %518 = vmatmul.mubr.f32.gmra.mxu0 %v340
      %v519 = vpop.f32.mrf.mxu0
      %v520 = vadd.f32 0.0, %v519
      %v521 = vpop.f32.mrf.mxu0
      %522 = vmatprep.mubr.f32.mxu0 0.0
      %523 = vmatmul.mubr.f32.gmra.mxu0 %v343
      %v524 = vpop.f32.mrf.mxu0
      %v525 = vadd.f32 0.0, %v524
      %v526 = vpop.f32.mrf.mxu0
      %527 = vmatprep.mubr.f32.mxu0 0.0
      %528 = vmatmul.mubr.f32.gmra.mxu0 %v346
      %v529 = vpop.f32.mrf.mxu0
      %v530 = vadd.f32 0.0, %v529
      %v531 = vpop.f32.mrf.mxu0
      %532 = vmatprep.mubr.f32.mxu0 0.0
      %533 = vmatmul.mubr.f32.gmra.mxu0 %v349
      %v534 = vpop.f32.mrf.mxu0
      %v535 = vadd.f32 0.0, %v534
      %v536 = vpop.f32.mrf.mxu0
      %537 = vmatprep.mubr.f32.mxu0 0.0
      %538 = vmatmul.mubr.f32.gmra.mxu0 %v352
      %v539 = vpop.f32.mrf.mxu0
      %v540 = vadd.f32 0.0, %v539
      %v541 = vpop.f32.mrf.mxu0
      %542 = vmatprep.mubr.f32.mxu0 0.0
      %543 = vmatmul.mubr.f32.gmra.mxu0 %v355
      %v544 = vpop.f32.mrf.mxu0
      %v545 = vadd.f32 0.0, %v544
      %v546 = vpop.f32.mrf.mxu0
      %547 = vmatprep.mubr.f32.mxu0 0.0
      %548 = vmatmul.mubr.f32.gmra.mxu0 %v358
      %v549 = vpop.f32.mrf.mxu0
      %v550 = vadd.f32 0.0, %v549
      %v551 = vpop.f32.mrf.mxu0
      %552 = vmatprep.mubr.f32.mxu0 0.0
      %553 = vmatmul.mubr.f32.gmra.mxu0 %v361
      %v554 = vpop.f32.mrf.mxu0
      %v555 = vadd.f32 0.0, %v554
      %v556 = vpop.f32.mrf.mxu0
      %557 = vmatprep.mubr.f32.mxu0 0.0
      %558 = vmatmul.mubr.f32.gmra.mxu0 %v364
      %v559 = vpop.f32.mrf.mxu0
      %v560 = vadd.f32 0.0, %v559
      %v561 = vpop.f32.mrf.mxu0
      %562 = vmatprep.mubr.f32.mxu0 0.0
      %563 = vmatmul.mubr.f32.gmra.mxu0 %v367
      %v564 = vpop.f32.mrf.mxu0
      %v565 = vadd.f32 0.0, %v564
      %v566 = vpop.f32.mrf.mxu0
      %567 = vmatprep.mubr.f32.mxu0 0.0
      %568 = vmatmul.mubr.f32.gmra.mxu0 %v370
      %v569 = vpop.f32.mrf.mxu0
      %v570 = vadd.f32 0.0, %v569
      %v571 = vpop.f32.mrf.mxu0
      %572 = vmatprep.mubr.f32.mxu0 0.0
      %573 = vmatmul.mubr.f32.gmra.mxu0 %v373
      %v574 = vpop.f32.mrf.mxu0
      %v575 = vadd.f32 0.0, %v574
      %v576 = vpop.f32.mrf.mxu0
      %577 = vmatprep.mubr.f32.mxu0 0.0
      %578 = vmatmul.mubr.f32.gmra.mxu0 %v376
      %v579 = vpop.f32.mrf.mxu0
      %v580 = vadd.f32 0.0, %v579
      %v581 = vpop.f32.mrf.mxu0
      %582 = vmatprep.mubr.f32.mxu0 0.0
      %583 = vmatmul.mubr.f32.gmra.mxu0 %v379
      %v584 = vpop.f32.mrf.mxu0
      %v585 = vadd.f32 0.0, %v584
      %v586 = vpop.f32.mrf.mxu0
      %587 = vmatprep.mubr.f32.mxu0 0.0
      %588 = vmatmul.mubr.f32.gmra.mxu0 %v382
      %v589 = vpop.f32.mrf.mxu0
      %v590 = vadd.f32 0.0, %v589
      %v591 = vpop.f32.mrf.mxu0
      %592 = vmatprep.mubr.f32.mxu0 0.0
      %593 = vmatmul.mubr.f32.gmra.mxu0 %v385
      %v594 = vpop.f32.mrf.mxu0
      %v595 = vadd.f32 0.0, %v594
      %v596 = vpop.f32.mrf.mxu0
      %597 = vmatprep.mubr.f32.mxu0 0.0
      %598 = vmatmul.mubr.f32.gmra.mxu0 %v388
      %v599 = vpop.f32.mrf.mxu0
      %v600 = vadd.f32 0.0, %v599
      %v601 = vpop.f32.mrf.mxu0
      %602 = vmatprep.mubr.f32.mxu0 0.0
      %603 = vmatmul.mubr.f32.gmra.mxu0 %v391
      %v604 = vpop.f32.mrf.mxu0
      %v605 = vadd.f32 0.0, %v604
      %v606 = vpop.f32.mrf.mxu0
      %607 = vmatprep.mubr.f32.mxu0 0.0
      %608 = vmatmul.mubr.f32.gmra.mxu0 %v394
      %v609 = vpop.f32.mrf.mxu0
      %v610 = vadd.f32 0.0, %v609
      %v611 = vpop.f32.mrf.mxu0
      %612 = vmatprep.mubr.f32.mxu0 0.0
      %613 = vmatmul.mubr.f32.gmra.mxu0 %v397
      %v614 = vpop.f32.mrf.mxu0
      %v615 = vadd.f32 0.0, %v614
      %v616 = vpop.f32.mrf.mxu0
      %617 = vmatprep.mubr.f32.mxu0 0.0
      %618 = vmatmul.mubr.f32.gmra.mxu0 %v400
      %v619 = vpop.f32.mrf.mxu0
      %v620 = vadd.f32 0.0, %v619
      %v621 = vpop.f32.mrf.mxu0
      %622 = vmatprep.mubr.f32.mxu0 0.0
      %623 = vmatmul.mubr.f32.gmra.mxu0 %v403
      %v624 = vpop.f32.mrf.mxu0
      %v625 = vadd.f32 0.0, %v624
      %v626 = vpop.f32.mrf.mxu0
      %627 = vmatprep.mubr.f32.mxu0 0.0
      %628 = vmatmul.mubr.f32.gmra.mxu0 %v406
      %v629 = vpop.f32.mrf.mxu0
      %v630 = vadd.f32 0.0, %v629
      %v631 = vpop.f32.mrf.mxu0
      %632 = vmatprep.mubr.f32.mxu0 0.0
      %633 = vmatmul.mubr.f32.gmra.mxu0 %v409
      %v634 = vpop.f32.mrf.mxu0
      %v635 = vadd.f32 0.0, %v634
      %v636 = vpop.f32.mrf.mxu0
      %637 = vmatprep.mubr.f32.mxu0 0.0
      %638 = vmatmul.mubr.f32.gmra.mxu0 %v412
      %v639 = vpop.f32.mrf.mxu0
      %v640 = vadd.f32 0.0, %v639
      %v641 = vpop.f32.mrf.mxu0
      %642 = vdwg.mxu0
      %v643 = vmax.f32 %v485, 0.0
      %v644 = vmax.f32 %v490, 0.0
      %v645 = vmax.f32 %v495, 0.0
      %v646 = vmax.f32 %v500, 0.0
      %v647 = vmax.f32 %v505, 0.0
      %v648 = vmax.f32 %v510, 0.0
      %v649 = vmax.f32 %v515, 0.0
      %v650 = vmax.f32 %v520, 0.0
      %v651 = vmax.f32 %v525, 0.0
      %v652 = vmax.f32 %v530, 0.0
      %v653 = vmax.f32 %v535, 0.0
      %v654 = vmax.f32 %v540, 0.0
      %v655 = vmax.f32 %v545, 0.0
      %v656 = vmax.f32 %v550, 0.0
      %v657 = vmax.f32 %v555, 0.0
      %v658 = vmax.f32 %v560, 0.0
      %v659 = vmax.f32 %v565, 0.0
      %v660 = vmax.f32 %v570, 0.0
      %v661 = vmax.f32 %v575, 0.0
      %v662 = vmax.f32 %v580, 0.0
      %v663 = vmax.f32 %v585, 0.0
      %v664 = vmax.f32 %v590, 0.0
      %v665 = vmax.f32 %v595, 0.0
      %v666 = vmax.f32 %v600, 0.0
      %v667 = vmax.f32 %v605, 0.0
      %v668 = vmax.f32 %v610, 0.0
      %v669 = vmax.f32 %v615, 0.0
      %v670 = vmax.f32 %v620, 0.0
      %v671 = vmax.f32 %v625, 0.0
      %v672 = vmax.f32 %v630, 0.0
      %v673 = vmax.f32 %v635, 0.0
      %v674 = vmax.f32 %v640, 0.0
      %v675 = vld [vmem:[%s2] sm:$0xf]
      %v677 = vsel %vm414, %v675, 0
      %679 = vmatprep.subr.mxu0 0.0
      %680 = vmatpush1.msra.mxu0 0.0
      %681 = vmatprep.subr.mxu0 0.0
      %682 = vmatpush1.msra.mxu0 0.0
      %683 = vmatprep.subr.mxu0 0.0
      %684 = vmatpush1.msra.mxu0 0.0
      %685 = vmatprep.subr.mxu0 0.0
      %686 = vmatpush1.msra.mxu0 0.0
      %687 = vmatprep.subr.mxu0 0.0
      %688 = vmatpush1.msra.mxu0 0.0
      %689 = vmatprep.subr.mxu0 0.0
      %690 = vmatpush1.msra.mxu0 0.0
      %691 = vmatprep.subr.mxu0 0.0
      %692 = vmatpush1.msra.mxu0 0.0
      %693 = vmatprep.subr.mxu0 0.0
      %694 = vmatpush1.msra.mxu0 0.0
      %695 = vmatprep.subr.mxu0 0.0
      %696 = vmatpush1.msra.mxu0 0.0
      %697 = vmatprep.subr.mxu0 0.0
      %698 = vmatpush1.msra.mxu0 0.0
      %699 = vmatprep.subr.mxu0 0.0
      %700 = vmatpush1.msra.mxu0 0.0
      %701 = vmatprep.subr.mxu0 0.0
      %702 = vmatpush1.msra.mxu0 0.0
      %703 = vmatprep.subr.mxu0 0.0
      %704 = vmatpush1.msra.mxu0 0.0
      %705 = vmatprep.subr.mxu0 0.0
      %706 = vmatpush1.msra.mxu0 0.0
      %707 = vmatprep.subr.mxu0 0.0
      %708 = vmatpush1.msra.mxu0 0.0
      %709 = vmatprep.subr.mxu0 0.0
      %710 = vmatpush1.msra.mxu0 %v677
      %711 = vmatprep.subr.mxu0 0.0
      %712 = vmatpush2.msra.mxu0 0.0
      %713 = vmatprep.subr.mxu0 0.0
      %714 = vmatpush2.msra.mxu0 0.0
      %715 = vmatprep.subr.mxu0 0.0
      %716 = vmatpush2.msra.mxu0 0.0
      %717 = vmatprep.subr.mxu0 0.0
      %718 = vmatpush2.msra.mxu0 0.0
      %719 = vmatprep.subr.mxu0 0.0
      %720 = vmatpush2.msra.mxu0 0.0
      %721 = vmatprep.subr.mxu0 0.0
      %722 = vmatpush2.msra.mxu0 0.0
      %723 = vmatprep.subr.mxu0 0.0
      %724 = vmatpush2.msra.mxu0 0.0
      %725 = vmatprep.subr.mxu0 0.0
      %726 = vmatpush2.msra.mxu0 0.0
      %727 = vmatprep.subr.mxu0 0.0
      %728 = vmatpush2.msra.mxu0 0.0
      %729 = vmatprep.subr.mxu0 0.0
      %730 = vmatpush2.msra.mxu0 0.0
      %731 = vmatprep.subr.mxu0 0.0
      %732 = vmatpush2.msra.mxu0 0.0
      %733 = vmatprep.subr.mxu0 0.0
      %734 = vmatpush2.msra.mxu0 0.0
      %735 = vmatprep.subr.mxu0 0.0
      %736 = vmatpush2.msra.mxu0 0.0
      %737 = vmatprep.subr.mxu0 0.0
      %738 = vmatpush2.msra.mxu0 0.0
      %739 = vmatprep.subr.mxu0 0.0
      %740 = vmatpush2.msra.mxu0 0.0
      %741 = vmatprep.subr.mxu0 0.0
      %742 = vmatpush2.msra.mxu0 0.0
      %743 = vmatprep.mubr.f32.mxu0 0.0
      %744 = vmatmul.mubr.f32.gmra.mxu0 %v319
      %v745 = vpop.f32.mrf.mxu0
      %v746 = vadd.f32 0.0, %v745
      %v747 = vpop.f32.mrf.mxu0
      %748 = vmatprep.mubr.f32.mxu0 0.0
      %749 = vmatmul.mubr.f32.gmra.mxu0 %v322
      %v750 = vpop.f32.mrf.mxu0
      %v751 = vadd.f32 0.0, %v750
      %v752 = vpop.f32.mrf.mxu0
      %753 = vmatprep.mubr.f32.mxu0 0.0
      %754 = vmatmul.mubr.f32.gmra.mxu0 %v325
      %v755 = vpop.f32.mrf.mxu0
      %v756 = vadd.f32 0.0, %v755
      %v757 = vpop.f32.mrf.mxu0
      %758 = vmatprep.mubr.f32.mxu0 0.0
      %759 = vmatmul.mubr.f32.gmra.mxu0 %v328
      %v760 = vpop.f32.mrf.mxu0
      %v761 = vadd.f32 0.0, %v760
      %v762 = vpop.f32.mrf.mxu0
      %763 = vmatprep.mubr.f32.mxu0 0.0
      %764 = vmatmul.mubr.f32.gmra.mxu0 %v331
      %v765 = vpop.f32.mrf.mxu0
      %v766 = vadd.f32 0.0, %v765
      %v767 = vpop.f32.mrf.mxu0
      %768 = vmatprep.mubr.f32.mxu0 0.0
      %769 = vmatmul.mubr.f32.gmra.mxu0 %v334
      %v770 = vpop.f32.mrf.mxu0
      %v771 = vadd.f32 0.0, %v770
      %v772 = vpop.f32.mrf.mxu0
      %773 = vmatprep.mubr.f32.mxu0 0.0
      %774 = vmatmul.mubr.f32.gmra.mxu0 %v337
      %v775 = vpop.f32.mrf.mxu0
      %v776 = vadd.f32 0.0, %v775
      %v777 = vpop.f32.mrf.mxu0
      %778 = vmatprep.mubr.f32.mxu0 0.0
      %779 = vmatmul.mubr.f32.gmra.mxu0 %v340
      %v780 = vpop.f32.mrf.mxu0
      %v781 = vadd.f32 0.0, %v780
      %v782 = vpop.f32.mrf.mxu0
      %783 = vmatprep.mubr.f32.mxu0 0.0
      %784 = vmatmul.mubr.f32.gmra.mxu0 %v343
      %v785 = vpop.f32.mrf.mxu0
      %v786 = vadd.f32 0.0, %v785
      %v787 = vpop.f32.mrf.mxu0
      %788 = vmatprep.mubr.f32.mxu0 0.0
      %789 = vmatmul.mubr.f32.gmra.mxu0 %v346
      %v790 = vpop.f32.mrf.mxu0
      %v791 = vadd.f32 0.0, %v790
      %v792 = vpop.f32.mrf.mxu0
      %793 = vmatprep.mubr.f32.mxu0 0.0
      %794 = vmatmul.mubr.f32.gmra.mxu0 %v349
      %v795 = vpop.f32.mrf.mxu0
      %v796 = vadd.f32 0.0, %v795
      %v797 = vpop.f32.mrf.mxu0
      %798 = vmatprep.mubr.f32.mxu0 0.0
      %799 = vmatmul.mubr.f32.gmra.mxu0 %v352
      %v800 = vpop.f32.mrf.mxu0
      %v801 = vadd.f32 0.0, %v800
      %v802 = vpop.f32.mrf.mxu0
      %803 = vmatprep.mubr.f32.mxu0 0.0
      %804 = vmatmul.mubr.f32.gmra.mxu0 %v355
      %v805 = vpop.f32.mrf.mxu0
      %v806 = vadd.f32 0.0, %v805
      %v807 = vpop.f32.mrf.mxu0
      %808 = vmatprep.mubr.f32.mxu0 0.0
      %809 = vmatmul.mubr.f32.gmra.mxu0 %v358
      %v810 = vpop.f32.mrf.mxu0
      %v811 = vadd.f32 0.0, %v810
      %v812 = vpop.f32.mrf.mxu0
      %813 = vmatprep.mubr.f32.mxu0 0.0
      %814 = vmatmul.mubr.f32.gmra.mxu0 %v361
      %v815 = vpop.f32.mrf.mxu0
      %v816 = vadd.f32 0.0, %v815
      %v817 = vpop.f32.mrf.mxu0
      %818 = vmatprep.mubr.f32.mxu0 0.0
      %819 = vmatmul.mubr.f32.gmra.mxu0 %v364
      %v820 = vpop.f32.mrf.mxu0
      %v821 = vadd.f32 0.0, %v820
      %v822 = vpop.f32.mrf.mxu0
      %823 = vmatprep.mubr.f32.mxu0 0.0
      %824 = vmatmul.mubr.f32.gmra.mxu0 %v367
      %v825 = vpop.f32.mrf.mxu0
      %v826 = vadd.f32 0.0, %v825
      %v827 = vpop.f32.mrf.mxu0
      %828 = vmatprep.mubr.f32.mxu0 0.0
      %829 = vmatmul.mubr.f32.gmra.mxu0 %v370
      %v830 = vpop.f32.mrf.mxu0
      %v831 = vadd.f32 0.0, %v830
      %v832 = vpop.f32.mrf.mxu0
      %833 = vmatprep.mubr.f32.mxu0 0.0
      %834 = vmatmul.mubr.f32.gmra.mxu0 %v373
      %v835 = vpop.f32.mrf.mxu0
      %v836 = vadd.f32 0.0, %v835
      %v837 = vpop.f32.mrf.mxu0
      %838 = vmatprep.mubr.f32.mxu0 0.0
      %839 = vmatmul.mubr.f32.gmra.mxu0 %v376
      %v840 = vpop.f32.mrf.mxu0
      %v841 = vadd.f32 0.0, %v840
      %v842 = vpop.f32.mrf.mxu0
      %843 = vmatprep.mubr.f32.mxu0 0.0
      %844 = vmatmul.mubr.f32.gmra.mxu0 %v379
      %v845 = vpop.f32.mrf.mxu0
      %v846 = vadd.f32 0.0, %v845
      %v847 = vpop.f32.mrf.mxu0
      %848 = vmatprep.mubr.f32.mxu0 0.0
      %849 = vmatmul.mubr.f32.gmra.mxu0 %v382
      %v850 = vpop.f32.mrf.mxu0
      %v851 = vadd.f32 0.0, %v850
      %v852 = vpop.f32.mrf.mxu0
      %853 = vmatprep.mubr.f32.mxu0 0.0
      %854 = vmatmul.mubr.f32.gmra.mxu0 %v385
      %v855 = vpop.f32.mrf.mxu0
      %v856 = vadd.f32 0.0, %v855
      %v857 = vpop.f32.mrf.mxu0
      %858 = vmatprep.mubr.f32.mxu0 0.0
      %859 = vmatmul.mubr.f32.gmra.mxu0 %v388
      %v860 = vpop.f32.mrf.mxu0
      %v861 = vadd.f32 0.0, %v860
      %v862 = vpop.f32.mrf.mxu0
      %863 = vmatprep.mubr.f32.mxu0 0.0
      %864 = vmatmul.mubr.f32.gmra.mxu0 %v391
      %v865 = vpop.f32.mrf.mxu0
      %v866 = vadd.f32 0.0, %v865
      %v867 = vpop.f32.mrf.mxu0
      %868 = vmatprep.mubr.f32.mxu0 0.0
      %869 = vmatmul.mubr.f32.gmra.mxu0 %v394
      %v870 = vpop.f32.mrf.mxu0
      %v871 = vadd.f32 0.0, %v870
      %v872 = vpop.f32.mrf.mxu0
      %873 = vmatprep.mubr.f32.mxu0 0.0
      %874 = vmatmul.mubr.f32.gmra.mxu0 %v397
      %v875 = vpop.f32.mrf.mxu0
      %v876 = vadd.f32 0.0, %v875
      %v877 = vpop.f32.mrf.mxu0
      %878 = vmatprep.mubr.f32.mxu0 0.0
      %879 = vmatmul.mubr.f32.gmra.mxu0 %v400
      %v880 = vpop.f32.mrf.mxu0
      %v881 = vadd.f32 0.0, %v880
      %v882 = vpop.f32.mrf.mxu0
      %883 = vmatprep.mubr.f32.mxu0 0.0
      %884 = vmatmul.mubr.f32.gmra.mxu0 %v403
      %v885 = vpop.f32.mrf.mxu0
      %v886 = vadd.f32 0.0, %v885
      %v887 = vpop.f32.mrf.mxu0
      %888 = vmatprep.mubr.f32.mxu0 0.0
      %889 = vmatmul.mubr.f32.gmra.mxu0 %v406
      %v890 = vpop.f32.mrf.mxu0
      %v891 = vadd.f32 0.0, %v890
      %v892 = vpop.f32.mrf.mxu0
      %893 = vmatprep.mubr.f32.mxu0 0.0
      %894 = vmatmul.mubr.f32.gmra.mxu0 %v409
      %v895 = vpop.f32.mrf.mxu0
      %v896 = vadd.f32 0.0, %v895
      %v897 = vpop.f32.mrf.mxu0
      %898 = vmatprep.mubr.f32.mxu0 0.0
      %899 = vmatmul.mubr.f32.gmra.mxu0 %v412
      %v900 = vpop.f32.mrf.mxu0
      %v901 = vadd.f32 0.0, %v900
      %v902 = vpop.f32.mrf.mxu0
      %903 = vdwg.mxu0
      %v904 = vmax.f32 %v746, 0.0
      %v905 = vmax.f32 %v751, 0.0
      %v906 = vmax.f32 %v756, 0.0
      %v907 = vmax.f32 %v761, 0.0
      %v908 = vmax.f32 %v766, 0.0
      %v909 = vmax.f32 %v771, 0.0
      %v910 = vmax.f32 %v776, 0.0
      %v911 = vmax.f32 %v781, 0.0
      %v912 = vmax.f32 %v786, 0.0
      %v913 = vmax.f32 %v791, 0.0
      %v914 = vmax.f32 %v796, 0.0
      %v915 = vmax.f32 %v801, 0.0
      %v916 = vmax.f32 %v806, 0.0
      %v917 = vmax.f32 %v811, 0.0
      %v918 = vmax.f32 %v816, 0.0
      %v919 = vmax.f32 %v821, 0.0
      %v920 = vmax.f32 %v826, 0.0
      %v921 = vmax.f32 %v831, 0.0
      %v922 = vmax.f32 %v836, 0.0
      %v923 = vmax.f32 %v841, 0.0
      %v924 = vmax.f32 %v846, 0.0
      %v925 = vmax.f32 %v851, 0.0
      %v926 = vmax.f32 %v856, 0.0
      %v927 = vmax.f32 %v861, 0.0
      %v928 = vmax.f32 %v866, 0.0
      %v929 = vmax.f32 %v871, 0.0
      %v930 = vmax.f32 %v876, 0.0
      %v931 = vmax.f32 %v881, 0.0
      %v932 = vmax.f32 %v886, 0.0
      %v933 = vmax.f32 %v891, 0.0
      %v934 = vmax.f32 %v896, 0.0
      %v935 = vmax.f32 %v901, 0.0
      %v936 = vsel %vm317, %v643, 0.0
      %937 = vadd.xlane.f32.xlu0 %v936
      %v938 = vpop.xlane.xlu0 %937
      %v939 = vsel %vm317, %v644, 0.0
      %940 = vadd.xlane.f32.xlu0 %v939
      %v941 = vpop.xlane.xlu0 %940
      %v942 = vsel %vm317, %v645, 0.0
      %943 = vadd.xlane.f32.xlu0 %v942
      %v944 = vpop.xlane.xlu0 %943
      %v945 = vsel %vm317, %v646, 0.0
      %946 = vadd.xlane.f32.xlu0 %v945
      %v947 = vpop.xlane.xlu0 %946
      %v948 = vsel %vm317, %v647, 0.0
      %949 = vadd.xlane.f32.xlu0 %v948
      %v950 = vpop.xlane.xlu0 %949
      %v951 = vsel %vm317, %v648, 0.0
      %952 = vadd.xlane.f32.xlu0 %v951
      %v953 = vpop.xlane.xlu0 %952
      %v954 = vsel %vm317, %v649, 0.0
      %955 = vadd.xlane.f32.xlu0 %v954
      %v956 = vpop.xlane.xlu0 %955
      %v957 = vsel %vm317, %v650, 0.0
      %958 = vadd.xlane.f32.xlu0 %v957
      %v959 = vpop.xlane.xlu0 %958
      %v960 = vsel %vm317, %v651, 0.0
      %961 = vadd.xlane.f32.xlu0 %v960
      %v962 = vpop.xlane.xlu0 %961
      %v963 = vsel %vm317, %v652, 0.0
      %964 = vadd.xlane.f32.xlu0 %v963
      %v965 = vpop.xlane.xlu0 %964
      %v966 = vsel %vm317, %v653, 0.0
      %967 = vadd.xlane.f32.xlu0 %v966
      %v968 = vpop.xlane.xlu0 %967
      %v969 = vsel %vm317, %v654, 0.0
      %970 = vadd.xlane.f32.xlu0 %v969
      %v971 = vpop.xlane.xlu0 %970
      %v972 = vsel %vm317, %v655, 0.0
      %973 = vadd.xlane.f32.xlu0 %v972
      %v974 = vpop.xlane.xlu0 %973
      %v975 = vsel %vm317, %v656, 0.0
      %976 = vadd.xlane.f32.xlu0 %v975
      %v977 = vpop.xlane.xlu0 %976
      %v978 = vsel %vm317, %v657, 0.0
      %979 = vadd.xlane.f32.xlu0 %v978
      %v980 = vpop.xlane.xlu0 %979
      %v981 = vsel %vm317, %v658, 0.0
      %982 = vadd.xlane.f32.xlu0 %v981
      %v983 = vpop.xlane.xlu0 %982
      %v984 = vsel %vm317, %v659, 0.0
      %985 = vadd.xlane.f32.xlu0 %v984
      %v986 = vpop.xlane.xlu0 %985
      %v987 = vsel %vm317, %v660, 0.0
      %988 = vadd.xlane.f32.xlu0 %v987
      %v989 = vpop.xlane.xlu0 %988
      %v990 = vsel %vm317, %v661, 0.0
      %991 = vadd.xlane.f32.xlu0 %v990
      %v992 = vpop.xlane.xlu0 %991
      %v993 = vsel %vm317, %v662, 0.0
      %994 = vadd.xlane.f32.xlu0 %v993
      %v995 = vpop.xlane.xlu0 %994
      %v996 = vsel %vm317, %v663, 0.0
      %997 = vadd.xlane.f32.xlu0 %v996
      %v998 = vpop.xlane.xlu0 %997
      %v999 = vsel %vm317, %v664, 0.0
      %1000 = vadd.xlane.f32.xlu0 %v999
      %v1001 = vpop.xlane.xlu0 %1000
      %v1002 = vsel %vm317, %v665, 0.0
      %1003 = vadd.xlane.f32.xlu0 %v1002
      %v1004 = vpop.xlane.xlu0 %1003
      %v1005 = vsel %vm317, %v666, 0.0
      %1006 = vadd.xlane.f32.xlu0 %v1005
      %v1007 = vpop.xlane.xlu0 %1006
      %v1008 = vsel %vm317, %v667, 0.0
      %1009 = vadd.xlane.f32.xlu0 %v1008
      %v1010 = vpop.xlane.xlu0 %1009
      %v1011 = vsel %vm317, %v668, 0.0
      %1012 = vadd.xlane.f32.xlu0 %v1011
      %v1013 = vpop.xlane.xlu0 %1012
      %v1014 = vsel %vm317, %v669, 0.0
      %1015 = vadd.xlane.f32.xlu0 %v1014
      %v1016 = vpop.xlane.xlu0 %1015
      %v1017 = vsel %vm317, %v670, 0.0
      %1018 = vadd.xlane.f32.xlu0 %v1017
      %v1019 = vpop.xlane.xlu0 %1018
      %v1020 = vsel %vm317, %v671, 0.0
      %1021 = vadd.xlane.f32.xlu0 %v1020
      %v1022 = vpop.xlane.xlu0 %1021
      %v1023 = vsel %vm317, %v672, 0.0
      %1024 = vadd.xlane.f32.xlu0 %v1023
      %v1025 = vpop.xlane.xlu0 %1024
      %v1026 = vsel %vm317, %v673, 0.0
      %1027 = vadd.xlane.f32.xlu0 %v1026
      %v1028 = vpop.xlane.xlu0 %1027
      %v1029 = vsel %vm317, %v674, 0.0
      %1030 = vadd.xlane.f32.xlu0 %v1029
      %v1031 = vpop.xlane.xlu0 %1030
      %v1032 = vmul.f32 %v938, 0.25
      %v1033 = vmul.f32 %v941, 0.25
      %v1034 = vmul.f32 %v944, 0.25
      %v1035 = vmul.f32 %v947, 0.25
      %v1036 = vmul.f32 %v950, 0.25
      %v1037 = vmul.f32 %v953, 0.25
      %v1038 = vmul.f32 %v956, 0.25
      %v1039 = vmul.f32 %v959, 0.25
      %v1040 = vmul.f32 %v962, 0.25
      %v1041 = vmul.f32 %v965, 0.25
      %v1042 = vmul.f32 %v968, 0.25
      %v1043 = vmul.f32 %v971, 0.25
      %v1044 = vmul.f32 %v974, 0.25
      %v1045 = vmul.f32 %v977, 0.25
      %v1046 = vmul.f32 %v980, 0.25
      %v1047 = vmul.f32 %v983, 0.25
      %v1048 = vmul.f32 %v986, 0.25
      %v1049 = vmul.f32 %v989, 0.25
      %v1050 = vmul.f32 %v992, 0.25
      %v1051 = vmul.f32 %v995, 0.25
      %v1052 = vmul.f32 %v998, 0.25
      %v1053 = vmul.f32 %v1001, 0.25
      %v1054 = vmul.f32 %v1004, 0.25
      %v1055 = vmul.f32 %v1007, 0.25
      %v1056 = vmul.f32 %v1010, 0.25
      %v1057 = vmul.f32 %v1013, 0.25
      %v1058 = vmul.f32 %v1016, 0.25
      %v1059 = vmul.f32 %v1019, 0.25
      %v1060 = vmul.f32 %v1022, 0.25
      %v1061 = vmul.f32 %v1025, 0.25
      %v1062 = vmul.f32 %v1028, 0.25
      %v1063 = vmul.f32 %v1031, 0.25
      %v1064 = vsel %vm317, %v904, -inf
      %1065 = vmax.xlane.f32.xlu0 %v1064
      %v1066 = vpop.xlane.xlu0 %1065
      %v1067 = vsel %vm317, %v905, -inf
      %1068 = vmax.xlane.f32.xlu0 %v1067
      %v1069 = vpop.xlane.xlu0 %1068
      %v1070 = vsel %vm317, %v906, -inf
      %1071 = vmax.xlane.f32.xlu0 %v1070
      %v1072 = vpop.xlane.xlu0 %1071
      %v1073 = vsel %vm317, %v907, -inf
      %1074 = vmax.xlane.f32.xlu0 %v1073
      %v1075 = vpop.xlane.xlu0 %1074
      %v1076 = vsel %vm317, %v908, -inf
      %1077 = vmax.xlane.f32.xlu0 %v1076
      %v1078 = vpop.xlane.xlu0 %1077
      %v1079 = vsel %vm317, %v909, -inf
      %1080 = vmax.xlane.f32.xlu0 %v1079
      %v1081 = vpop.xlane.xlu0 %1080
      %v1082 = vsel %vm317, %v910, -inf
      %1083 = vmax.xlane.f32.xlu0 %v1082
      %v1084 = vpop.xlane.xlu0 %1083
      %v1085 = vsel %vm317, %v911, -inf
      %1086 = vmax.xlane.f32.xlu0 %v1085
      %v1087 = vpop.xlane.xlu0 %1086
      %v1088 = vsel %vm317, %v912, -inf
      %1089 = vmax.xlane.f32.xlu0 %v1088
      %v1090 = vpop.xlane.xlu0 %1089
      %v1091 = vsel %vm317, %v913, -inf
      %1092 = vmax.xlane.f32.xlu0 %v1091
      %v1093 = vpop.xlane.xlu0 %1092
      %v1094 = vsel %vm317, %v914, -inf
      %1095 = vmax.xlane.f32.xlu0 %v1094
      %v1096 = vpop.xlane.xlu0 %1095
      %v1097 = vsel %vm317, %v915, -inf
      %1098 = vmax.xlane.f32.xlu0 %v1097
      %v1099 = vpop.xlane.xlu0 %1098
      %v1100 = vsel %vm317, %v916, -inf
      %1101 = vmax.xlane.f32.xlu0 %v1100
      %v1102 = vpop.xlane.xlu0 %1101
      %v1103 = vsel %vm317, %v917, -inf
      %1104 = vmax.xlane.f32.xlu0 %v1103
      %v1105 = vpop.xlane.xlu0 %1104
      %v1106 = vsel %vm317, %v918, -inf
      %1107 = vmax.xlane.f32.xlu0 %v1106
      %v1108 = vpop.xlane.xlu0 %1107
      %v1109 = vsel %vm317, %v919, -inf
      %1110 = vmax.xlane.f32.xlu0 %v1109
      %v1111 = vpop.xlane.xlu0 %1110
      %v1112 = vsel %vm317, %v920, -inf
      %1113 = vmax.xlane.f32.xlu0 %v1112
      %v1114 = vpop.xlane.xlu0 %1113
      %v1115 = vsel %vm317, %v921, -inf
      %1116 = vmax.xlane.f32.xlu0 %v1115
      %v1117 = vpop.xlane.xlu0 %1116
      %v1118 = vsel %vm317, %v922, -inf
      %1119 = vmax.xlane.f32.xlu0 %v1118
      %v1120 = vpop.xlane.xlu0 %1119
      %v1121 = vsel %vm317, %v923, -inf
      %1122 = vmax.xlane.f32.xlu0 %v1121
      %v1123 = vpop.xlane.xlu0 %1122
      %v1124 = vsel %vm317, %v924, -inf
      %1125 = vmax.xlane.f32.xlu0 %v1124
      %v1126 = vpop.xlane.xlu0 %1125
      %v1127 = vsel %vm317, %v925, -inf
      %1128 = vmax.xlane.f32.xlu0 %v1127
      %v1129 = vpop.xlane.xlu0 %1128
      %v1130 = vsel %vm317, %v926, -inf
      %1131 = vmax.xlane.f32.xlu0 %v1130
      %v1132 = vpop.xlane.xlu0 %1131
      %v1133 = vsel %vm317, %v927, -inf
      %1134 = vmax.xlane.f32.xlu0 %v1133
      %v1135 = vpop.xlane.xlu0 %1134
      %v1136 = vsel %vm317, %v928, -inf
      %1137 = vmax.xlane.f32.xlu0 %v1136
      %v1138 = vpop.xlane.xlu0 %1137
      %v1139 = vsel %vm317, %v929, -inf
      %1140 = vmax.xlane.f32.xlu0 %v1139
      %v1141 = vpop.xlane.xlu0 %1140
      %v1142 = vsel %vm317, %v930, -inf
      %1143 = vmax.xlane.f32.xlu0 %v1142
      %v1144 = vpop.xlane.xlu0 %1143
      %v1145 = vsel %vm317, %v931, -inf
      %1146 = vmax.xlane.f32.xlu0 %v1145
      %v1147 = vpop.xlane.xlu0 %1146
      %v1148 = vsel %vm317, %v932, -inf
      %1149 = vmax.xlane.f32.xlu0 %v1148
      %v1150 = vpop.xlane.xlu0 %1149
      %v1151 = vsel %vm317, %v933, -inf
      %1152 = vmax.xlane.f32.xlu0 %v1151
      %v1153 = vpop.xlane.xlu0 %1152
      %v1154 = vsel %vm317, %v934, -inf
      %1155 = vmax.xlane.f32.xlu0 %v1154
      %v1156 = vpop.xlane.xlu0 %1155
      %v1157 = vsel %vm317, %v935, -inf
      %1158 = vmax.xlane.f32.xlu0 %v1157
      %v1159 = vpop.xlane.xlu0 %1158
      %v1160 = vadd.f32 %v1032, %v1066
      %v1161 = vadd.f32 %v1033, %v1069
      %v1162 = vadd.f32 %v1034, %v1072
      %v1163 = vadd.f32 %v1035, %v1075
      %v1164 = vadd.f32 %v1036, %v1078
      %v1165 = vadd.f32 %v1037, %v1081
      %v1166 = vadd.f32 %v1038, %v1084
      %v1167 = vadd.f32 %v1039, %v1087
      %v1168 = vadd.f32 %v1040, %v1090
      %v1169 = vadd.f32 %v1041, %v1093
      %v1170 = vadd.f32 %v1042, %v1096
      %v1171 = vadd.f32 %v1043, %v1099
      %v1172 = vadd.f32 %v1044, %v1102
      %v1173 = vadd.f32 %v1045, %v1105
      %v1174 = vadd.f32 %v1046, %v1108
      %v1175 = vadd.f32 %v1047, %v1111
      %v1176 = vadd.f32 %v1048, %v1114
      %v1177 = vadd.f32 %v1049, %v1117
      %v1178 = vadd.f32 %v1050, %v1120
      %v1179 = vadd.f32 %v1051, %v1123
      %v1180 = vadd.f32 %v1052, %v1126
      %v1181 = vadd.f32 %v1053, %v1129
      %v1182 = vadd.f32 %v1054, %v1132
      %v1183 = vadd.f32 %v1055, %v1135
      %v1184 = vadd.f32 %v1056, %v1138
      %v1185 = vadd.f32 %v1057, %v1141
      %v1186 = vadd.f32 %v1058, %v1144
      %v1187 = vadd.f32 %v1059, %v1147
      %v1188 = vadd.f32 %v1060, %v1150
      %v1189 = vadd.f32 %v1061, %v1153
      %v1190 = vadd.f32 %v1062, %v1156
      %v1191 = vadd.f32 %v1063, %v1159
      %vm1192 = vcmask 7168
      %v1193 = vsel %vm1192, %v1032, %v1066
      %v1194 = vsel %vm1192, %v1033, %v1069
      %v1195 = vsel %vm1192, %v1034, %v1072
      %v1196 = vsel %vm1192, %v1035, %v1075
      %v1197 = vsel %vm1192, %v1036, %v1078
      %v1198 = vsel %vm1192, %v1037, %v1081
      %v1199 = vsel %vm1192, %v1038, %v1084
      %v1200 = vsel %vm1192, %v1039, %v1087
      %v1201 = vsel %vm1192, %v1040, %v1090
      %v1202 = vsel %vm1192, %v1041, %v1093
      %v1203 = vsel %vm1192, %v1042, %v1096
      %v1204 = vsel %vm1192, %v1043, %v1099
      %v1205 = vsel %vm1192, %v1044, %v1102
      %v1206 = vsel %vm1192, %v1045, %v1105
      %v1207 = vsel %vm1192, %v1046, %v1108
      %v1208 = vsel %vm1192, %v1047, %v1111
      %v1209 = vsel %vm1192, %v1048, %v1114
      %v1210 = vsel %vm1192, %v1049, %v1117
      %v1211 = vsel %vm1192, %v1050, %v1120
      %v1212 = vsel %vm1192, %v1051, %v1123
      %v1213 = vsel %vm1192, %v1052, %v1126
      %v1214 = vsel %vm1192, %v1053, %v1129
      %v1215 = vsel %vm1192, %v1054, %v1132
      %v1216 = vsel %vm1192, %v1055, %v1135
      %v1217 = vsel %vm1192, %v1056, %v1138
      %v1218 = vsel %vm1192, %v1057, %v1141
      %v1219 = vsel %vm1192, %v1058, %v1144
      %v1220 = vsel %vm1192, %v1059, %v1147
      %v1221 = vsel %vm1192, %v1060, %v1150
      %v1222 = vsel %vm1192, %v1061, %v1153
      %v1223 = vsel %vm1192, %v1062, %v1156
      %v1224 = vsel %vm1192, %v1063, %v1159
      %vm1225 = vcmask 15360
      %v1226 = vsel %vm1225, %v1193, %v1160
      %v1227 = vsel %vm1225, %v1194, %v1161
      %v1228 = vsel %vm1225, %v1195, %v1162
      %v1229 = vsel %vm1225, %v1196, %v1163
      %v1230 = vsel %vm1225, %v1197, %v1164
      %v1231 = vsel %vm1225, %v1198, %v1165
      %v1232 = vsel %vm1225, %v1199, %v1166
      %v1233 = vsel %vm1225, %v1200, %v1167
      %v1234 = vsel %vm1225, %v1201, %v1168
      %v1235 = vsel %vm1225, %v1202, %v1169
      %v1236 = vsel %vm1225, %v1203, %v1170
      %v1237 = vsel %vm1225, %v1204, %v1171
      %v1238 = vsel %vm1225, %v1205, %v1172
      %v1239 = vsel %vm1225, %v1206, %v1173
      %v1240 = vsel %vm1225, %v1207, %v1174
      %v1241 = vsel %vm1225, %v1208, %v1175
      %v1242 = vsel %vm1225, %v1209, %v1176
      %v1243 = vsel %vm1225, %v1210, %v1177
      %v1244 = vsel %vm1225, %v1211, %v1178
      %v1245 = vsel %vm1225, %v1212, %v1179
      %v1246 = vsel %vm1225, %v1213, %v1180
      %v1247 = vsel %vm1225, %v1214, %v1181
      %v1248 = vsel %vm1225, %v1215, %v1182
      %v1249 = vsel %vm1225, %v1216, %v1183
      %v1250 = vsel %vm1225, %v1217, %v1184
      %v1251 = vsel %vm1225, %v1218, %v1185
      %v1252 = vsel %vm1225, %v1219, %v1186
      %v1253 = vsel %vm1225, %v1220, %v1187
      %v1254 = vsel %vm1225, %v1221, %v1188
      %v1255 = vsel %vm1225, %v1222, %v1189
      %v1256 = vsel %vm1225, %v1223, %v1190
      %v1257 = vsel %vm1225, %v1224, %v1191
      %v1258 = vld [vmem:[%s3] sm:$0x7]
      %v1259 = vld [vmem:[%s4] sm:$0x1]
      %v1261 = vlaneseq
      %v1262 = vshrl.u32 %v1261, 7
      %v1263 = vsub.s32 0, %v1262
      %v1264 = vrot.slane %v1259, %v1263
      %vm1266 = vcmask 23552
      %v1268 = vsel %vm1266, %v1226, 0
      %v1271 = vsel %vm1266, %v1227, 0
      %v1274 = vsel %vm1266, %v1228, 0
      %v1277 = vsel %vm1266, %v1229, 0
      %v1280 = vsel %vm1266, %v1230, 0
      %v1283 = vsel %vm1266, %v1231, 0
      %v1286 = vsel %vm1266, %v1232, 0
      %v1289 = vsel %vm1266, %v1233, 0
      %v1292 = vsel %vm1266, %v1234, 0
      %v1295 = vsel %vm1266, %v1235, 0
      %v1298 = vsel %vm1266, %v1236, 0
      %v1301 = vsel %vm1266, %v1237, 0
      %v1304 = vsel %vm1266, %v1238, 0
      %v1307 = vsel %vm1266, %v1239, 0
      %v1310 = vsel %vm1266, %v1240, 0
      %v1313 = vsel %vm1266, %v1241, 0
      %v1316 = vsel %vm1266, %v1242, 0
      %v1319 = vsel %vm1266, %v1243, 0
      %v1322 = vsel %vm1266, %v1244, 0
      %v1325 = vsel %vm1266, %v1245, 0
      %v1328 = vsel %vm1266, %v1246, 0
      %v1331 = vsel %vm1266, %v1247, 0
      %v1334 = vsel %vm1266, %v1248, 0
      %v1337 = vsel %vm1266, %v1249, 0
      %v1340 = vsel %vm1266, %v1250, 0
      %v1343 = vsel %vm1266, %v1251, 0
      %v1346 = vsel %vm1266, %v1252, 0
      %v1349 = vsel %vm1266, %v1253, 0
      %v1352 = vsel %vm1266, %v1254, 0
      %v1355 = vsel %vm1266, %v1255, 0
      %v1358 = vsel %vm1266, %v1256, 0
      %v1361 = vsel %vm1266, %v1257, 0
      %vm1363 = vcmask 1042432
      %v1365 = vsel %vm1363, %v1258, 0
      %1367 = vmatprep.subr.mxu0 0.0
      %1368 = vmatpush1.msra.mxu0 0.0
      %1369 = vmatprep.subr.mxu0 0.0
      %1370 = vmatpush1.msra.mxu0 0.0
      %1371 = vmatprep.subr.mxu0 0.0
      %1372 = vmatpush1.msra.mxu0 0.0
      %1373 = vmatprep.subr.mxu0 0.0
      %1374 = vmatpush1.msra.mxu0 0.0
      %1375 = vmatprep.subr.mxu0 0.0
      %1376 = vmatpush1.msra.mxu0 0.0
      %1377 = vmatprep.subr.mxu0 0.0
      %1378 = vmatpush1.msra.mxu0 0.0
      %1379 = vmatprep.subr.mxu0 0.0
      %1380 = vmatpush1.msra.mxu0 0.0
      %1381 = vmatprep.subr.mxu0 0.0
      %1382 = vmatpush1.msra.mxu0 0.0
      %1383 = vmatprep.subr.mxu0 0.0
      %1384 = vmatpush1.msra.mxu0 0.0
      %1385 = vmatprep.subr.mxu0 0.0
      %1386 = vmatpush1.msra.mxu0 0.0
      %1387 = vmatprep.subr.mxu0 0.0
      %1388 = vmatpush1.msra.mxu0 0.0
      %1389 = vmatprep.subr.mxu0 0.0
      %1390 = vmatpush1.msra.mxu0 0.0
      %1391 = vmatprep.subr.mxu0 0.0
      %1392 = vmatpush1.msra.mxu0 0.0
      %1393 = vmatprep.subr.mxu0 0.0
      %1394 = vmatpush1.msra.mxu0 0.0
      %1395 = vmatprep.subr.mxu0 0.0
      %1396 = vmatpush1.msra.mxu0 0.0
      %1397 = vmatprep.subr.mxu0 0.0
      %1398 = vmatpush1.msra.mxu0 %v1365
      %1399 = vmatprep.subr.mxu0 0.0
      %1400 = vmatpush2.msra.mxu0 0.0
      %1401 = vmatprep.subr.mxu0 0.0
      %1402 = vmatpush2.msra.mxu0 0.0
      %1403 = vmatprep.subr.mxu0 0.0
      %1404 = vmatpush2.msra.mxu0 0.0
      %1405 = vmatprep.subr.mxu0 0.0
      %1406 = vmatpush2.msra.mxu0 0.0
      %1407 = vmatprep.subr.mxu0 0.0
      %1408 = vmatpush2.msra.mxu0 0.0
      %1409 = vmatprep.subr.mxu0 0.0
      %1410 = vmatpush2.msra.mxu0 0.0
      %1411 = vmatprep.subr.mxu0 0.0
      %1412 = vmatpush2.msra.mxu0 0.0
      %1413 = vmatprep.subr.mxu0 0.0
      %1414 = vmatpush2.msra.mxu0 0.0
      %1415 = vmatprep.subr.mxu0 0.0
      %1416 = vmatpush2.msra.mxu0 0.0
      %1417 = vmatprep.subr.mxu0 0.0
      %1418 = vmatpush2.msra.mxu0 0.0
      %1419 = vmatprep.subr.mxu0 0.0
      %1420 = vmatpush2.msra.mxu0 0.0
      %1421 = vmatprep.subr.mxu0 0.0
      %1422 = vmatpush2.msra.mxu0 0.0
      %1423 = vmatprep.subr.mxu0 0.0
      %1424 = vmatpush2.msra.mxu0 0.0
      %1425 = vmatprep.subr.mxu0 0.0
      %1426 = vmatpush2.msra.mxu0 0.0
      %1427 = vmatprep.subr.mxu0 0.0
      %1428 = vmatpush2.msra.mxu0 0.0
      %1429 = vmatprep.subr.mxu0 0.0
      %1430 = vmatpush2.msra.mxu0 0.0
      %1431 = vmatprep.mubr.f32.mxu0 0.0
      %1432 = vmatmul.mubr.f32.gmra.mxu0 %v1268
      %v1433 = vpop.f32.mrf.mxu0
      %v1434 = vadd.f32 %v1264, %v1433
      %v1435 = vpop.f32.mrf.mxu0
      %1436 = vmatprep.mubr.f32.mxu0 0.0
      %1437 = vmatmul.mubr.f32.gmra.mxu0 %v1271
      %v1438 = vpop.f32.mrf.mxu0
      %v1439 = vadd.f32 %v1264, %v1438
      %v1440 = vpop.f32.mrf.mxu0
      %1441 = vmatprep.mubr.f32.mxu0 0.0
      %1442 = vmatmul.mubr.f32.gmra.mxu0 %v1274
      %v1443 = vpop.f32.mrf.mxu0
      %v1444 = vadd.f32 %v1264, %v1443
      %v1445 = vpop.f32.mrf.mxu0
      %1446 = vmatprep.mubr.f32.mxu0 0.0
      %1447 = vmatmul.mubr.f32.gmra.mxu0 %v1277
      %v1448 = vpop.f32.mrf.mxu0
      %v1449 = vadd.f32 %v1264, %v1448
      %v1450 = vpop.f32.mrf.mxu0
      %1451 = vmatprep.mubr.f32.mxu0 0.0
      %1452 = vmatmul.mubr.f32.gmra.mxu0 %v1280
      %v1453 = vpop.f32.mrf.mxu0
      %v1454 = vadd.f32 %v1264, %v1453
      %v1455 = vpop.f32.mrf.mxu0
      %1456 = vmatprep.mubr.f32.mxu0 0.0
      %1457 = vmatmul.mubr.f32.gmra.mxu0 %v1283
      %v1458 = vpop.f32.mrf.mxu0
      %v1459 = vadd.f32 %v1264, %v1458
      %v1460 = vpop.f32.mrf.mxu0
      %1461 = vmatprep.mubr.f32.mxu0 0.0
      %1462 = vmatmul.mubr.f32.gmra.mxu0 %v1286
      %v1463 = vpop.f32.mrf.mxu0
      %v1464 = vadd.f32 %v1264, %v1463
      %v1465 = vpop.f32.mrf.mxu0
      %1466 = vmatprep.mubr.f32.mxu0 0.0
      %1467 = vmatmul.mubr.f32.gmra.mxu0 %v1289
      %v1468 = vpop.f32.mrf.mxu0
      %v1469 = vadd.f32 %v1264, %v1468
      %v1470 = vpop.f32.mrf.mxu0
      %1471 = vmatprep.mubr.f32.mxu0 0.0
      %1472 = vmatmul.mubr.f32.gmra.mxu0 %v1292
      %v1473 = vpop.f32.mrf.mxu0
      %v1474 = vadd.f32 %v1264, %v1473
      %v1475 = vpop.f32.mrf.mxu0
      %1476 = vmatprep.mubr.f32.mxu0 0.0
      %1477 = vmatmul.mubr.f32.gmra.mxu0 %v1295
      %v1478 = vpop.f32.mrf.mxu0
      %v1479 = vadd.f32 %v1264, %v1478
      %v1480 = vpop.f32.mrf.mxu0
      %1481 = vmatprep.mubr.f32.mxu0 0.0
      %1482 = vmatmul.mubr.f32.gmra.mxu0 %v1298
      %v1483 = vpop.f32.mrf.mxu0
      %v1484 = vadd.f32 %v1264, %v1483
      %v1485 = vpop.f32.mrf.mxu0
      %1486 = vmatprep.mubr.f32.mxu0 0.0
      %1487 = vmatmul.mubr.f32.gmra.mxu0 %v1301
      %v1488 = vpop.f32.mrf.mxu0
      %v1489 = vadd.f32 %v1264, %v1488
      %v1490 = vpop.f32.mrf.mxu0
      %1491 = vmatprep.mubr.f32.mxu0 0.0
      %1492 = vmatmul.mubr.f32.gmra.mxu0 %v1304
      %v1493 = vpop.f32.mrf.mxu0
      %v1494 = vadd.f32 %v1264, %v1493
      %v1495 = vpop.f32.mrf.mxu0
      %1496 = vmatprep.mubr.f32.mxu0 0.0
      %1497 = vmatmul.mubr.f32.gmra.mxu0 %v1307
      %v1498 = vpop.f32.mrf.mxu0
      %v1499 = vadd.f32 %v1264, %v1498
      %v1500 = vpop.f32.mrf.mxu0
      %1501 = vmatprep.mubr.f32.mxu0 0.0
      %1502 = vmatmul.mubr.f32.gmra.mxu0 %v1310
      %v1503 = vpop.f32.mrf.mxu0
      %v1504 = vadd.f32 %v1264, %v1503
      %v1505 = vpop.f32.mrf.mxu0
      %1506 = vmatprep.mubr.f32.mxu0 0.0
      %1507 = vmatmul.mubr.f32.gmra.mxu0 %v1313
      %v1508 = vpop.f32.mrf.mxu0
      %v1509 = vadd.f32 %v1264, %v1508
      %v1510 = vpop.f32.mrf.mxu0
      %1511 = vmatprep.mubr.f32.mxu0 0.0
      %1512 = vmatmul.mubr.f32.gmra.mxu0 %v1316
      %v1513 = vpop.f32.mrf.mxu0
      %v1514 = vadd.f32 %v1264, %v1513
      %v1515 = vpop.f32.mrf.mxu0
      %1516 = vmatprep.mubr.f32.mxu0 0.0
      %1517 = vmatmul.mubr.f32.gmra.mxu0 %v1319
      %v1518 = vpop.f32.mrf.mxu0
      %v1519 = vadd.f32 %v1264, %v1518
      %v1520 = vpop.f32.mrf.mxu0
      %1521 = vmatprep.mubr.f32.mxu0 0.0
      %1522 = vmatmul.mubr.f32.gmra.mxu0 %v1322
      %v1523 = vpop.f32.mrf.mxu0
      %v1524 = vadd.f32 %v1264, %v1523
      %v1525 = vpop.f32.mrf.mxu0
      %1526 = vmatprep.mubr.f32.mxu0 0.0
      %1527 = vmatmul.mubr.f32.gmra.mxu0 %v1325
      %v1528 = vpop.f32.mrf.mxu0
      %v1529 = vadd.f32 %v1264, %v1528
      %v1530 = vpop.f32.mrf.mxu0
      %1531 = vmatprep.mubr.f32.mxu0 0.0
      %1532 = vmatmul.mubr.f32.gmra.mxu0 %v1328
      %v1533 = vpop.f32.mrf.mxu0
      %v1534 = vadd.f32 %v1264, %v1533
      %v1535 = vpop.f32.mrf.mxu0
      %1536 = vmatprep.mubr.f32.mxu0 0.0
      %1537 = vmatmul.mubr.f32.gmra.mxu0 %v1331
      %v1538 = vpop.f32.mrf.mxu0
      %v1539 = vadd.f32 %v1264, %v1538
      %v1540 = vpop.f32.mrf.mxu0
      %1541 = vmatprep.mubr.f32.mxu0 0.0
      %1542 = vmatmul.mubr.f32.gmra.mxu0 %v1334
      %v1543 = vpop.f32.mrf.mxu0
      %v1544 = vadd.f32 %v1264, %v1543
      %v1545 = vpop.f32.mrf.mxu0
      %1546 = vmatprep.mubr.f32.mxu0 0.0
      %1547 = vmatmul.mubr.f32.gmra.mxu0 %v1337
      %v1548 = vpop.f32.mrf.mxu0
      %v1549 = vadd.f32 %v1264, %v1548
      %v1550 = vpop.f32.mrf.mxu0
      %1551 = vmatprep.mubr.f32.mxu0 0.0
      %1552 = vmatmul.mubr.f32.gmra.mxu0 %v1340
      %v1553 = vpop.f32.mrf.mxu0
      %v1554 = vadd.f32 %v1264, %v1553
      %v1555 = vpop.f32.mrf.mxu0
      %1556 = vmatprep.mubr.f32.mxu0 0.0
      %1557 = vmatmul.mubr.f32.gmra.mxu0 %v1343
      %v1558 = vpop.f32.mrf.mxu0
      %v1559 = vadd.f32 %v1264, %v1558
      %v1560 = vpop.f32.mrf.mxu0
      %1561 = vmatprep.mubr.f32.mxu0 0.0
      %1562 = vmatmul.mubr.f32.gmra.mxu0 %v1346
      %v1563 = vpop.f32.mrf.mxu0
      %v1564 = vadd.f32 %v1264, %v1563
      %v1565 = vpop.f32.mrf.mxu0
      %1566 = vmatprep.mubr.f32.mxu0 0.0
      %1567 = vmatmul.mubr.f32.gmra.mxu0 %v1349
      %v1568 = vpop.f32.mrf.mxu0
      %v1569 = vadd.f32 %v1264, %v1568
      %v1570 = vpop.f32.mrf.mxu0
      %1571 = vmatprep.mubr.f32.mxu0 0.0
      %1572 = vmatmul.mubr.f32.gmra.mxu0 %v1352
      %v1573 = vpop.f32.mrf.mxu0
      %v1574 = vadd.f32 %v1264, %v1573
      %v1575 = vpop.f32.mrf.mxu0
      %1576 = vmatprep.mubr.f32.mxu0 0.0
      %1577 = vmatmul.mubr.f32.gmra.mxu0 %v1355
      %v1578 = vpop.f32.mrf.mxu0
      %v1579 = vadd.f32 %v1264, %v1578
      %v1580 = vpop.f32.mrf.mxu0
      %1581 = vmatprep.mubr.f32.mxu0 0.0
      %1582 = vmatmul.mubr.f32.gmra.mxu0 %v1358
      %v1583 = vpop.f32.mrf.mxu0
      %v1584 = vadd.f32 %v1264, %v1583
      %v1585 = vpop.f32.mrf.mxu0
      %1586 = vmatprep.mubr.f32.mxu0 0.0
      %1587 = vmatmul.mubr.f32.gmra.mxu0 %v1361
      %v1588 = vpop.f32.mrf.mxu0
      %v1589 = vadd.f32 %v1264, %v1588
      %v1590 = vpop.f32.mrf.mxu0
      %1591 = vdwg.mxu0
      %v1592 = vmax.f32 %v1434, 0.0
      %v1593 = vmax.f32 %v1439, 0.0
      %v1594 = vmax.f32 %v1444, 0.0
      %v1595 = vmax.f32 %v1449, 0.0
      %v1596 = vmax.f32 %v1454, 0.0
      %v1597 = vmax.f32 %v1459, 0.0
      %v1598 = vmax.f32 %v1464, 0.0
      %v1599 = vmax.f32 %v1469, 0.0
      %v1600 = vmax.f32 %v1474, 0.0
      %v1601 = vmax.f32 %v1479, 0.0
      %v1602 = vmax.f32 %v1484, 0.0
      %v1603 = vmax.f32 %v1489, 0.0
      %v1604 = vmax.f32 %v1494, 0.0
      %v1605 = vmax.f32 %v1499, 0.0
      %v1606 = vmax.f32 %v1504, 0.0
      %v1607 = vmax.f32 %v1509, 0.0
      %v1608 = vmax.f32 %v1514, 0.0
      %v1609 = vmax.f32 %v1519, 0.0
      %v1610 = vmax.f32 %v1524, 0.0
      %v1611 = vmax.f32 %v1529, 0.0
      %v1612 = vmax.f32 %v1534, 0.0
      %v1613 = vmax.f32 %v1539, 0.0
      %v1614 = vmax.f32 %v1544, 0.0
      %v1615 = vmax.f32 %v1549, 0.0
      %v1616 = vmax.f32 %v1554, 0.0
      %v1617 = vmax.f32 %v1559, 0.0
      %v1618 = vmax.f32 %v1564, 0.0
      %v1619 = vmax.f32 %v1569, 0.0
      %v1620 = vmax.f32 %v1574, 0.0
      %v1621 = vmax.f32 %v1579, 0.0
      %v1622 = vmax.f32 %v1584, 0.0
      %v1623 = vmax.f32 %v1589, 0.0
      %v1624 = vld [vmem:[%s5] sm:$0x1]
      %v1626 = vlaneseq
      %v1627 = vshrl.u32 %v1626, 7
      %v1628 = vsub.s32 0, %v1627
      %v1629 = vrot.slane %v1624, %v1628
      %v1631 = vmul.f32 %v1592, %v1629
      %v1632 = vmul.f32 %v1593, %v1629
      %v1633 = vmul.f32 %v1594, %v1629
      %v1634 = vmul.f32 %v1595, %v1629
      %v1635 = vmul.f32 %v1596, %v1629
      %v1636 = vmul.f32 %v1597, %v1629
      %v1637 = vmul.f32 %v1598, %v1629
      %v1638 = vmul.f32 %v1599, %v1629
      %v1639 = vmul.f32 %v1600, %v1629
      %v1640 = vmul.f32 %v1601, %v1629
      %v1641 = vmul.f32 %v1602, %v1629
      %v1642 = vmul.f32 %v1603, %v1629
      %v1643 = vmul.f32 %v1604, %v1629
      %v1644 = vmul.f32 %v1605, %v1629
      %v1645 = vmul.f32 %v1606, %v1629
      %v1646 = vmul.f32 %v1607, %v1629
      %v1647 = vmul.f32 %v1608, %v1629
      %v1648 = vmul.f32 %v1609, %v1629
      %v1649 = vmul.f32 %v1610, %v1629
      %v1650 = vmul.f32 %v1611, %v1629
      %v1651 = vmul.f32 %v1612, %v1629
      %v1652 = vmul.f32 %v1613, %v1629
      %v1653 = vmul.f32 %v1614, %v1629
      %v1654 = vmul.f32 %v1615, %v1629
      %v1655 = vmul.f32 %v1616, %v1629
      %v1656 = vmul.f32 %v1617, %v1629
      %v1657 = vmul.f32 %v1618, %v1629
      %v1658 = vmul.f32 %v1619, %v1629
      %v1659 = vmul.f32 %v1620, %v1629
      %v1660 = vmul.f32 %v1621, %v1629
      %v1661 = vmul.f32 %v1622, %v1629
      %v1662 = vmul.f32 %v1623, %v1629
      %vm1663 = vcmask 48128
      %v1664 = vsel %vm1663, %v1631, 0.0
      %1665 = vadd.xlane.f32.xlu0 %v1664
      %v1666 = vpop.xlane.xlu0 %1665
      %v1667 = vsel %vm1663, %v1632, 0.0
      %1668 = vadd.xlane.f32.xlu0 %v1667
      %v1669 = vpop.xlane.xlu0 %1668
      %v1670 = vsel %vm1663, %v1633, 0.0
      %1671 = vadd.xlane.f32.xlu0 %v1670
      %v1672 = vpop.xlane.xlu0 %1671
      %v1673 = vsel %vm1663, %v1634, 0.0
      %1674 = vadd.xlane.f32.xlu0 %v1673
      %v1675 = vpop.xlane.xlu0 %1674
      %v1676 = vsel %vm1663, %v1635, 0.0
      %1677 = vadd.xlane.f32.xlu0 %v1676
      %v1678 = vpop.xlane.xlu0 %1677
      %v1679 = vsel %vm1663, %v1636, 0.0
      %1680 = vadd.xlane.f32.xlu0 %v1679
      %v1681 = vpop.xlane.xlu0 %1680
      %v1682 = vsel %vm1663, %v1637, 0.0
      %1683 = vadd.xlane.f32.xlu0 %v1682
      %v1684 = vpop.xlane.xlu0 %1683
      %v1685 = vsel %vm1663, %v1638, 0.0
      %1686 = vadd.xlane.f32.xlu0 %v1685
      %v1687 = vpop.xlane.xlu0 %1686
      %v1688 = vsel %vm1663, %v1639, 0.0
      %1689 = vadd.xlane.f32.xlu0 %v1688
      %v1690 = vpop.xlane.xlu0 %1689
      %v1691 = vsel %vm1663, %v1640, 0.0
      %1692 = vadd.xlane.f32.xlu0 %v1691
      %v1693 = vpop.xlane.xlu0 %1692
      %v1694 = vsel %vm1663, %v1641, 0.0
      %1695 = vadd.xlane.f32.xlu0 %v1694
      %v1696 = vpop.xlane.xlu0 %1695
      %v1697 = vsel %vm1663, %v1642, 0.0
      %1698 = vadd.xlane.f32.xlu0 %v1697
      %v1699 = vpop.xlane.xlu0 %1698
      %v1700 = vsel %vm1663, %v1643, 0.0
      %1701 = vadd.xlane.f32.xlu0 %v1700
      %v1702 = vpop.xlane.xlu0 %1701
      %v1703 = vsel %vm1663, %v1644, 0.0
      %1704 = vadd.xlane.f32.xlu0 %v1703
      %v1705 = vpop.xlane.xlu0 %1704
      %v1706 = vsel %vm1663, %v1645, 0.0
      %1707 = vadd.xlane.f32.xlu0 %v1706
      %v1708 = vpop.xlane.xlu0 %1707
      %v1709 = vsel %vm1663, %v1646, 0.0
      %1710 = vadd.xlane.f32.xlu0 %v1709
      %v1711 = vpop.xlane.xlu0 %1710
      %v1712 = vsel %vm1663, %v1647, 0.0
      %1713 = vadd.xlane.f32.xlu0 %v1712
      %v1714 = vpop.xlane.xlu0 %1713
      %v1715 = vsel %vm1663, %v1648, 0.0
      %1716 = vadd.xlane.f32.xlu0 %v1715
      %v1717 = vpop.xlane.xlu0 %1716
      %v1718 = vsel %vm1663, %v1649, 0.0
      %1719 = vadd.xlane.f32.xlu0 %v1718
      %v1720 = vpop.xlane.xlu0 %1719
      %v1721 = vsel %vm1663, %v1650, 0.0
      %1722 = vadd.xlane.f32.xlu0 %v1721
      %v1723 = vpop.xlane.xlu0 %1722
      %v1724 = vsel %vm1663, %v1651, 0.0
      %1725 = vadd.xlane.f32.xlu0 %v1724
      %v1726 = vpop.xlane.xlu0 %1725
      %v1727 = vsel %vm1663, %v1652, 0.0
      %1728 = vadd.xlane.f32.xlu0 %v1727
      %v1729 = vpop.xlane.xlu0 %1728
      %v1730 = vsel %vm1663, %v1653, 0.0
      %1731 = vadd.xlane.f32.xlu0 %v1730
      %v1732 = vpop.xlane.xlu0 %1731
      %v1733 = vsel %vm1663, %v1654, 0.0
      %1734 = vadd.xlane.f32.xlu0 %v1733
      %v1735 = vpop.xlane.xlu0 %1734
      %v1736 = vsel %vm1663, %v1655, 0.0
      %1737 = vadd.xlane.f32.xlu0 %v1736
      %v1738 = vpop.xlane.xlu0 %1737
      %v1739 = vsel %vm1663, %v1656, 0.0
      %1740 = vadd.xlane.f32.xlu0 %v1739
      %v1741 = vpop.xlane.xlu0 %1740
      %v1742 = vsel %vm1663, %v1657, 0.0
      %1743 = vadd.xlane.f32.xlu0 %v1742
      %v1744 = vpop.xlane.xlu0 %1743
      %v1745 = vsel %vm1663, %v1658, 0.0
      %1746 = vadd.xlane.f32.xlu0 %v1745
      %v1747 = vpop.xlane.xlu0 %1746
      %v1748 = vsel %vm1663, %v1659, 0.0
      %1749 = vadd.xlane.f32.xlu0 %v1748
      %v1750 = vpop.xlane.xlu0 %1749
      %v1751 = vsel %vm1663, %v1660, 0.0
      %1752 = vadd.xlane.f32.xlu0 %v1751
      %v1753 = vpop.xlane.xlu0 %1752
      %v1754 = vsel %vm1663, %v1661, 0.0
      %1755 = vadd.xlane.f32.xlu0 %v1754
      %v1756 = vpop.xlane.xlu0 %1755
      %v1757 = vsel %vm1663, %v1662, 0.0
      %1758 = vadd.xlane.f32.xlu0 %v1757
      %v1759 = vpop.xlane.xlu0 %1758
      %v1760 = vld [vmem:[#allocation2] sm:$0x1]
      %v1762 = vlaneseq
      %v1763 = vshrl.u32 %v1762, 7
      %v1764 = vsub.s32 0, %v1763
      %v1765 = vrot.slane %v1760, %v1764
      %v1767 = vadd.f32 %v1666, %v1765
      %v1768 = vadd.f32 %v1669, %v1765
      %v1769 = vadd.f32 %v1672, %v1765
      %v1770 = vadd.f32 %v1675, %v1765
      %v1771 = vadd.f32 %v1678, %v1765
      %v1772 = vadd.f32 %v1681, %v1765
      %v1773 = vadd.f32 %v1684, %v1765
      %v1774 = vadd.f32 %v1687, %v1765
      %v1775 = vadd.f32 %v1690, %v1765
      %v1776 = vadd.f32 %v1693, %v1765
      %v1777 = vadd.f32 %v1696, %v1765
      %v1778 = vadd.f32 %v1699, %v1765
      %v1779 = vadd.f32 %v1702, %v1765
      %v1780 = vadd.f32 %v1705, %v1765
      %v1781 = vadd.f32 %v1708, %v1765
      %v1782 = vadd.f32 %v1711, %v1765
      %v1783 = vadd.f32 %v1714, %v1765
      %v1784 = vadd.f32 %v1717, %v1765
      %v1785 = vadd.f32 %v1720, %v1765
      %v1786 = vadd.f32 %v1723, %v1765
      %v1787 = vadd.f32 %v1726, %v1765
      %v1788 = vadd.f32 %v1729, %v1765
      %v1789 = vadd.f32 %v1732, %v1765
      %v1790 = vadd.f32 %v1735, %v1765
      %v1791 = vadd.f32 %v1738, %v1765
      %v1792 = vadd.f32 %v1741, %v1765
      %v1793 = vadd.f32 %v1744, %v1765
      %v1794 = vadd.f32 %v1747, %v1765
      %v1795 = vadd.f32 %v1750, %v1765
      %v1796 = vadd.f32 %v1753, %v1765
      %v1797 = vadd.f32 %v1756, %v1765
      %v1798 = vadd.f32 %v1759, %v1765
      %1800 = vset.pattern.permute.xlu0 0
      %1801 = vperm.xlu0 %1800, %v1767
      %v1802 = vpop.permute.xlu0 %1801
      %1805 = vset.pattern.permute.xlu0 0
      %1806 = vperm.xlu0 %1805, %v1768
      %v1807 = vpop.permute.xlu0 %1806
      %1810 = vset.pattern.permute.xlu0 0
      %1811 = vperm.xlu0 %1810, %v1769
      %v1812 = vpop.permute.xlu0 %1811
      %1815 = vset.pattern.permute.xlu0 0
      %1816 = vperm.xlu0 %1815, %v1770
      %v1817 = vpop.permute.xlu0 %1816
      %1820 = vset.pattern.permute.xlu0 0
      %1821 = vperm.xlu0 %1820, %v1771
      %v1822 = vpop.permute.xlu0 %1821
      %1825 = vset.pattern.permute.xlu0 0
      %1826 = vperm.xlu0 %1825, %v1772
      %v1827 = vpop.permute.xlu0 %1826
      %1830 = vset.pattern.permute.xlu0 0
      %1831 = vperm.xlu0 %1830, %v1773
      %v1832 = vpop.permute.xlu0 %1831
      %1835 = vset.pattern.permute.xlu0 0
      %1836 = vperm.xlu0 %1835, %v1774
      %v1837 = vpop.permute.xlu0 %1836
      %1840 = vset.pattern.permute.xlu0 0
      %1841 = vperm.xlu0 %1840, %v1775
      %v1842 = vpop.permute.xlu0 %1841
      %1845 = vset.pattern.permute.xlu0 0
      %1846 = vperm.xlu0 %1845, %v1776
      %v1847 = vpop.permute.xlu0 %1846
      %1850 = vset.pattern.permute.xlu0 0
      %1851 = vperm.xlu0 %1850, %v1777
      %v1852 = vpop.permute.xlu0 %1851
      %1855 = vset.pattern.permute.xlu0 0
      %1856 = vperm.xlu0 %1855, %v1778
      %v1857 = vpop.permute.xlu0 %1856
      %1860 = vset.pattern.permute.xlu0 0
      %1861 = vperm.xlu0 %1860, %v1779
      %v1862 = vpop.permute.xlu0 %1861
      %1865 = vset.pattern.permute.xlu0 0
      %1866 = vperm.xlu0 %1865, %v1780
      %v1867 = vpop.permute.xlu0 %1866
      %1870 = vset.pattern.permute.xlu0 0
      %1871 = vperm.xlu0 %1870, %v1781
      %v1872 = vpop.permute.xlu0 %1871
      %1875 = vset.pattern.permute.xlu0 0
      %1876 = vperm.xlu0 %1875, %v1782
      %v1877 = vpop.permute.xlu0 %1876
      %1880 = vset.pattern.permute.xlu0 0
      %1881 = vperm.xlu0 %1880, %v1783
      %v1882 = vpop.permute.xlu0 %1881
      %1885 = vset.pattern.permute.xlu0 0
      %1886 = vperm.xlu0 %1885, %v1784
      %v1887 = vpop.permute.xlu0 %1886
      %1890 = vset.pattern.permute.xlu0 0
      %1891 = vperm.xlu0 %1890, %v1785
      %v1892 = vpop.permute.xlu0 %1891
      %1895 = vset.pattern.permute.xlu0 0
      %1896 = vperm.xlu0 %1895, %v1786
      %v1897 = vpop.permute.xlu0 %1896
      %1900 = vset.pattern.permute.xlu0 0
      %1901 = vperm.xlu0 %1900, %v1787
      %v1902 = vpop.permute.xlu0 %1901
      %1905 = vset.pattern.permute.xlu0 0
      %1906 = vperm.xlu0 %1905, %v1788
      %v1907 = vpop.permute.xlu0 %1906
      %1910 = vset.pattern.permute.xlu0 0
      %1911 = vperm.xlu0 %1910, %v1789
      %v1912 = vpop.permute.xlu0 %1911
      %1915 = vset.pattern.permute.xlu0 0
      %1916 = vperm.xlu0 %1915, %v1790
      %v1917 = vpop.permute.xlu0 %1916
      %1920 = vset.pattern.permute.xlu0 0
      %1921 = vperm.xlu0 %1920, %v1791
      %v1922 = vpop.permute.xlu0 %1921
      %1925 = vset.pattern.permute.xlu0 0
      %1926 = vperm.xlu0 %1925, %v1792
      %v1927 = vpop.permute.xlu0 %1926
      %1930 = vset.pattern.permute.xlu0 0
      %1931 = vperm.xlu0 %1930, %v1793
      %v1932 = vpop.permute.xlu0 %1931
      %1935 = vset.pattern.permute.xlu0 0
      %1936 = vperm.xlu0 %1935, %v1794
      %v1937 = vpop.permute.xlu0 %1936
      %1940 = vset.pattern.permute.xlu0 0
      %1941 = vperm.xlu0 %1940, %v1795
      %v1942 = vpop.permute.xlu0 %1941
      %1945 = vset.pattern.permute.xlu0 0
      %1946 = vperm.xlu0 %1945, %v1796
      %v1947 = vpop.permute.xlu0 %1946
      %1950 = vset.pattern.permute.xlu0 0
      %1951 = vperm.xlu0 %1950, %v1797
      %v1952 = vpop.permute.xlu0 %1951
      %1955 = vset.pattern.permute.xlu0 0
      %1956 = vperm.xlu0 %1955, %v1798
      %v1957 = vpop.permute.xlu0 %1956
      %v1959 = vmul.f32 %v1802, %v284
      %v1960 = vmul.f32 %v1807, %v285
      %v1961 = vmul.f32 %v1812, %v286
      %v1962 = vmul.f32 %v1817, %v287
      %v1963 = vmul.f32 %v1822, %v288
      %v1964 = vmul.f32 %v1827, %v289
      %v1965 = vmul.f32 %v1832, %v290
      %v1966 = vmul.f32 %v1837, %v291
      %v1967 = vmul.f32 %v1842, %v292
      %v1968 = vmul.f32 %v1847, %v293
      %v1969 = vmul.f32 %v1852, %v294
      %v1970 = vmul.f32 %v1857, %v295
      %v1971 = vmul.f32 %v1862, %v296
      %v1972 = vmul.f32 %v1867, %v297
      %v1973 = vmul.f32 %v1872, %v298
      %v1974 = vmul.f32 %v1877, %v299
      %v1975 = vmul.f32 %v1882, %v300
      %v1976 = vmul.f32 %v1887, %v301
      %v1977 = vmul.f32 %v1892, %v302
      %v1978 = vmul.f32 %v1897, %v303
      %v1979 = vmul.f32 %v1902, %v304
      %v1980 = vmul.f32 %v1907, %v305
      %v1981 = vmul.f32 %v1912, %v306
      %v1982 = vmul.f32 %v1917, %v307
      %v1983 = vmul.f32 %v1922, %v308
      %v1984 = vmul.f32 %v1927, %v309
      %v1985 = vmul.f32 %v1932, %v310
      %v1986 = vmul.f32 %v1937, %v311
      %v1987 = vmul.f32 %v1942, %v312
      %v1988 = vmul.f32 %v1947, %v313
      %v1989 = vmul.f32 %v1952, %v314
      %v1990 = vmul.f32 %v1957, %v315
      %1991 = vst.msk [vmem:[%s282] sm:$0xff] %vm317, %v1959
      %1992 = vst.msk [vmem:[%s282 + $0x8] sm:$0xff] %vm317, %v1960
      %1993 = vst.msk [vmem:[%s282 + $0x10] sm:$0xff] %vm317, %v1961
      %1994 = vst.msk [vmem:[%s282 + $0x18] sm:$0xff] %vm317, %v1962
      %1995 = vst.msk [vmem:[%s282 + $0x20] sm:$0xff] %vm317, %v1963
      %1996 = vst.msk [vmem:[%s282 + $0x28] sm:$0xff] %vm317, %v1964
      %1997 = vst.msk [vmem:[%s282 + $0x30] sm:$0xff] %vm317, %v1965
      %1998 = vst.msk [vmem:[%s282 + $0x38] sm:$0xff] %vm317, %v1966
      %1999 = vst.msk [vmem:[%s282 + $0x40] sm:$0xff] %vm317, %v1967
      %2000 = vst.msk [vmem:[%s282 + $0x48] sm:$0xff] %vm317, %v1968
      %2001 = vst.msk [vmem:[%s282 + $0x50] sm:$0xff] %vm317, %v1969
      %2002 = vst.msk [vmem:[%s282 + $0x58] sm:$0xff] %vm317, %v1970
      %2003 = vst.msk [vmem:[%s282 + $0x60] sm:$0xff] %vm317, %v1971
      %2004 = vst.msk [vmem:[%s282 + $0x68] sm:$0xff] %vm317, %v1972
      %2005 = vst.msk [vmem:[%s282 + $0x70] sm:$0xff] %vm317, %v1973
      %2006 = vst.msk [vmem:[%s282 + $0x78] sm:$0xff] %vm317, %v1974
      %2007 = vst.msk [vmem:[%s282 + $0x80] sm:$0xff] %vm317, %v1975
      %2008 = vst.msk [vmem:[%s282 + $0x88] sm:$0xff] %vm317, %v1976
      %2009 = vst.msk [vmem:[%s282 + $0x90] sm:$0xff] %vm317, %v1977
      %2010 = vst.msk [vmem:[%s282 + $0x98] sm:$0xff] %vm317, %v1978
      %2011 = vst.msk [vmem:[%s282 + $0xa0] sm:$0xff] %vm317, %v1979
      %2012 = vst.msk [vmem:[%s282 + $0xa8] sm:$0xff] %vm317, %v1980
      %2013 = vst.msk [vmem:[%s282 + $0xb0] sm:$0xff] %vm317, %v1981
      %2014 = vst.msk [vmem:[%s282 + $0xb8] sm:$0xff] %vm317, %v1982
      %2015 = vst.msk [vmem:[%s282 + $0xc0] sm:$0xff] %vm317, %v1983
      %2016 = vst.msk [vmem:[%s282 + $0xc8] sm:$0xff] %vm317, %v1984
      %2017 = vst.msk [vmem:[%s282 + $0xd0] sm:$0xff] %vm317, %v1985
      %2018 = vst.msk [vmem:[%s282 + $0xd8] sm:$0xff] %vm317, %v1986
      %2019 = vst.msk [vmem:[%s282 + $0xe0] sm:$0xff] %vm317, %v1987
      %2020 = vst.msk [vmem:[%s282 + $0xe8] sm:$0xff] %vm317, %v1988
      %2021 = vst.msk [vmem:[%s282 + $0xf0] sm:$0xff] %vm317, %v1989
      %2022 = vst.msk [vmem:[%s282 + $0xf8] sm:$0xff] %vm317, %v1990
      %s2023 = smul.u32 32, %s20
      %p2024 = scmp.lt.s32.totalorder %s2023, 63
      %s2025 = scalar_select %p2024, %s2023, 63
      %s2026 = smul.addr %s2025, 8
      %s2027 = scalar_lea.vmem %s7, %s2026
      // Predicated region
      $region49: #{upblock_attention_forward.5} parent=47 // pred_check
        %p2028 = pneg %p190
      $region50: #{upblock_attention_forward.5} parent=47 // pred_check_branch
        %2030 = sbr.rel (%p2028) target = $region52
      $region51: #{upblock_attention_forward.5} parent=47 // pred_region
        %s2031 = smul.u32 32, %s20
      $region52: #{upblock_attention_forward.5} parent=47 // pred_fallthru
        _
    $region48: #{upblock_attention_forward.5} parent=5 // pred_fallthru
      _
    %p2032 = scmp.le.s32.totalorder 2, %s15
    // Predicated region
    $region53: #{upblock_attention_forward.5} parent=5 // pred_check
      %p2033 = pneg %p2032
    $region54: #{upblock_attention_forward.5} parent=5 // pred_check_branch
      %2035 = sbr.rel (%p2033) target = $region56
    $region55: #{upblock_attention_forward.5} parent=5 // pred_region
      %s2036 = ssub.s32 %s15, 2
      // Predicated region
      $region57: #{upblock_attention_forward.5} parent=55 // pred_check
        %p2037 = pneg %p196
      $region58: #{upblock_attention_forward.5} parent=55 // pred_check_branch
        %2039 = sbr.rel (%p2037) target = $region60
      $region59: #{upblock_attention_forward.5} parent=55 // pred_region
        %s2040 = smul.u32 32, %s21
        %p2041 = scmp.lt.s32.totalorder %s2040, 63
        %s2042 = scalar_select %p2041, %s2040, 63
        %s2043 = smul.addr %s2042, 8
        %s2044 = scalar_lea.vmem %s7, %s2043
      $region60: #{upblock_attention_forward.5} parent=55 // pred_fallthru
        _
    $region56: #{upblock_attention_forward.5} parent=5 // pred_fallthru
      _
  $region6: #{upblock_attention_forward.5} parent=0 // loop_footer
    %s19 = sadd.s32 1, %s15
  $region7: #{upblock_attention_forward.5} parent=0 // loop_footer_branch
    %14 = sbr.rel target = $region3
  $region8: #{upblock_attention_forward.5} parent=0 // loop_exit
    _

// kernel: upblock_attention_forward.7
$region0: #{upblock_attention_forward.7}
  #allocation0 [shape = 'u32[]', space=smem, size = 0x4, offset = 0x4, fixed_abs, tag = 'smem constant byte address 0x4 - core index']
  #allocation1 [shape = 'u32[144,128]{1,0:T(1,128)}', space=vmem, size = 0x12000, scoped, tag = 'internal scratch']
  %s0 = inlined_call_operand.vmem [shape: f32[2,256,128], index: 0, kind: input, shape index: {}]
  %s1 = inlined_call_operand.vmem [shape: f32[2,2,128], index: 1, kind: input, shape index: {}]
  %s2 = inlined_call_operand.vmem [shape: f32[1,128], index: 2, kind: input, shape index: {}]
  %s3 = inlined_call_operand.vmem [shape: f32[1,128], index: 3, kind: input, shape index: {}]
  %s4 = inlined_call_operand.vmem [shape: f32[2,256,128], index: 4, kind: output, shape index: {}]
  %s5 = sld [smem:[#allocation0]]
  $region49: #{upblock_attention_forward.7} parent=0
    _
  %s7 = ssub.s32 1, %s5
  %s8 = scalar_select 0, %s7, %s5
  loop: start=0, step=1, limit=4
  $region2: #{upblock_attention_forward.7} parent=0 // loop_pre_header
    _
  $region3: #{upblock_attention_forward.7} parent=0 // loop_header
    %s10 = sphi 0, %s14
    %p11 = scmp.ge.s32.totalorder %s10, 4
    %s20 = sphi 0, %s22
    %s23 = sphi 0, %s20
    %s24 = sphi 0, %s23
    %s40 = sphi 0, %s24
    %s44 = sphi 0, %s44
    %s46 = sphi 0, %s44
    %s47 = sphi 0, %s46
    %s61 = sphi 0, %s47
    %s65 = sphi 0, %s65
    %s67 = sphi 0, %s65
    %s68 = sphi 0, %s67
    %s82 = sphi 0, %s68
    %s86 = sphi 0, %s86
    %s88 = sphi 0, %s86
    %s89 = sphi 0, %s88
    %s103 = sphi 0, %s89
    %s109 = sphi 0, %s111
    %s112 = sphi 0, %s109
    %s113 = sphi 0, %s112
    %s129 = sphi 0, %s113
  $region4: #{upblock_attention_forward.7} parent=0 // loop_header_branch
    %13 = sbr.rel (%p11) target = $region8
  $region5: #{upblock_attention_forward.7} parent=0 // loop_body
    %s15 = ssub.s32 %s10, 1
    %s16 = ssub.s32 %s10, 2
    %s17 = sadd.s32 %s10, 1
    %s18 = ssub.s32 %s10, %s17
    %p19 = scmp.eq.s32.totalorder %s18, 0
    %s21 = sadd.s32 %s20, 1
    %s22 = scalar_select %p19, %s20, %s21
    %p25 = pneg %p19
    %p26 = scmp.eq.s32.totalorder %s10, 1
    %p27 = por %p25, %p26
    %p28 = scmp.ne.s32.totalorder %s20, %s23
    %p29 = scmp.eq.s32.totalorder %s10, 0
    %p30 = por %p28, %p29
    %p31 = scmp.ne.s32.totalorder %s20, %s23
    %p32 = scmp.eq.s32.totalorder %s15, 1
    %p33 = por %p31, %p32
    %p34 = scmp.ne.s32.totalorder %s23, %s24
    %p35 = scmp.eq.s32.totalorder %s15, 0
    %p36 = por %p34, %p35
    %p37 = scmp.ne.s32.totalorder %s23, %s24
    %p38 = scmp.eq.s32.totalorder %s16, 1
    %p39 = por %p37, %p38
    %p41 = scmp.ne.s32.totalorder %s24, %s40
    %p42 = scmp.eq.s32.totalorder %s16, 0
    %p43 = por %p41, %p42
    %s45 = sadd.s32 %s44, 1
    %p48 = scmp.eq.s32.totalorder %s10, 1
    %p49 = scmp.ne.s32.totalorder %s44, %s46
    %p50 = scmp.eq.s32.totalorder %s10, 0
    %p51 = por %p49, %p50
    %p52 = scmp.ne.s32.totalorder %s44, %s46
    %p53 = scmp.eq.s32.totalorder %s15, 1
    %p54 = por %p52, %p53
    %p55 = scmp.ne.s32.totalorder %s46, %s47
    %p56 = scmp.eq.s32.totalorder %s15, 0
    %p57 = por %p55, %p56
    %p58 = scmp.ne.s32.totalorder %s46, %s47
    %p59 = scmp.eq.s32.totalorder %s16, 1
    %p60 = por %p58, %p59
    %p62 = scmp.ne.s32.totalorder %s47, %s61
    %p63 = scmp.eq.s32.totalorder %s16, 0
    %p64 = por %p62, %p63
    %s66 = sadd.s32 %s65, 1
    %p69 = scmp.eq.s32.totalorder %s10, 1
    %p70 = scmp.ne.s32.totalorder %s65, %s67
    %p71 = scmp.eq.s32.totalorder %s10, 0
    %p72 = por %p70, %p71
    %p73 = scmp.ne.s32.totalorder %s65, %s67
    %p74 = scmp.eq.s32.totalorder %s15, 1
    %p75 = por %p73, %p74
    %p76 = scmp.ne.s32.totalorder %s67, %s68
    %p77 = scmp.eq.s32.totalorder %s15, 0
    %p78 = por %p76, %p77
    %p79 = scmp.ne.s32.totalorder %s67, %s68
    %p80 = scmp.eq.s32.totalorder %s16, 1
    %p81 = por %p79, %p80
    %p83 = scmp.ne.s32.totalorder %s68, %s82
    %p84 = scmp.eq.s32.totalorder %s16, 0
    %p85 = por %p83, %p84
    %s87 = sadd.s32 %s86, 1
    %p90 = scmp.eq.s32.totalorder %s10, 1
    %p91 = scmp.ne.s32.totalorder %s86, %s88
    %p92 = scmp.eq.s32.totalorder %s10, 0
    %p93 = por %p91, %p92
    %p94 = scmp.ne.s32.totalorder %s86, %s88
    %p95 = scmp.eq.s32.totalorder %s15, 1
    %p96 = por %p94, %p95
    %p97 = scmp.ne.s32.totalorder %s88, %s89
    %p98 = scmp.eq.s32.totalorder %s15, 0
    %p99 = por %p97, %p98
    %p100 = scmp.ne.s32.totalorder %s88, %s89
    %p101 = scmp.eq.s32.totalorder %s16, 1
    %p102 = por %p100, %p101
    %p104 = scmp.ne.s32.totalorder %s89, %s103
    %p105 = scmp.eq.s32.totalorder %s16, 0
    %p106 = por %p104, %p105
    %s107 = ssub.s32 %s10, %s17
    %p108 = scmp.eq.s32.totalorder %s107, 0
    %s110 = sadd.s32 %s109, 1
    %s111 = scalar_select %p108, %s109, %s110
    %p114 = pneg %p108
    %p115 = scmp.eq.s32.totalorder %s10, 1
    %p116 = por %p114, %p115
    %p117 = scmp.ne.s32.totalorder %s109, %s112
    %p118 = scmp.eq.s32.totalorder %s10, 0
    %p119 = por %p117, %p118
    %p120 = scmp.ne.s32.totalorder %s109, %s112
    %p121 = scmp.eq.s32.totalorder %s15, 1
    %p122 = por %p120, %p121
    %p123 = scmp.ne.s32.totalorder %s112, %s113
    %p124 = scmp.eq.s32.totalorder %s15, 0
    %p125 = por %p123, %p124
    %p126 = scmp.ne.s32.totalorder %s112, %s113
    %p127 = scmp.eq.s32.totalorder %s16, 1
    %p128 = por %p126, %p127
    %p130 = scmp.ne.s32.totalorder %s113, %s129
    %p131 = scmp.eq.s32.totalorder %s16, 0
    %p132 = por %p130, %p131
    %p133 = scmp.le.s32.totalorder 1, %s10
    %p134 = scmp.lt.s32.totalorder %s10, 3
    %p135 = pnand %p133, %p134
    %p136 = pneg %p135
    // Predicated region
    $region9: #{upblock_attention_forward.7} parent=5 // pred_check
      _
    $region10: #{upblock_attention_forward.7} parent=5 // pred_check_branch
      %138 = sbr.rel (%p135) target = $region12
    $region11: #{upblock_attention_forward.7} parent=5 // pred_region
      %s139 = ssub.s32 %s10, 1
      // Predicated region
      $region13: #{upblock_attention_forward.7} parent=11 // pred_check
        %p140 = pneg %p57
      $region14: #{upblock_attention_forward.7} parent=11 // pred_check_branch
        %142 = sbr.rel (%p140) target = $region16
      $region15: #{upblock_attention_forward.7} parent=11 // pred_region
        _
      $region16: #{upblock_attention_forward.7} parent=11 // pred_fallthru
        _
      // Predicated region
      $region17: #{upblock_attention_forward.7} parent=11 // pred_check
        %p143 = pneg %p78
      $region18: #{upblock_attention_forward.7} parent=11 // pred_check_branch
        %145 = sbr.rel (%p143) target = $region20
      $region19: #{upblock_attention_forward.7} parent=11 // pred_region
        _
      $region20: #{upblock_attention_forward.7} parent=11 // pred_fallthru
        _
      // Predicated region
      $region21: #{upblock_attention_forward.7} parent=11 // pred_check
        %p146 = pneg %p99
      $region22: #{upblock_attention_forward.7} parent=11 // pred_check_branch
        %148 = sbr.rel (%p146) target = $region24
      $region23: #{upblock_attention_forward.7} parent=11 // pred_region
        _
      $region24: #{upblock_attention_forward.7} parent=11 // pred_fallthru
        _
    $region12: #{upblock_attention_forward.7} parent=5 // pred_fallthru
      _
    %p149 = scmp.lt.s32.totalorder %s10, 2
    // Predicated region
    $region25: #{upblock_attention_forward.7} parent=5 // pred_check
      %p150 = pneg %p149
    $region26: #{upblock_attention_forward.7} parent=5 // pred_check_branch
      %152 = sbr.rel (%p150) target = $region28
    $region27: #{upblock_attention_forward.7} parent=5 // pred_region
      // Predicated region
      $region29: #{upblock_attention_forward.7} parent=27 // pred_check
        %p153 = pneg %p30
      $region30: #{upblock_attention_forward.7} parent=27 // pred_check_branch
        %155 = sbr.rel (%p153) target = $region32
      $region31: #{upblock_attention_forward.7} parent=27 // pred_region
        %p156 = scmp.lt.s32.totalorder %s10, 1
        %s157 = scalar_select %p156, %s10, 1
        %s158 = smul.addr %s157, 32
        %s159 = smul.addr %s158, 8
        %s160 = scalar_lea.vmem %s0, %s159
      $region32: #{upblock_attention_forward.7} parent=27 // pred_fallthru
        _
    $region28: #{upblock_attention_forward.7} parent=5 // pred_fallthru
      _
    %p161 = scmp.le.s32.totalorder 1, %s10
    %p162 = scmp.lt.s32.totalorder %s10, 3
    %p163 = pnand %p161, %p162
    %p164 = pneg %p163
    // Predicated region
    $region33: #{upblock_attention_forward.7} parent=5 // pred_check
      _
    $region34: #{upblock_attention_forward.7} parent=5 // pred_check_branch
      %166 = sbr.rel (%p163) target = $region36
    $region35: #{upblock_attention_forward.7} parent=5 // pred_region
      %s167 = ssub.s32 %s10, 1
      %p168 = scmp.lt.s32.totalorder %s15, 1
      %s169 = scalar_select %p168, %s15, 1
      %s170 = smul.addr %s169, 32
      %s171 = smul.addr %s170, 8
      %s172 = scalar_lea.vmem %s0, %s171
      %p173 = pneg %p36
      %p174 = pneg %p33
      %p175 = pneg %p57
      %p176 = pneg %p54
      %p177 = pneg %p78
      %p178 = pneg %p75
      %p179 = pneg %p99
      %p180 = pneg %p96
      %p181 = pneg %p125
      %p182 = pneg %p122
      %p183 = scmp.lt.s32.totalorder %s15, 1
      %s184 = scalar_select %p183, %s15, 1
      %s185 = smul.addr %s184, 32
      %s186 = smul.addr %s185, 8
      %s187 = scalar_lea.vmem %s4, %s186
      %p188 = scmp.lt.s32.totalorder %s15, 1
      %s189 = scalar_select %p188, %s15, 1
      %s190 = smul.addr %s189, 32
      %s191 = smul.addr %s190, 8
      %s192 = scalar_lea.vmem %s0, %s191
      %p193 = scmp.lt.s32.totalorder %s15, 1
      %s194 = scalar_select %p193, %s15, 1
      %s195 = smul.addr %s194, 32
      %s196 = smul.addr %s195, 8
      %s197 = scalar_lea.vmem %s4, %s196
      %v198 = vld [vmem:[%s1] sm:$0x3]
      %v199 = vld [vmem:[%s1 + $0x2] sm:$0x3]
      %vm200 = vcmask 1041408
      %v201 = vsel %vm200, %v198, 0.0
      %v202 = vsel %vm200, %v199, 0.0
      %v203 = vadd.f32 %v201, %v202
      %v204 = vmul.f32 %v203, 0.001953125
      %v205 = vmul.f32 %v204, %v204
      %v207 = vrot.slane %v205, 7
      %v209 = vsub.f32 %v204, %v207
      %v210 = vmax.f32 %v209, 0.0
      %v211 = vld [vmem:[%s2] sm:$0x1]
      %v212 = vadd.f32 %v210, 1e-05
      %v213 = vrsqrt.pop %v212
      %v216 = vunpack.c.l.s4 1966171168
      %v217 = vunpack.c.0.s8 %v216
      %v218 = vlaneseq
      %v219 = vshrl.u32 %v218, 7
      %v220 = vsub.s32 %v217, %v219
      %v221 = vrot.slane %v213, %v220
      %v222 = vcombine.high %v221, %v221
      %v224 = vunpack.c.l.s4 1966171168
      %v225 = vunpack.c.0.s8 %v224
      %v226 = vlaneseq
      %v227 = vshrl.u32 %v226, 7
      %v228 = vsub.s32 %v225, %v227
      %v229 = vrot.slane %v222, %v228
      %v231 = vmul.f32 %v211, %v229
      %v232 = vld [vmem:[%s3] sm:$0x1]
      %v233 = vmul.f32 %v204, %v231
      %v234 = vsub.f32 %v232, %v233
      %v235 = vld [vmem:[%s192] sm:$0xff]
      %v236 = vld [vmem:[%s192 + $0x8] sm:$0xff]
      %v237 = vld [vmem:[%s192 + $0x10] sm:$0xff]
      %v238 = vld [vmem:[%s192 + $0x18] sm:$0xff]
      %v239 = vld [vmem:[%s192 + $0x20] sm:$0xff]
      %v240 = vld [vmem:[%s192 + $0x28] sm:$0xff]
      %v241 = vld [vmem:[%s192 + $0x30] sm:$0xff]
      %v242 = vld [vmem:[%s192 + $0x38] sm:$0xff]
      %v243 = vld [vmem:[%s192 + $0x40] sm:$0xff]
      %v244 = vld [vmem:[%s192 + $0x48] sm:$0xff]
      %v245 = vld [vmem:[%s192 + $0x50] sm:$0xff]
      %v246 = vld [vmem:[%s192 + $0x58] sm:$0xff]
      %v247 = vld [vmem:[%s192 + $0x60] sm:$0xff]
      %v248 = vld [vmem:[%s192 + $0x68] sm:$0xff]
      %v249 = vld [vmem:[%s192 + $0x70] sm:$0xff]
      %v250 = vld [vmem:[%s192 + $0x78] sm:$0xff]
      %v251 = vld [vmem:[%s192 + $0x80] sm:$0xff]
      %v252 = vld [vmem:[%s192 + $0x88] sm:$0xff]
      %v253 = vld [vmem:[%s192 + $0x90] sm:$0xff]
      %v254 = vld [vmem:[%s192 + $0x98] sm:$0xff]
      %v255 = vld [vmem:[%s192 + $0xa0] sm:$0xff]
      %v256 = vld [vmem:[%s192 + $0xa8] sm:$0xff]
      %v257 = vld [vmem:[%s192 + $0xb0] sm:$0xff]
      %v258 = vld [vmem:[%s192 + $0xb8] sm:$0xff]
      %v259 = vld [vmem:[%s192 + $0xc0] sm:$0xff]
      %v260 = vld [vmem:[%s192 + $0xc8] sm:$0xff]
      %v261 = vld [vmem:[%s192 + $0xd0] sm:$0xff]
      %v262 = vld [vmem:[%s192 + $0xd8] sm:$0xff]
      %v263 = vld [vmem:[%s192 + $0xe0] sm:$0xff]
      %v264 = vld [vmem:[%s192 + $0xe8] sm:$0xff]
      %v265 = vld [vmem:[%s192 + $0xf0] sm:$0xff]
      %v266 = vld [vmem:[%s192 + $0xf8] sm:$0xff]
      %v268 = vlaneseq
      %v269 = vshrl.u32 %v268, 7
      %v270 = vsub.s32 0, %v269
      %v271 = vrot.slane %v231, %v270
      %v273 = vmul.f32 %v235, %v271
      %v274 = vmul.f32 %v236, %v271
      %v275 = vmul.f32 %v237, %v271
      %v276 = vmul.f32 %v238, %v271
      %v277 = vmul.f32 %v239, %v271
      %v278 = vmul.f32 %v240, %v271
      %v279 = vmul.f32 %v241, %v271
      %v280 = vmul.f32 %v242, %v271
      %v281 = vmul.f32 %v243, %v271
      %v282 = vmul.f32 %v244, %v271
      %v283 = vmul.f32 %v245, %v271
      %v284 = vmul.f32 %v246, %v271
      %v285 = vmul.f32 %v247, %v271
      %v286 = vmul.f32 %v248, %v271
      %v287 = vmul.f32 %v249, %v271
      %v288 = vmul.f32 %v250, %v271
      %v289 = vmul.f32 %v251, %v271
      %v290 = vmul.f32 %v252, %v271
      %v291 = vmul.f32 %v253, %v271
      %v292 = vmul.f32 %v254, %v271
      %v293 = vmul.f32 %v255, %v271
      %v294 = vmul.f32 %v256, %v271
      %v295 = vmul.f32 %v257, %v271
      %v296 = vmul.f32 %v258, %v271
      %v297 = vmul.f32 %v259, %v271
      %v298 = vmul.f32 %v260, %v271
      %v299 = vmul.f32 %v261, %v271
      %v300 = vmul.f32 %v262, %v271
      %v301 = vmul.f32 %v263, %v271
      %v302 = vmul.f32 %v264, %v271
      %v303 = vmul.f32 %v265, %v271
      %v304 = vmul.f32 %v266, %v271
      %v306 = vlaneseq
      %v307 = vshrl.u32 %v306, 7
      %v308 = vsub.s32 0, %v307
      %v309 = vrot.slane %v234, %v308
      %v311 = vadd.f32 %v273, %v309
      %v312 = vadd.f32 %v274, %v309
      %v313 = vadd.f32 %v275, %v309
      %v314 = vadd.f32 %v276, %v309
      %v315 = vadd.f32 %v277, %v309
      %v316 = vadd.f32 %v278, %v309
      %v317 = vadd.f32 %v279, %v309
      %v318 = vadd.f32 %v280, %v309
      %v319 = vadd.f32 %v281, %v309
      %v320 = vadd.f32 %v282, %v309
      %v321 = vadd.f32 %v283, %v309
      %v322 = vadd.f32 %v284, %v309
      %v323 = vadd.f32 %v285, %v309
      %v324 = vadd.f32 %v286, %v309
      %v325 = vadd.f32 %v287, %v309
      %v326 = vadd.f32 %v288, %v309
      %v327 = vadd.f32 %v289, %v309
      %v328 = vadd.f32 %v290, %v309
      %v329 = vadd.f32 %v291, %v309
      %v330 = vadd.f32 %v292, %v309
      %v331 = vadd.f32 %v293, %v309
      %v332 = vadd.f32 %v294, %v309
      %v333 = vadd.f32 %v295, %v309
      %v334 = vadd.f32 %v296, %v309
      %v335 = vadd.f32 %v297, %v309
      %v336 = vadd.f32 %v298, %v309
      %v337 = vadd.f32 %v299, %v309
      %v338 = vadd.f32 %v300, %v309
      %v339 = vadd.f32 %v301, %v309
      %v340 = vadd.f32 %v302, %v309
      %v341 = vadd.f32 %v303, %v309
      %v342 = vadd.f32 %v304, %v309
      %v343 = vmax.f32 %v311, 0.0
      %v344 = vmax.f32 %v312, 0.0
      %v345 = vmax.f32 %v313, 0.0
      %v346 = vmax.f32 %v314, 0.0
      %v347 = vmax.f32 %v315, 0.0
      %v348 = vmax.f32 %v316, 0.0
      %v349 = vmax.f32 %v317, 0.0
      %v350 = vmax.f32 %v318, 0.0
      %v351 = vmax.f32 %v319, 0.0
      %v352 = vmax.f32 %v320, 0.0
      %v353 = vmax.f32 %v321, 0.0
      %v354 = vmax.f32 %v322, 0.0
      %v355 = vmax.f32 %v323, 0.0
      %v356 = vmax.f32 %v324, 0.0
      %v357 = vmax.f32 %v325, 0.0
      %v358 = vmax.f32 %v326, 0.0
      %v359 = vmax.f32 %v327, 0.0
      %v360 = vmax.f32 %v328, 0.0
      %v361 = vmax.f32 %v329, 0.0
      %v362 = vmax.f32 %v330, 0.0
      %v363 = vmax.f32 %v331, 0.0
      %v364 = vmax.f32 %v332, 0.0
      %v365 = vmax.f32 %v333, 0.0
      %v366 = vmax.f32 %v334, 0.0
      %v367 = vmax.f32 %v335, 0.0
      %v368 = vmax.f32 %v336, 0.0
      %v369 = vmax.f32 %v337, 0.0
      %v370 = vmax.f32 %v338, 0.0
      %v371 = vmax.f32 %v339, 0.0
      %v372 = vmax.f32 %v340, 0.0
      %v373 = vmax.f32 %v341, 0.0
      %v374 = vmax.f32 %v342, 0.0
      %375 = vst [vmem:[%s197] sm:$0xff] %v343
      %376 = vst [vmem:[%s197 + $0x8] sm:$0xff] %v344
      %377 = vst [vmem:[%s197 + $0x10] sm:$0xff] %v345
      %378 = vst [vmem:[%s197 + $0x18] sm:$0xff] %v346
      %379 = vst [vmem:[%s197 + $0x20] sm:$0xff] %v347
      %380 = vst [vmem:[%s197 + $0x28] sm:$0xff] %v348
      %381 = vst [vmem:[%s197 + $0x30] sm:$0xff] %v349
      %382 = vst [vmem:[%s197 + $0x38] sm:$0xff] %v350
      %383 = vst [vmem:[%s197 + $0x40] sm:$0xff] %v351
      %384 = vst [vmem:[%s197 + $0x48] sm:$0xff] %v352
      %385 = vst [vmem:[%s197 + $0x50] sm:$0xff] %v353
      %386 = vst [vmem:[%s197 + $0x58] sm:$0xff] %v354
      %387 = vst [vmem:[%s197 + $0x60] sm:$0xff] %v355
      %388 = vst [vmem:[%s197 + $0x68] sm:$0xff] %v356
      %389 = vst [vmem:[%s197 + $0x70] sm:$0xff] %v357
      %390 = vst [vmem:[%s197 + $0x78] sm:$0xff] %v358
      %391 = vst [vmem:[%s197 + $0x80] sm:$0xff] %v359
      %392 = vst [vmem:[%s197 + $0x88] sm:$0xff] %v360
      %393 = vst [vmem:[%s197 + $0x90] sm:$0xff] %v361
      %394 = vst [vmem:[%s197 + $0x98] sm:$0xff] %v362
      %395 = vst [vmem:[%s197 + $0xa0] sm:$0xff] %v363
      %396 = vst [vmem:[%s197 + $0xa8] sm:$0xff] %v364
      %397 = vst [vmem:[%s197 + $0xb0] sm:$0xff] %v365
      %398 = vst [vmem:[%s197 + $0xb8] sm:$0xff] %v366
      %399 = vst [vmem:[%s197 + $0xc0] sm:$0xff] %v367
      %400 = vst [vmem:[%s197 + $0xc8] sm:$0xff] %v368
      %401 = vst [vmem:[%s197 + $0xd0] sm:$0xff] %v369
      %402 = vst [vmem:[%s197 + $0xd8] sm:$0xff] %v370
      %403 = vst [vmem:[%s197 + $0xe0] sm:$0xff] %v371
      %404 = vst [vmem:[%s197 + $0xe8] sm:$0xff] %v372
      %405 = vst [vmem:[%s197 + $0xf0] sm:$0xff] %v373
      %406 = vst [vmem:[%s197 + $0xf8] sm:$0xff] %v374
      %p407 = scmp.lt.s32.totalorder %s15, 1
      %s408 = scalar_select %p407, %s15, 1
      %s409 = smul.addr %s408, 32
      %s410 = smul.addr %s409, 8
      %s411 = scalar_lea.vmem %s4, %s410
      // Predicated region
      $region37: #{upblock_attention_forward.7} parent=35 // pred_check
        %p412 = pneg %p122
      $region38: #{upblock_attention_forward.7} parent=35 // pred_check_branch
        %414 = sbr.rel (%p412) target = $region40
      $region39: #{upblock_attention_forward.7} parent=35 // pred_region
        _
      $region40: #{upblock_attention_forward.7} parent=35 // pred_fallthru
        _
    $region36: #{upblock_attention_forward.7} parent=5 // pred_fallthru
      _
    %p415 = scmp.le.s32.totalorder 2, %s10
    // Predicated region
    $region41: #{upblock_attention_forward.7} parent=5 // pred_check
      %p416 = pneg %p415
    $region42: #{upblock_attention_forward.7} parent=5 // pred_check_branch
      %418 = sbr.rel (%p416) target = $region44
    $region43: #{upblock_attention_forward.7} parent=5 // pred_region
      %s419 = ssub.s32 %s10, 2
      // Predicated region
      $region45: #{upblock_attention_forward.7} parent=43 // pred_check
        %p420 = pneg %p128
      $region46: #{upblock_attention_forward.7} parent=43 // pred_check_branch
        %422 = sbr.rel (%p420) target = $region48
      $region47: #{upblock_attention_forward.7} parent=43 // pred_region
        %p423 = scmp.lt.s32.totalorder %s16, 1
        %s424 = scalar_select %p423, %s16, 1
        %s425 = smul.addr %s424, 32
        %s426 = smul.addr %s425, 8
        %s427 = scalar_lea.vmem %s4, %s426
      $region48: #{upblock_attention_forward.7} parent=43 // pred_fallthru
        _
    $region44: #{upblock_attention_forward.7} parent=5 // pred_fallthru
      _
  $region6: #{upblock_attention_forward.7} parent=0 // loop_footer
    %s14 = sadd.s32 1, %s10
  $region7: #{upblock_attention_forward.7} parent=0 // loop_footer_branch
    %9 = sbr.rel target = $region3
  $region8: #{upblock_attention_forward.7} parent=0 // loop_exit
    _

// kernel: upblock_attention_forward.6
$region0: #{upblock_attention_forward.6}
  #allocation0 [shape = 'u32[]', space=smem, size = 0x4, offset = 0x4, fixed_abs, tag = 'smem constant byte address 0x4 - core index']
  #allocation1 [shape = 'u32[144,128]{1,0:T(1,128)}', space=vmem, size = 0x12000, scoped, tag = 'internal scratch']
  %s0 = inlined_call_operand.vmem [shape: f32[2,18,18,128], index: 0, kind: input, shape index: {}]
  %s1 = inlined_call_operand.vmem [shape: bf16[1152,128], index: 1, kind: input, shape index: {}]
  %s2 = inlined_call_operand.vmem [shape: f32[2,256,128], index: 2, kind: output, shape index: {0}]
  %s3 = inlined_call_operand.vmem [shape: f32[2,2,128], index: 3, kind: output, shape index: {1}]
  %4 = xla_tuple %s2, %s3
  %s5 = sld [smem:[#allocation0]]
  $region49: #{upblock_attention_forward.6} parent=0
    _
  %s7 = ssub.s32 1, %s5
  %s8 = scalar_select 0, %s7, %s5
  loop: start=0, step=1, limit=4
  $region2: #{upblock_attention_forward.6} parent=0 // loop_pre_header
    _
  $region3: #{upblock_attention_forward.6} parent=0 // loop_header
    %s10 = sphi 0, %s14
    %p11 = scmp.ge.s32.totalorder %s10, 4
    %s20 = sphi 0, %s22
    %s23 = sphi 0, %s20
    %s24 = sphi 0, %s23
    %s40 = sphi 0, %s24
    %s44 = sphi 0, %s44
    %s46 = sphi 0, %s44
    %s47 = sphi 0, %s46
    %s61 = sphi 0, %s47
    %s67 = sphi 0, %s69
    %s70 = sphi 0, %s67
    %s71 = sphi 0, %s70
    %s87 = sphi 0, %s71
    %s93 = sphi 0, %s95
    %s96 = sphi 0, %s93
    %s97 = sphi 0, %s96
    %s113 = sphi 0, %s97
  $region4: #{upblock_attention_forward.6} parent=0 // loop_header_branch
    %13 = sbr.rel (%p11) target = $region8
  $region5: #{upblock_attention_forward.6} parent=0 // loop_body
    %s15 = ssub.s32 %s10, 1
    %s16 = ssub.s32 %s10, 2
    %s17 = sadd.s32 %s10, 1
    %s18 = ssub.s32 %s10, %s17
    %p19 = scmp.eq.s32.totalorder %s18, 0
    %s21 = sadd.s32 %s20, 1
    %s22 = scalar_select %p19, %s20, %s21
    %p25 = pneg %p19
    %p26 = scmp.eq.s32.totalorder %s10, 1
    %p27 = por %p25, %p26
    %p28 = scmp.ne.s32.totalorder %s20, %s23
    %p29 = scmp.eq.s32.totalorder %s10, 0
    %p30 = por %p28, %p29
    %p31 = scmp.ne.s32.totalorder %s20, %s23
    %p32 = scmp.eq.s32.totalorder %s15, 1
    %p33 = por %p31, %p32
    %p34 = scmp.ne.s32.totalorder %s23, %s24
    %p35 = scmp.eq.s32.totalorder %s15, 0
    %p36 = por %p34, %p35
    %p37 = scmp.ne.s32.totalorder %s23, %s24
    %p38 = scmp.eq.s32.totalorder %s16, 1
    %p39 = por %p37, %p38
    %p41 = scmp.ne.s32.totalorder %s24, %s40
    %p42 = scmp.eq.s32.totalorder %s16, 0
    %p43 = por %p41, %p42
    %s45 = sadd.s32 %s44, 1
    %p48 = scmp.eq.s32.totalorder %s10, 1
    %p49 = scmp.ne.s32.totalorder %s44, %s46
    %p50 = scmp.eq.s32.totalorder %s10, 0
    %p51 = por %p49, %p50
    %p52 = scmp.ne.s32.totalorder %s44, %s46
    %p53 = scmp.eq.s32.totalorder %s15, 1
    %p54 = por %p52, %p53
    %p55 = scmp.ne.s32.totalorder %s46, %s47
    %p56 = scmp.eq.s32.totalorder %s15, 0
    %p57 = por %p55, %p56
    %p58 = scmp.ne.s32.totalorder %s46, %s47
    %p59 = scmp.eq.s32.totalorder %s16, 1
    %p60 = por %p58, %p59
    %p62 = scmp.ne.s32.totalorder %s47, %s61
    %p63 = scmp.eq.s32.totalorder %s16, 0
    %p64 = por %p62, %p63
    %s65 = ssub.s32 %s10, %s17
    %p66 = scmp.eq.s32.totalorder %s65, 0
    %s68 = sadd.s32 %s67, 1
    %s69 = scalar_select %p66, %s67, %s68
    %p72 = pneg %p66
    %p73 = scmp.eq.s32.totalorder %s10, 1
    %p74 = por %p72, %p73
    %p75 = scmp.ne.s32.totalorder %s67, %s70
    %p76 = scmp.eq.s32.totalorder %s10, 0
    %p77 = por %p75, %p76
    %p78 = scmp.ne.s32.totalorder %s67, %s70
    %p79 = scmp.eq.s32.totalorder %s15, 1
    %p80 = por %p78, %p79
    %p81 = scmp.ne.s32.totalorder %s70, %s71
    %p82 = scmp.eq.s32.totalorder %s15, 0
    %p83 = por %p81, %p82
    %p84 = scmp.ne.s32.totalorder %s70, %s71
    %p85 = scmp.eq.s32.totalorder %s16, 1
    %p86 = por %p84, %p85
    %p88 = scmp.ne.s32.totalorder %s71, %s87
    %p89 = scmp.eq.s32.totalorder %s16, 0
    %p90 = por %p88, %p89
    %s91 = ssub.s32 %s10, %s17
    %p92 = scmp.eq.s32.totalorder %s91, 0
    %s94 = sadd.s32 %s93, 1
    %s95 = scalar_select %p92, %s93, %s94
    %p98 = pneg %p92
    %p99 = scmp.eq.s32.totalorder %s10, 1
    %p100 = por %p98, %p99
    %p101 = scmp.ne.s32.totalorder %s93, %s96
    %p102 = scmp.eq.s32.totalorder %s10, 0
    %p103 = por %p101, %p102
    %p104 = scmp.ne.s32.totalorder %s93, %s96
    %p105 = scmp.eq.s32.totalorder %s15, 1
    %p106 = por %p104, %p105
    %p107 = scmp.ne.s32.totalorder %s96, %s97
    %p108 = scmp.eq.s32.totalorder %s15, 0
    %p109 = por %p107, %p108
    %p110 = scmp.ne.s32.totalorder %s96, %s97
    %p111 = scmp.eq.s32.totalorder %s16, 1
    %p112 = por %p110, %p111
    %p114 = scmp.ne.s32.totalorder %s97, %s113
    %p115 = scmp.eq.s32.totalorder %s16, 0
    %p116 = por %p114, %p115
    %p117 = scmp.le.s32.totalorder 1, %s10
    %p118 = scmp.lt.s32.totalorder %s10, 3
    %p119 = pnand %p117, %p118
    %p120 = pneg %p119
    // Predicated region
    $region9: #{upblock_attention_forward.6} parent=5 // pred_check
      _
    $region10: #{upblock_attention_forward.6} parent=5 // pred_check_branch
      %122 = sbr.rel (%p119) target = $region12
    $region11: #{upblock_attention_forward.6} parent=5 // pred_region
      %s123 = ssub.s32 %s10, 1
      // Predicated region
      $region13: #{upblock_attention_forward.6} parent=11 // pred_check
        %p124 = pneg %p57
      $region14: #{upblock_attention_forward.6} parent=11 // pred_check_branch
        %126 = sbr.rel (%p124) target = $region16
      $region15: #{upblock_attention_forward.6} parent=11 // pred_region
        _
      $region16: #{upblock_attention_forward.6} parent=11 // pred_fallthru
        _
    $region12: #{upblock_attention_forward.6} parent=5 // pred_fallthru
      _
    %p127 = scmp.lt.s32.totalorder %s10, 2
    // Predicated region
    $region17: #{upblock_attention_forward.6} parent=5 // pred_check
      %p128 = pneg %p127
    $region18: #{upblock_attention_forward.6} parent=5 // pred_check_branch
      %130 = sbr.rel (%p128) target = $region20
    $region19: #{upblock_attention_forward.6} parent=5 // pred_region
      // Predicated region
      $region21: #{upblock_attention_forward.6} parent=19 // pred_check
        %p131 = pneg %p30
      $region22: #{upblock_attention_forward.6} parent=19 // pred_check_branch
        %133 = sbr.rel (%p131) target = $region24
      $region23: #{upblock_attention_forward.6} parent=19 // pred_region
        %p134 = scmp.lt.s32.totalorder %s10, 1
        %s135 = scalar_select %p134, %s10, 1
        %s136 = smul.addr %s135, 54
        %s137 = smul.addr %s136, 8
        %s138 = scalar_lea.vmem %s0, %s137
      $region24: #{upblock_attention_forward.6} parent=19 // pred_fallthru
        _
    $region20: #{upblock_attention_forward.6} parent=5 // pred_fallthru
      _
    %p139 = scmp.le.s32.totalorder 1, %s10
    %p140 = scmp.lt.s32.totalorder %s10, 3
    %p141 = pnand %p139, %p140
    %p142 = pneg %p141
    // Predicated region
    $region25: #{upblock_attention_forward.6} parent=5 // pred_check
      _
    $region26: #{upblock_attention_forward.6} parent=5 // pred_check_branch
      %144 = sbr.rel (%p141) target = $region28
    $region27: #{upblock_attention_forward.6} parent=5 // pred_region
      %s145 = ssub.s32 %s10, 1
      %p146 = scmp.lt.s32.totalorder %s15, 1
      %s147 = scalar_select %p146, %s15, 1
      %s148 = smul.addr %s147, 54
      %s149 = smul.addr %s148, 8
      %s150 = scalar_lea.vmem %s0, %s149
      %p151 = pneg %p36
      %p152 = pneg %p33
      %p153 = pneg %p57
      %p154 = pneg %p54
      %p155 = pneg %p83
      %p156 = pneg %p80
      %p157 = scmp.lt.s32.totalorder %s15, 1
      %s158 = scalar_select %p157, %s15, 1
      %s159 = smul.addr %s158, 32
      %s160 = smul.addr %s159, 8
      %s161 = scalar_lea.vmem %s2, %s160
      %p162 = pneg %p109
      %p163 = pneg %p106
      %p164 = scmp.lt.s32.totalorder %s15, 1
      %s165 = scalar_select %p164, %s15, 1
      %s166 = smul.addr %s165, 2
      %s167 = scalar_lea.vmem %s3, %s166
      %p168 = scmp.lt.s32.totalorder %s15, 1
      %s169 = scalar_select %p168, %s15, 1
      %s170 = smul.addr %s169, 54
      %s171 = smul.addr %s170, 8
      %s172 = scalar_lea.vmem %s0, %s171
      %p173 = scmp.lt.s32.totalorder %s15, 1
      %s174 = scalar_select %p173, %s15, 1
      %s175 = smul.addr %s174, 32
      %s176 = smul.addr %s175, 8
      %s177 = scalar_lea.vmem %s2, %s176
      %p178 = scmp.lt.s32.totalorder %s15, 1
      %s179 = scalar_select %p178, %s15, 1
      %s180 = smul.addr %s179, 2
      %s181 = scalar_lea.vmem %s3, %s180
      %v183 = vld [vmem:[%s172] sm:$0xff]
      %v184 = vld [vmem:[%s172 + $0x8] sm:$0xff]
      %v185 = vld [vmem:[%s172 + $0x10] sm:$0x3]
      %v186 = vld [vmem:[%s172 + $0x18] sm:$0xff]
      %v187 = vld [vmem:[%s172 + $0x20] sm:$0xff]
      %v188 = vld [vmem:[%s172 + $0x28] sm:$0x3]
      %v189 = vld [vmem:[%s172 + $0x30] sm:$0xff]
      %v190 = vld [vmem:[%s172 + $0x38] sm:$0xff]
      %v191 = vld [vmem:[%s172 + $0x40] sm:$0x3]
      %v192 = vld [vmem:[%s172 + $0x48] sm:$0xff]
      %v193 = vld [vmem:[%s172 + $0x50] sm:$0xff]
      %v194 = vld [vmem:[%s172 + $0x58] sm:$0x3]
      %v195 = vld [vmem:[%s172 + $0x60] sm:$0xff]
      %v196 = vld [vmem:[%s172 + $0x68] sm:$0xff]
      %v197 = vld [vmem:[%s172 + $0x70] sm:$0x3]
      %v198 = vld [vmem:[%s172 + $0x78] sm:$0xff]
      %v199 = vld [vmem:[%s172 + $0x80] sm:$0xff]
      %v200 = vld [vmem:[%s172 + $0x88] sm:$0x3]
      %v201 = vld [vmem:[%s172 + $0x90] sm:$0xff]
      %v202 = vld [vmem:[%s172 + $0x98] sm:$0xff]
      %v203 = vld [vmem:[%s172 + $0xa0] sm:$0x3]
      %v204 = vld [vmem:[%s172 + $0xa8] sm:$0xff]
      %v205 = vld [vmem:[%s172 + $0xb0] sm:$0xff]
      %v206 = vld [vmem:[%s172 + $0xb8] sm:$0x3]
      %v207 = vld [vmem:[%s172 + $0xc0] sm:$0xff]
      %v208 = vld [vmem:[%s172 + $0xc8] sm:$0xff]
      %v209 = vld [vmem:[%s172 + $0xd0] sm:$0x3]
      %v210 = vld [vmem:[%s172 + $0xd8] sm:$0xff]
      %v211 = vld [vmem:[%s172 + $0xe0] sm:$0xff]
      %v212 = vld [vmem:[%s172 + $0xe8] sm:$0x3]
      %v213 = vld [vmem:[%s172 + $0xf0] sm:$0xff]
      %v214 = vld [vmem:[%s172 + $0xf8] sm:$0xff]
      %v215 = vld [vmem:[%s172 + $0x100] sm:$0x3]
      %v216 = vld [vmem:[%s172 + $0x108] sm:$0xff]
      %v217 = vld [vmem:[%s172 + $0x110] sm:$0xff]
      %v218 = vld [vmem:[%s172 + $0x118] sm:$0x3]
      %v219 = vld [vmem:[%s172 + $0x120] sm:$0xff]
      %v220 = vld [vmem:[%s172 + $0x128] sm:$0xff]
      %v221 = vld [vmem:[%s172 + $0x130] sm:$0x3]
      %v222 = vld [vmem:[%s172 + $0x138] sm:$0xff]
      %v223 = vld [vmem:[%s172 + $0x140] sm:$0xff]
      %v224 = vld [vmem:[%s172 + $0x148] sm:$0x3]
      %v225 = vld [vmem:[%s172 + $0x150] sm:$0xff]
      %v226 = vld [vmem:[%s172 + $0x158] sm:$0xff]
      %v227 = vld [vmem:[%s172 + $0x160] sm:$0x3]
      %v228 = vld [vmem:[%s172 + $0x168] sm:$0xff]
      %v229 = vld [vmem:[%s172 + $0x170] sm:$0xff]
      %v230 = vld [vmem:[%s172 + $0x178] sm:$0x3]
      %v231 = vld [vmem:[%s172 + $0x180] sm:$0xff]
      %v232 = vld [vmem:[%s172 + $0x188] sm:$0xff]
      %v233 = vld [vmem:[%s172 + $0x190] sm:$0x3]
      %v234 = vld [vmem:[%s172 + $0x198] sm:$0xff]
      %v235 = vld [vmem:[%s172 + $0x1a0] sm:$0xff]
      %v236 = vld [vmem:[%s172 + $0x1a8] sm:$0x3]
      %vm285 = vcmask 1046528
      %v286 = vrot.slane %v183, 1
      %v287 = vrot.slane %v184, 1
      %v288 = vsel %vm285, %v286, %v287
      %v289 = vrot.slane %v185, 1
      %v290 = vsel %vm285, %v287, %v289
      %v291 = vrot.slane %v186, 1
      %v292 = vrot.slane %v187, 1
      %v293 = vsel %vm285, %v291, %v292
      %v294 = vrot.slane %v188, 1
      %v295 = vsel %vm285, %v292, %v294
      %v296 = vrot.slane %v189, 1
      %v297 = vrot.slane %v190, 1
      %v298 = vsel %vm285, %v296, %v297
      %v299 = vrot.slane %v191, 1
      %v300 = vsel %vm285, %v297, %v299
      %v301 = vrot.slane %v192, 1
      %v302 = vrot.slane %v193, 1
      %v303 = vsel %vm285, %v301, %v302
      %v304 = vrot.slane %v194, 1
      %v305 = vsel %vm285, %v302, %v304
      %v306 = vrot.slane %v195, 1
      %v307 = vrot.slane %v196, 1
      %v308 = vsel %vm285, %v306, %v307
      %v309 = vrot.slane %v197, 1
      %v310 = vsel %vm285, %v307, %v309
      %v311 = vrot.slane %v198, 1
      %v312 = vrot.slane %v199, 1
      %v313 = vsel %vm285, %v311, %v312
      %v314 = vrot.slane %v200, 1
      %v315 = vsel %vm285, %v312, %v314
      %v316 = vrot.slane %v201, 1
      %v317 = vrot.slane %v202, 1
      %v318 = vsel %vm285, %v316, %v317
      %v319 = vrot.slane %v203, 1
      %v320 = vsel %vm285, %v317, %v319
      %v321 = vrot.slane %v204, 1
      %v322 = vrot.slane %v205, 1
      %v323 = vsel %vm285, %v321, %v322
      %v324 = vrot.slane %v206, 1
      %v325 = vsel %vm285, %v322, %v324
      %v326 = vrot.slane %v207, 1
      %v327 = vrot.slane %v208, 1
      %v328 = vsel %vm285, %v326, %v327
      %v329 = vrot.slane %v209, 1
      %v330 = vsel %vm285, %v327, %v329
      %v331 = vrot.slane %v210, 1
      %v332 = vrot.slane %v211, 1
      %v333 = vsel %vm285, %v331, %v332
      %v334 = vrot.slane %v212, 1
      %v335 = vsel %vm285, %v332, %v334
      %v336 = vrot.slane %v213, 1
      %v337 = vrot.slane %v214, 1
      %v338 = vsel %vm285, %v336, %v337
      %v339 = vrot.slane %v215, 1
      %v340 = vsel %vm285, %v337, %v339
      %v341 = vrot.slane %v216, 1
      %v342 = vrot.slane %v217, 1
      %v343 = vsel %vm285, %v341, %v342
      %v344 = vrot.slane %v218, 1
      %v345 = vsel %vm285, %v342, %v344
      %v346 = vrot.slane %v219, 1
      %v347 = vrot.slane %v220, 1
      %v348 = vsel %vm285, %v346, %v347
      %v349 = vrot.slane %v221, 1
      %v350 = vsel %vm285, %v347, %v349
      %v351 = vrot.slane %v222, 1
      %v352 = vrot.slane %v223, 1
      %v353 = vsel %vm285, %v351, %v352
      %v354 = vrot.slane %v224, 1
      %v355 = vsel %vm285, %v352, %v354
      %v356 = vrot.slane %v225, 1
      %v357 = vrot.slane %v226, 1
      %v358 = vsel %vm285, %v356, %v357
      %v359 = vrot.slane %v227, 1
      %v360 = vsel %vm285, %v357, %v359
      %v361 = vrot.slane %v228, 1
      %v362 = vrot.slane %v229, 1
      %v363 = vsel %vm285, %v361, %v362
      %v364 = vrot.slane %v230, 1
      %v365 = vsel %vm285, %v362, %v364
      %vm398 = vcmask 1045504
      %v399 = vrot.slane %v183, 2
      %v400 = vrot.slane %v184, 2
      %v401 = vsel %vm398, %v399, %v400
      %v402 = vrot.slane %v185, 2
      %v403 = vsel %vm398, %v400, %v402
      %v404 = vrot.slane %v186, 2
      %v405 = vrot.slane %v187, 2
      %v406 = vsel %vm398, %v404, %v405
      %v407 = vrot.slane %v188, 2
      %v408 = vsel %vm398, %v405, %v407
      %v409 = vrot.slane %v189, 2
      %v410 = vrot.slane %v190, 2
      %v411 = vsel %vm398, %v409, %v410
      %v412 = vrot.slane %v191, 2
      %v413 = vsel %vm398, %v410, %v412
      %v414 = vrot.slane %v192, 2
      %v415 = vrot.slane %v193, 2
      %v416 = vsel %vm398, %v414, %v415
      %v417 = vrot.slane %v194, 2
      %v418 = vsel %vm398, %v415, %v417
      %v419 = vrot.slane %v195, 2
      %v420 = vrot.slane %v196, 2
      %v421 = vsel %vm398, %v419, %v420
      %v422 = vrot.slane %v197, 2
      %v423 = vsel %vm398, %v420, %v422
      %v424 = vrot.slane %v198, 2
      %v425 = vrot.slane %v199, 2
      %v426 = vsel %vm398, %v424, %v425
      %v427 = vrot.slane %v200, 2
      %v428 = vsel %vm398, %v425, %v427
      %v429 = vrot.slane %v201, 2
      %v430 = vrot.slane %v202, 2
      %v431 = vsel %vm398, %v429, %v430
      %v432 = vrot.slane %v203, 2
      %v433 = vsel %vm398, %v430, %v432
      %v434 = vrot.slane %v204, 2
      %v435 = vrot.slane %v205, 2
      %v436 = vsel %vm398, %v434, %v435
      %v437 = vrot.slane %v206, 2
      %v438 = vsel %vm398, %v435, %v437
      %v439 = vrot.slane %v207, 2
      %v440 = vrot.slane %v208, 2
      %v441 = vsel %vm398, %v439, %v440
      %v442 = vrot.slane %v209, 2
      %v443 = vsel %vm398, %v440, %v442
      %v444 = vrot.slane %v210, 2
      %v445 = vrot.slane %v211, 2
      %v446 = vsel %vm398, %v444, %v445
      %v447 = vrot.slane %v212, 2
      %v448 = vsel %vm398, %v445, %v447
      %v449 = vrot.slane %v213, 2
      %v450 = vrot.slane %v214, 2
      %v451 = vsel %vm398, %v449, %v450
      %v452 = vrot.slane %v215, 2
      %v453 = vsel %vm398, %v450, %v452
      %v454 = vrot.slane %v216, 2
      %v455 = vrot.slane %v217, 2
      %v456 = vsel %vm398, %v454, %v455
      %v457 = vrot.slane %v218, 2
      %v458 = vsel %vm398, %v455, %v457
      %v459 = vrot.slane %v219, 2
      %v460 = vrot.slane %v220, 2
      %v461 = vsel %vm398, %v459, %v460
      %v462 = vrot.slane %v221, 2
      %v463 = vsel %vm398, %v460, %v462
      %v464 = vrot.slane %v222, 2
      %v465 = vrot.slane %v223, 2
      %v466 = vsel %vm398, %v464, %v465
      %v467 = vrot.slane %v224, 2
      %v468 = vsel %vm398, %v465, %v467
      %v469 = vrot.slane %v225, 2
      %v470 = vrot.slane %v226, 2
      %v471 = vsel %vm398, %v469, %v470
      %v472 = vrot.slane %v227, 2
      %v473 = vsel %vm398, %v470, %v472
      %v474 = vrot.slane %v228, 2
      %v475 = vrot.slane %v229, 2
      %v476 = vsel %vm398, %v474, %v475
      %v477 = vrot.slane %v230, 2
      %v478 = vsel %vm398, %v475, %v477
      %v514 = vrot.slane %v231, 1
      %v515 = vrot.slane %v232, 1
      %v516 = vsel %vm285, %v514, %v515
      %v517 = vrot.slane %v233, 1
      %v518 = vsel %vm285, %v515, %v517
      %v521 = vrot.slane %v231, 2
      %v522 = vrot.slane %v232, 2
      %v523 = vsel %vm398, %v521, %v522
      %v524 = vrot.slane %v233, 2
      %v525 = vsel %vm398, %v522, %v524
      %v531 = vrot.slane %v234, 1
      %v532 = vrot.slane %v235, 1
      %v533 = vsel %vm285, %v531, %v532
      %v534 = vrot.slane %v236, 1
      %v535 = vsel %vm285, %v532, %v534
      %v538 = vrot.slane %v234, 2
      %v539 = vrot.slane %v235, 2
      %v540 = vsel %vm398, %v538, %v539
      %v541 = vrot.slane %v236, 2
      %v542 = vsel %vm398, %v539, %v541
      %v545 = vpack.c.bf16 %v184, %v183
      %v546 = vpack.c.bf16 %v290, %v288
      %v547 = vpack.c.bf16 %v403, %v401
      %v548 = vpack.c.bf16 %v187, %v186
      %v549 = vpack.c.bf16 %v295, %v293
      %v550 = vpack.c.bf16 %v408, %v406
      %v551 = vpack.c.bf16 %v190, %v189
      %v552 = vpack.c.bf16 %v300, %v298
      %v553 = vpack.c.bf16 %v413, %v411
      %v554 = vpack.c.bf16 %v193, %v192
      %v555 = vpack.c.bf16 %v305, %v303
      %v556 = vpack.c.bf16 %v418, %v416
      %v557 = vpack.c.bf16 %v196, %v195
      %v558 = vpack.c.bf16 %v310, %v308
      %v559 = vpack.c.bf16 %v423, %v421
      %v560 = vpack.c.bf16 %v199, %v198
      %v561 = vpack.c.bf16 %v315, %v313
      %v562 = vpack.c.bf16 %v428, %v426
      %v563 = vpack.c.bf16 %v202, %v201
      %v564 = vpack.c.bf16 %v320, %v318
      %v565 = vpack.c.bf16 %v433, %v431
      %v566 = vpack.c.bf16 %v205, %v204
      %v567 = vpack.c.bf16 %v325, %v323
      %v568 = vpack.c.bf16 %v438, %v436
      %v569 = vpack.c.bf16 %v208, %v207
      %v570 = vpack.c.bf16 %v330, %v328
      %v571 = vpack.c.bf16 %v443, %v441
      %v572 = vpack.c.bf16 %v211, %v210
      %v573 = vpack.c.bf16 %v335, %v333
      %v574 = vpack.c.bf16 %v448, %v446
      %v575 = vpack.c.bf16 %v214, %v213
      %v576 = vpack.c.bf16 %v340, %v338
      %v577 = vpack.c.bf16 %v453, %v451
      %v578 = vpack.c.bf16 %v217, %v216
      %v579 = vpack.c.bf16 %v345, %v343
      %v580 = vpack.c.bf16 %v458, %v456
      %v581 = vpack.c.bf16 %v220, %v219
      %v582 = vpack.c.bf16 %v350, %v348
      %v583 = vpack.c.bf16 %v463, %v461
      %v584 = vpack.c.bf16 %v223, %v222
      %v585 = vpack.c.bf16 %v355, %v353
      %v586 = vpack.c.bf16 %v468, %v466
      %v587 = vpack.c.bf16 %v226, %v225
      %v588 = vpack.c.bf16 %v360, %v358
      %v589 = vpack.c.bf16 %v473, %v471
      %v590 = vpack.c.bf16 %v229, %v228
      %v591 = vpack.c.bf16 %v365, %v363
      %v592 = vpack.c.bf16 %v478, %v476
      %v593 = vpack.c.bf16 %v232, %v231
      %v594 = vpack.c.bf16 %v518, %v516
      %v595 = vpack.c.bf16 %v525, %v523
      %v596 = vpack.c.bf16 %v235, %v234
      %v597 = vpack.c.bf16 %v535, %v533
      %v598 = vpack.c.bf16 %v542, %v540
      %v599 = vld [vmem:[%s1] sm:$0xf]
      %v600 = vld [vmem:[%s1 + $0x4] sm:$0xf]
      %v601 = vld [vmem:[%s1 + $0x8] sm:$0xf]
      %v602 = vld [vmem:[%s1 + $0xc] sm:$0xf]
      %v603 = vld [vmem:[%s1 + $0x10] sm:$0xf]
      %v604 = vld [vmem:[%s1 + $0x14] sm:$0xf]
      %v605 = vld [vmem:[%s1 + $0x18] sm:$0xf]
      %v606 = vld [vmem:[%s1 + $0x1c] sm:$0xf]
      %v607 = vld [vmem:[%s1 + $0x20] sm:$0xf]
      %v608 = vld [vmem:[%s1 + $0x24] sm:$0xf]
      %v609 = vld [vmem:[%s1 + $0x28] sm:$0xf]
      %v610 = vld [vmem:[%s1 + $0x2c] sm:$0xf]
      %v611 = vld [vmem:[%s1 + $0x30] sm:$0xf]
      %v612 = vld [vmem:[%s1 + $0x34] sm:$0xf]
      %v613 = vld [vmem:[%s1 + $0x38] sm:$0xf]
      %v614 = vld [vmem:[%s1 + $0x3c] sm:$0xf]
      %v615 = vld [vmem:[%s1 + $0x40] sm:$0xf]
      %v616 = vld [vmem:[%s1 + $0x44] sm:$0xf]
      %v617 = vld [vmem:[%s1 + $0x48] sm:$0xf]
      %v618 = vld [vmem:[%s1 + $0x4c] sm:$0xf]
      %v619 = vld [vmem:[%s1 + $0x50] sm:$0xf]
      %v620 = vld [vmem:[%s1 + $0x54] sm:$0xf]
      %v621 = vld [vmem:[%s1 + $0x58] sm:$0xf]
      %v622 = vld [vmem:[%s1 + $0x5c] sm:$0xf]
      %v623 = vld [vmem:[%s1 + $0x60] sm:$0xf]
      %v624 = vld [vmem:[%s1 + $0x64] sm:$0xf]
      %v625 = vld [vmem:[%s1 + $0x68] sm:$0xf]
      %v626 = vld [vmem:[%s1 + $0x6c] sm:$0xf]
      %v627 = vld [vmem:[%s1 + $0x70] sm:$0xf]
      %v628 = vld [vmem:[%s1 + $0x74] sm:$0xf]
      %v629 = vld [vmem:[%s1 + $0x78] sm:$0xf]
      %v630 = vld [vmem:[%s1 + $0x7c] sm:$0xf]
      %v631 = vld [vmem:[%s1 + $0x80] sm:$0xf]
      %v632 = vld [vmem:[%s1 + $0x84] sm:$0xf]
      %v633 = vld [vmem:[%s1 + $0x88] sm:$0xf]
      %v634 = vld [vmem:[%s1 + $0x8c] sm:$0xf]
      %v635 = vld [vmem:[%s1 + $0x90] sm:$0xf]
      %v636 = vld [vmem:[%s1 + $0x94] sm:$0xf]
      %v637 = vld [vmem:[%s1 + $0x98] sm:$0xf]
      %v638 = vld [vmem:[%s1 + $0x9c] sm:$0xf]
      %v639 = vld [vmem:[%s1 + $0xa0] sm:$0xf]
      %v640 = vld [vmem:[%s1 + $0xa4] sm:$0xf]
      %v641 = vld [vmem:[%s1 + $0xa8] sm:$0xf]
      %v642 = vld [vmem:[%s1 + $0xac] sm:$0xf]
      %v643 = vld [vmem:[%s1 + $0xb0] sm:$0xf]
      %v644 = vld [vmem:[%s1 + $0xb4] sm:$0xf]
      %v645 = vld [vmem:[%s1 + $0xb8] sm:$0xf]
      %v646 = vld [vmem:[%s1 + $0xbc] sm:$0xf]
      %v647 = vld [vmem:[%s1 + $0xc0] sm:$0xf]
      %v648 = vld [vmem:[%s1 + $0xc4] sm:$0xf]
      %v649 = vld [vmem:[%s1 + $0xc8] sm:$0xf]
      %v650 = vld [vmem:[%s1 + $0xcc] sm:$0xf]
      %v651 = vld [vmem:[%s1 + $0xd0] sm:$0xf]
      %v652 = vld [vmem:[%s1 + $0xd4] sm:$0xf]
      %v653 = vld [vmem:[%s1 + $0xd8] sm:$0xf]
      %v654 = vld [vmem:[%s1 + $0xdc] sm:$0xf]
      %v655 = vld [vmem:[%s1 + $0xe0] sm:$0xf]
      %v656 = vld [vmem:[%s1 + $0xe4] sm:$0xf]
      %v657 = vld [vmem:[%s1 + $0xe8] sm:$0xf]
      %v658 = vld [vmem:[%s1 + $0xec] sm:$0xf]
      %v659 = vld [vmem:[%s1 + $0xf0] sm:$0xf]
      %v660 = vld [vmem:[%s1 + $0xf4] sm:$0xf]
      %v661 = vld [vmem:[%s1 + $0xf8] sm:$0xf]
      %v662 = vld [vmem:[%s1 + $0xfc] sm:$0xf]
      %v663 = vld [vmem:[%s1 + $0x100] sm:$0xf]
      %v664 = vld [vmem:[%s1 + $0x104] sm:$0xf]
      %v665 = vld [vmem:[%s1 + $0x108] sm:$0xf]
      %v666 = vld [vmem:[%s1 + $0x10c] sm:$0xf]
      %v667 = vld [vmem:[%s1 + $0x110] sm:$0xf]
      %v668 = vld [vmem:[%s1 + $0x114] sm:$0xf]
      %v669 = vld [vmem:[%s1 + $0x118] sm:$0xf]
      %v670 = vld [vmem:[%s1 + $0x11c] sm:$0xf]
      %v671 = vld [vmem:[%s1 + $0x120] sm:$0xf]
      %v672 = vld [vmem:[%s1 + $0x124] sm:$0xf]
      %v673 = vld [vmem:[%s1 + $0x128] sm:$0xf]
      %v674 = vld [vmem:[%s1 + $0x12c] sm:$0xf]
      %v675 = vld [vmem:[%s1 + $0x130] sm:$0xf]
      %v676 = vld [vmem:[%s1 + $0x134] sm:$0xf]
      %v677 = vld [vmem:[%s1 + $0x138] sm:$0xf]
      %v678 = vld [vmem:[%s1 + $0x13c] sm:$0xf]
      %v679 = vld [vmem:[%s1 + $0x140] sm:$0xf]
      %v680 = vld [vmem:[%s1 + $0x144] sm:$0xf]
      %v681 = vld [vmem:[%s1 + $0x148] sm:$0xf]
      %v682 = vld [vmem:[%s1 + $0x14c] sm:$0xf]
      %v683 = vld [vmem:[%s1 + $0x150] sm:$0xf]
      %v684 = vld [vmem:[%s1 + $0x154] sm:$0xf]
      %v685 = vld [vmem:[%s1 + $0x158] sm:$0xf]
      %v686 = vld [vmem:[%s1 + $0x15c] sm:$0xf]
      %v687 = vld [vmem:[%s1 + $0x160] sm:$0xf]
      %v688 = vld [vmem:[%s1 + $0x164] sm:$0xf]
      %v689 = vld [vmem:[%s1 + $0x168] sm:$0xf]
      %v690 = vld [vmem:[%s1 + $0x16c] sm:$0xf]
      %v691 = vld [vmem:[%s1 + $0x170] sm:$0xf]
      %v692 = vld [vmem:[%s1 + $0x174] sm:$0xf]
      %v693 = vld [vmem:[%s1 + $0x178] sm:$0xf]
      %v694 = vld [vmem:[%s1 + $0x17c] sm:$0xf]
      %v695 = vld [vmem:[%s1 + $0x180] sm:$0xf]
      %v696 = vld [vmem:[%s1 + $0x184] sm:$0xf]
      %v697 = vld [vmem:[%s1 + $0x188] sm:$0xf]
      %v698 = vld [vmem:[%s1 + $0x18c] sm:$0xf]
      %v699 = vld [vmem:[%s1 + $0x190] sm:$0xf]
      %v700 = vld [vmem:[%s1 + $0x194] sm:$0xf]
      %v701 = vld [vmem:[%s1 + $0x198] sm:$0xf]
      %v702 = vld [vmem:[%s1 + $0x19c] sm:$0xf]
      %v703 = vld [vmem:[%s1 + $0x1a0] sm:$0xf]
      %v704 = vld [vmem:[%s1 + $0x1a4] sm:$0xf]
      %v705 = vld [vmem:[%s1 + $0x1a8] sm:$0xf]
      %v706 = vld [vmem:[%s1 + $0x1ac] sm:$0xf]
      %v707 = vld [vmem:[%s1 + $0x1b0] sm:$0xf]
      %v708 = vld [vmem:[%s1 + $0x1b4] sm:$0xf]
      %v709 = vld [vmem:[%s1 + $0x1b8] sm:$0xf]
      %v710 = vld [vmem:[%s1 + $0x1bc] sm:$0xf]
      %v711 = vld [vmem:[%s1 + $0x1c0] sm:$0xf]
      %v712 = vld [vmem:[%s1 + $0x1c4] sm:$0xf]
      %v713 = vld [vmem:[%s1 + $0x1c8] sm:$0xf]
      %v714 = vld [vmem:[%s1 + $0x1cc] sm:$0xf]
      %v715 = vld [vmem:[%s1 + $0x1d0] sm:$0xf]
      %v716 = vld [vmem:[%s1 + $0x1d4] sm:$0xf]
      %v717 = vld [vmem:[%s1 + $0x1d8] sm:$0xf]
      %v718 = vld [vmem:[%s1 + $0x1dc] sm:$0xf]
      %v719 = vld [vmem:[%s1 + $0x1e0] sm:$0xf]
      %v720 = vld [vmem:[%s1 + $0x1e4] sm:$0xf]
      %v721 = vld [vmem:[%s1 + $0x1e8] sm:$0xf]
      %v722 = vld [vmem:[%s1 + $0x1ec] sm:$0xf]
      %v723 = vld [vmem:[%s1 + $0x1f0] sm:$0xf]
      %v724 = vld [vmem:[%s1 + $0x1f4] sm:$0xf]
      %v725 = vld [vmem:[%s1 + $0x1f8] sm:$0xf]
      %v726 = vld [vmem:[%s1 + $0x1fc] sm:$0xf]
      %v727 = vld [vmem:[%s1 + $0x200] sm:$0xf]
      %v728 = vld [vmem:[%s1 + $0x204] sm:$0xf]
      %v729 = vld [vmem:[%s1 + $0x208] sm:$0xf]
      %v730 = vld [vmem:[%s1 + $0x20c] sm:$0xf]
      %v731 = vld [vmem:[%s1 + $0x210] sm:$0xf]
      %v732 = vld [vmem:[%s1 + $0x214] sm:$0xf]
      %v733 = vld [vmem:[%s1 + $0x218] sm:$0xf]
      %v734 = vld [vmem:[%s1 + $0x21c] sm:$0xf]
      %v735 = vld [vmem:[%s1 + $0x220] sm:$0xf]
      %v736 = vld [vmem:[%s1 + $0x224] sm:$0xf]
      %v737 = vld [vmem:[%s1 + $0x228] sm:$0xf]
      %v738 = vld [vmem:[%s1 + $0x22c] sm:$0xf]
      %v739 = vld [vmem:[%s1 + $0x230] sm:$0xf]
      %v740 = vld [vmem:[%s1 + $0x234] sm:$0xf]
      %v741 = vld [vmem:[%s1 + $0x238] sm:$0xf]
      %v742 = vld [vmem:[%s1 + $0x23c] sm:$0xf]
      %v887 = vunpack.c.l.b16 %v599
      %v888 = vunpack.c.l.b16 %v600
      %v889 = vunpack.c.l.b16 %v601
      %v890 = vunpack.c.l.b16 %v602
      %v891 = vunpack.c.l.b16 %v603
      %v892 = vunpack.c.l.b16 %v604
      %v893 = vunpack.c.l.b16 %v605
      %v894 = vunpack.c.l.b16 %v606
      %v895 = vunpack.c.l.b16 %v607
      %v896 = vunpack.c.l.b16 %v608
      %v897 = vunpack.c.l.b16 %v609
      %v898 = vunpack.c.l.b16 %v610
      %v899 = vunpack.c.l.b16 %v611
      %v900 = vunpack.c.l.b16 %v612
      %v901 = vunpack.c.l.b16 %v613
      %v902 = vunpack.c.l.b16 %v614
      %v903 = vunpack.c.l.b16 %v615
      %v904 = vunpack.c.l.b16 %v616
      %v905 = vunpack.c.l.b16 %v617
      %v906 = vunpack.c.l.b16 %v618
      %v907 = vunpack.c.l.b16 %v619
      %v908 = vunpack.c.l.b16 %v620
      %v909 = vunpack.c.l.b16 %v621
      %v910 = vunpack.c.l.b16 %v622
      %v911 = vunpack.c.l.b16 %v623
      %v912 = vunpack.c.l.b16 %v624
      %v913 = vunpack.c.l.b16 %v625
      %v914 = vunpack.c.l.b16 %v626
      %v915 = vunpack.c.l.b16 %v627
      %v916 = vunpack.c.l.b16 %v628
      %v917 = vunpack.c.l.b16 %v629
      %v918 = vunpack.c.l.b16 %v630
      %v919 = vunpack.c.l.b16 %v631
      %v920 = vunpack.c.l.b16 %v632
      %v921 = vunpack.c.l.b16 %v633
      %v922 = vunpack.c.l.b16 %v634
      %v923 = vunpack.c.l.b16 %v635
      %v924 = vunpack.c.l.b16 %v636
      %v925 = vunpack.c.l.b16 %v637
      %v926 = vunpack.c.l.b16 %v638
      %v927 = vunpack.c.l.b16 %v639
      %v928 = vunpack.c.l.b16 %v640
      %v929 = vunpack.c.l.b16 %v641
      %v930 = vunpack.c.l.b16 %v642
      %v931 = vunpack.c.l.b16 %v643
      %v932 = vunpack.c.l.b16 %v644
      %v933 = vunpack.c.l.b16 %v645
      %v934 = vunpack.c.l.b16 %v646
      %v935 = vunpack.c.l.b16 %v647
      %v936 = vunpack.c.l.b16 %v648
      %v937 = vunpack.c.l.b16 %v649
      %v938 = vunpack.c.l.b16 %v650
      %v939 = vunpack.c.l.b16 %v651
      %v940 = vunpack.c.l.b16 %v652
      %v941 = vunpack.c.l.b16 %v653
      %v942 = vunpack.c.l.b16 %v654
      %v943 = vunpack.c.l.b16 %v655
      %v944 = vunpack.c.l.b16 %v656
      %v945 = vunpack.c.l.b16 %v657
      %v946 = vunpack.c.l.b16 %v658
      %v947 = vunpack.c.l.b16 %v659
      %v948 = vunpack.c.l.b16 %v660
      %v949 = vunpack.c.l.b16 %v661
      %v950 = vunpack.c.l.b16 %v662
      %v951 = vunpack.c.l.b16 %v663
      %v952 = vunpack.c.l.b16 %v664
      %v953 = vunpack.c.l.b16 %v665
      %v954 = vunpack.c.l.b16 %v666
      %v955 = vunpack.c.l.b16 %v667
      %v956 = vunpack.c.l.b16 %v668
      %v957 = vunpack.c.l.b16 %v669
      %v958 = vunpack.c.l.b16 %v670
      %v959 = vunpack.c.l.b16 %v671
      %v960 = vunpack.c.l.b16 %v672
      %v961 = vunpack.c.l.b16 %v673
      %v962 = vunpack.c.l.b16 %v674
      %v963 = vunpack.c.l.b16 %v675
      %v964 = vunpack.c.l.b16 %v676
      %v965 = vunpack.c.l.b16 %v677
      %v966 = vunpack.c.l.b16 %v678
      %v967 = vunpack.c.l.b16 %v679
      %v968 = vunpack.c.l.b16 %v680
      %v969 = vunpack.c.l.b16 %v681
      %v970 = vunpack.c.l.b16 %v682
      %v971 = vunpack.c.l.b16 %v683
      %v972 = vunpack.c.l.b16 %v684
      %v973 = vunpack.c.l.b16 %v685
      %v974 = vunpack.c.l.b16 %v686
      %v975 = vunpack.c.l.b16 %v687
      %v976 = vunpack.c.l.b16 %v688
      %v977 = vunpack.c.l.b16 %v689
      %v978 = vunpack.c.l.b16 %v690
      %v979 = vunpack.c.l.b16 %v691
      %v980 = vunpack.c.l.b16 %v692
      %v981 = vunpack.c.l.b16 %v693
      %v982 = vunpack.c.l.b16 %v694
      %v983 = vunpack.c.l.b16 %v695
      %v984 = vunpack.c.l.b16 %v696
      %v985 = vunpack.c.l.b16 %v697
      %v986 = vunpack.c.l.b16 %v698
      %v987 = vunpack.c.l.b16 %v699
      %v988 = vunpack.c.l.b16 %v700
      %v989 = vunpack.c.l.b16 %v701
      %v990 = vunpack.c.l.b16 %v702
      %v991 = vunpack.c.l.b16 %v703
      %v992 = vunpack.c.l.b16 %v704
      %v993 = vunpack.c.l.b16 %v705
      %v994 = vunpack.c.l.b16 %v706
      %v995 = vunpack.c.l.b16 %v707
      %v996 = vunpack.c.l.b16 %v708
      %v997 = vunpack.c.l.b16 %v709
      %v998 = vunpack.c.l.b16 %v710
      %v999 = vunpack.c.l.b16 %v711
      %v1000 = vunpack.c.l.b16 %v712
      %v1001 = vunpack.c.l.b16 %v713
      %v1002 = vunpack.c.l.b16 %v714
      %v1003 = vunpack.c.l.b16 %v715
      %v1004 = vunpack.c.l.b16 %v716
      %v1005 = vunpack.c.l.b16 %v717
      %v1006 = vunpack.c.l.b16 %v718
      %v1007 = vunpack.c.l.b16 %v719
      %v1008 = vunpack.c.l.b16 %v720
      %v1009 = vunpack.c.l.b16 %v721
      %v1010 = vunpack.c.l.b16 %v722
      %v1011 = vunpack.c.l.b16 %v723
      %v1012 = vunpack.c.l.b16 %v724
      %v1013 = vunpack.c.l.b16 %v725
      %v1014 = vunpack.c.l.b16 %v726
      %v1015 = vunpack.c.l.b16 %v727
      %v1016 = vunpack.c.l.b16 %v728
      %v1017 = vunpack.c.l.b16 %v729
      %v1018 = vunpack.c.l.b16 %v730
      %v1019 = vunpack.c.l.b16 %v731
      %v1020 = vunpack.c.l.b16 %v732
      %v1021 = vunpack.c.l.b16 %v733
      %v1022 = vunpack.c.l.b16 %v734
      %v1023 = vunpack.c.l.b16 %v735
      %v1024 = vunpack.c.l.b16 %v736
      %v1025 = vunpack.c.l.b16 %v737
      %v1026 = vunpack.c.l.b16 %v738
      %v1027 = vunpack.c.l.b16 %v739
      %v1028 = vunpack.c.l.b16 %v740
      %v1029 = vunpack.c.l.b16 %v741
      %v1030 = vunpack.c.l.b16 %v742
      %v1031 = vpack.c.b16 %v888, %v887
      %v1032 = vpack.c.b16 %v890, %v889
      %v1033 = vpack.c.b16 %v892, %v891
      %v1034 = vpack.c.b16 %v894, %v893
      %v1035 = vpack.c.b16 %v896, %v895
      %v1036 = vpack.c.b16 %v898, %v897
      %v1037 = vpack.c.b16 %v900, %v899
      %v1038 = vpack.c.b16 %v902, %v901
      %v1039 = vpack.c.b16 %v904, %v903
      %v1040 = vpack.c.b16 %v906, %v905
      %v1041 = vpack.c.b16 %v908, %v907
      %v1042 = vpack.c.b16 %v910, %v909
      %v1043 = vpack.c.b16 %v912, %v911
      %v1044 = vpack.c.b16 %v914, %v913
      %v1045 = vpack.c.b16 %v916, %v915
      %v1046 = vpack.c.b16 %v918, %v917
      %v1047 = vpack.c.b16 %v920, %v919
      %v1048 = vpack.c.b16 %v922, %v921
      %v1049 = vpack.c.b16 %v924, %v923
      %v1050 = vpack.c.b16 %v926, %v925
      %v1051 = vpack.c.b16 %v928, %v927
      %v1052 = vpack.c.b16 %v930, %v929
      %v1053 = vpack.c.b16 %v932, %v931
      %v1054 = vpack.c.b16 %v934, %v933
      %v1055 = vpack.c.b16 %v936, %v935
      %v1056 = vpack.c.b16 %v938, %v937
      %v1057 = vpack.c.b16 %v940, %v939
      %v1058 = vpack.c.b16 %v942, %v941
      %v1059 = vpack.c.b16 %v944, %v943
      %v1060 = vpack.c.b16 %v946, %v945
      %v1061 = vpack.c.b16 %v948, %v947
      %v1062 = vpack.c.b16 %v950, %v949
      %v1063 = vpack.c.b16 %v952, %v951
      %v1064 = vpack.c.b16 %v954, %v953
      %v1065 = vpack.c.b16 %v956, %v955
      %v1066 = vpack.c.b16 %v958, %v957
      %v1067 = vpack.c.b16 %v960, %v959
      %v1068 = vpack.c.b16 %v962, %v961
      %v1069 = vpack.c.b16 %v964, %v963
      %v1070 = vpack.c.b16 %v966, %v965
      %v1071 = vpack.c.b16 %v968, %v967
      %v1072 = vpack.c.b16 %v970, %v969
      %v1073 = vpack.c.b16 %v972, %v971
      %v1074 = vpack.c.b16 %v974, %v973
      %v1075 = vpack.c.b16 %v976, %v975
      %v1076 = vpack.c.b16 %v978, %v977
      %v1077 = vpack.c.b16 %v980, %v979
      %v1078 = vpack.c.b16 %v982, %v981
      %v1079 = vpack.c.b16 %v984, %v983
      %v1080 = vpack.c.b16 %v986, %v985
      %v1081 = vpack.c.b16 %v988, %v987
      %v1082 = vpack.c.b16 %v990, %v989
      %v1083 = vpack.c.b16 %v992, %v991
      %v1084 = vpack.c.b16 %v994, %v993
      %v1085 = vpack.c.b16 %v996, %v995
      %v1086 = vpack.c.b16 %v998, %v997
      %v1087 = vpack.c.b16 %v1000, %v999
      %v1088 = vpack.c.b16 %v1002, %v1001
      %v1089 = vpack.c.b16 %v1004, %v1003
      %v1090 = vpack.c.b16 %v1006, %v1005
      %v1091 = vpack.c.b16 %v1008, %v1007
      %v1092 = vpack.c.b16 %v1010, %v1009
      %v1093 = vpack.c.b16 %v1012, %v1011
      %v1094 = vpack.c.b16 %v1014, %v1013
      %v1095 = vpack.c.b16 %v1016, %v1015
      %v1096 = vpack.c.b16 %v1018, %v1017
      %v1097 = vpack.c.b16 %v1020, %v1019
      %v1098 = vpack.c.b16 %v1022, %v1021
      %v1099 = vpack.c.b16 %v1024, %v1023
      %v1100 = vpack.c.b16 %v1026, %v1025
      %v1101 = vpack.c.b16 %v1028, %v1027
      %v1102 = vpack.c.b16 %v1030, %v1029
      %1175 = vmatprep.subr.bf16.mxu0 0
      %1176 = vmatpush1.bf16.msra.mxu0 %v1038
      %1177 = vmatprep.subr.bf16.mxu0 0
      %1178 = vmatpush1.bf16.msra.mxu0 %v1037
      %1179 = vmatprep.subr.bf16.mxu0 0
      %1180 = vmatpush1.bf16.msra.mxu0 %v1036
      %1181 = vmatprep.subr.bf16.mxu0 0
      %1182 = vmatpush1.bf16.msra.mxu0 %v1035
      %1183 = vmatprep.subr.bf16.mxu0 0
      %1184 = vmatpush1.bf16.msra.mxu0 %v1034
      %1185 = vmatprep.subr.bf16.mxu0 0
      %1186 = vmatpush1.bf16.msra.mxu0 %v1033
      %1187 = vmatprep.subr.bf16.mxu0 0
      %1188 = vmatpush1.bf16.msra.mxu0 %v1032
      %1189 = vmatprep.subr.bf16.mxu0 0
      %1190 = vmatpush1.bf16.msra.mxu0 %v1031
      %1191 = vmatprep.subr.bf16.mxu0 0
      %1192 = vmatpush2.bf16.msra.mxu0 %v1046
      %1193 = vmatprep.subr.bf16.mxu0 0
      %1194 = vmatpush2.bf16.msra.mxu0 %v1045
      %1195 = vmatprep.subr.bf16.mxu0 0
      %1196 = vmatpush2.bf16.msra.mxu0 %v1044
      %1197 = vmatprep.subr.bf16.mxu0 0
      %1198 = vmatpush2.bf16.msra.mxu0 %v1043
      %1199 = vmatprep.subr.bf16.mxu0 0
      %1200 = vmatpush2.bf16.msra.mxu0 %v1042
      %1201 = vmatprep.subr.bf16.mxu0 0
      %1202 = vmatpush2.bf16.msra.mxu0 %v1041
      %1203 = vmatprep.subr.bf16.mxu0 0
      %1204 = vmatpush2.bf16.msra.mxu0 %v1040
      %1205 = vmatprep.subr.bf16.mxu0 0
      %1206 = vmatpush2.bf16.msra.mxu0 %v1039
      %1207 = vmatprep.mubr.bf16.mxu0 %v546
      %1208 = vmatmul.mubr.bf16.gmra.mxu0 %v545
      %v1209 = vpop.f32.mrf.mxu0
      %v1210 = vadd.f32 0.0, %v1209
      %v1211 = vpop.f32.mrf.mxu0
      %v1212 = vpop.f32.mrf.mxu0
      %v1213 = vadd.f32 0.0, %v1212
      %v1214 = vpop.f32.mrf.mxu0
      %1215 = vmatprep.mubr.bf16.mxu0 %v549
      %1216 = vmatmul.mubr.bf16.gmra.mxu0 %v548
      %v1217 = vpop.f32.mrf.mxu0
      %v1218 = vadd.f32 0.0, %v1217
      %v1219 = vpop.f32.mrf.mxu0
      %v1220 = vpop.f32.mrf.mxu0
      %v1221 = vadd.f32 0.0, %v1220
      %v1222 = vpop.f32.mrf.mxu0
      %1223 = vmatprep.mubr.bf16.mxu0 %v552
      %1224 = vmatmul.mubr.bf16.gmra.mxu0 %v551
      %v1225 = vpop.f32.mrf.mxu0
      %v1226 = vadd.f32 0.0, %v1225
      %v1227 = vpop.f32.mrf.mxu0
      %v1228 = vpop.f32.mrf.mxu0
      %v1229 = vadd.f32 0.0, %v1228
      %v1230 = vpop.f32.mrf.mxu0
      %1231 = vmatprep.mubr.bf16.mxu0 %v555
      %1232 = vmatmul.mubr.bf16.gmra.mxu0 %v554
      %v1233 = vpop.f32.mrf.mxu0
      %v1234 = vadd.f32 0.0, %v1233
      %v1235 = vpop.f32.mrf.mxu0
      %v1236 = vpop.f32.mrf.mxu0
      %v1237 = vadd.f32 0.0, %v1236
      %v1238 = vpop.f32.mrf.mxu0
      %1239 = vmatprep.mubr.bf16.mxu0 %v558
      %1240 = vmatmul.mubr.bf16.gmra.mxu0 %v557
      %v1241 = vpop.f32.mrf.mxu0
      %v1242 = vadd.f32 0.0, %v1241
      %v1243 = vpop.f32.mrf.mxu0
      %v1244 = vpop.f32.mrf.mxu0
      %v1245 = vadd.f32 0.0, %v1244
      %v1246 = vpop.f32.mrf.mxu0
      %1247 = vmatprep.mubr.bf16.mxu0 %v561
      %1248 = vmatmul.mubr.bf16.gmra.mxu0 %v560
      %v1249 = vpop.f32.mrf.mxu0
      %v1250 = vadd.f32 0.0, %v1249
      %v1251 = vpop.f32.mrf.mxu0
      %v1252 = vpop.f32.mrf.mxu0
      %v1253 = vadd.f32 0.0, %v1252
      %v1254 = vpop.f32.mrf.mxu0
      %1255 = vmatprep.mubr.bf16.mxu0 %v564
      %1256 = vmatmul.mubr.bf16.gmra.mxu0 %v563
      %v1257 = vpop.f32.mrf.mxu0
      %v1258 = vadd.f32 0.0, %v1257
      %v1259 = vpop.f32.mrf.mxu0
      %v1260 = vpop.f32.mrf.mxu0
      %v1261 = vadd.f32 0.0, %v1260
      %v1262 = vpop.f32.mrf.mxu0
      %1263 = vmatprep.mubr.bf16.mxu0 %v567
      %1264 = vmatmul.mubr.bf16.gmra.mxu0 %v566
      %v1265 = vpop.f32.mrf.mxu0
      %v1266 = vadd.f32 0.0, %v1265
      %v1267 = vpop.f32.mrf.mxu0
      %v1268 = vpop.f32.mrf.mxu0
      %v1269 = vadd.f32 0.0, %v1268
      %v1270 = vpop.f32.mrf.mxu0
      %1271 = vmatprep.mubr.bf16.mxu0 %v570
      %1272 = vmatmul.mubr.bf16.gmra.mxu0 %v569
      %v1273 = vpop.f32.mrf.mxu0
      %v1274 = vadd.f32 0.0, %v1273
      %v1275 = vpop.f32.mrf.mxu0
      %v1276 = vpop.f32.mrf.mxu0
      %v1277 = vadd.f32 0.0, %v1276
      %v1278 = vpop.f32.mrf.mxu0
      %1279 = vmatprep.mubr.bf16.mxu0 %v573
      %1280 = vmatmul.mubr.bf16.gmra.mxu0 %v572
      %v1281 = vpop.f32.mrf.mxu0
      %v1282 = vadd.f32 0.0, %v1281
      %v1283 = vpop.f32.mrf.mxu0
      %v1284 = vpop.f32.mrf.mxu0
      %v1285 = vadd.f32 0.0, %v1284
      %v1286 = vpop.f32.mrf.mxu0
      %1287 = vmatprep.mubr.bf16.mxu0 %v576
      %1288 = vmatmul.mubr.bf16.gmra.mxu0 %v575
      %v1289 = vpop.f32.mrf.mxu0
      %v1290 = vadd.f32 0.0, %v1289
      %v1291 = vpop.f32.mrf.mxu0
      %v1292 = vpop.f32.mrf.mxu0
      %v1293 = vadd.f32 0.0, %v1292
      %v1294 = vpop.f32.mrf.mxu0
      %1295 = vmatprep.mubr.bf16.mxu0 %v579
      %1296 = vmatmul.mubr.bf16.gmra.mxu0 %v578
      %v1297 = vpop.f32.mrf.mxu0
      %v1298 = vadd.f32 0.0, %v1297
      %v1299 = vpop.f32.mrf.mxu0
      %v1300 = vpop.f32.mrf.mxu0
      %v1301 = vadd.f32 0.0, %v1300
      %v1302 = vpop.f32.mrf.mxu0
      %1303 = vmatprep.mubr.bf16.mxu0 %v582
      %1304 = vmatmul.mubr.bf16.gmra.mxu0 %v581
      %v1305 = vpop.f32.mrf.mxu0
      %v1306 = vadd.f32 0.0, %v1305
      %v1307 = vpop.f32.mrf.mxu0
      %v1308 = vpop.f32.mrf.mxu0
      %v1309 = vadd.f32 0.0, %v1308
      %v1310 = vpop.f32.mrf.mxu0
      %1311 = vmatprep.mubr.bf16.mxu0 %v585
      %1312 = vmatmul.mubr.bf16.gmra.mxu0 %v584
      %v1313 = vpop.f32.mrf.mxu0
      %v1314 = vadd.f32 0.0, %v1313
      %v1315 = vpop.f32.mrf.mxu0
      %v1316 = vpop.f32.mrf.mxu0
      %v1317 = vadd.f32 0.0, %v1316
      %v1318 = vpop.f32.mrf.mxu0
      %1319 = vmatprep.mubr.bf16.mxu0 %v588
      %1320 = vmatmul.mubr.bf16.gmra.mxu0 %v587
      %v1321 = vpop.f32.mrf.mxu0
      %v1322 = vadd.f32 0.0, %v1321
      %v1323 = vpop.f32.mrf.mxu0
      %v1324 = vpop.f32.mrf.mxu0
      %v1325 = vadd.f32 0.0, %v1324
      %v1326 = vpop.f32.mrf.mxu0
      %1327 = vmatprep.mubr.bf16.mxu0 %v591
      %1328 = vmatmul.mubr.bf16.gmra.mxu0 %v590
      %v1329 = vpop.f32.mrf.mxu0
      %v1330 = vadd.f32 0.0, %v1329
      %v1331 = vpop.f32.mrf.mxu0
      %v1332 = vpop.f32.mrf.mxu0
      %v1333 = vadd.f32 0.0, %v1332
      %v1334 = vpop.f32.mrf.mxu0
      %1335 = vdwg.mxu0
      %1336 = vmatprep.subr.bf16.mxu0 0
      %1337 = vmatpush1.bf16.msra.mxu0 %v1054
      %1338 = vmatprep.subr.bf16.mxu0 0
      %1339 = vmatpush1.bf16.msra.mxu0 %v1053
      %1340 = vmatprep.subr.bf16.mxu0 0
      %1341 = vmatpush1.bf16.msra.mxu0 %v1052
      %1342 = vmatprep.subr.bf16.mxu0 0
      %1343 = vmatpush1.bf16.msra.mxu0 %v1051
      %1344 = vmatprep.subr.bf16.mxu0 0
      %1345 = vmatpush1.bf16.msra.mxu0 %v1050
      %1346 = vmatprep.subr.bf16.mxu0 0
      %1347 = vmatpush1.bf16.msra.mxu0 %v1049
      %1348 = vmatprep.subr.bf16.mxu0 0
      %1349 = vmatpush1.bf16.msra.mxu0 %v1048
      %1350 = vmatprep.subr.bf16.mxu0 0
      %1351 = vmatpush1.bf16.msra.mxu0 %v1047
      %1352 = vmatprep.subr.bf16.mxu0 0
      %1353 = vmatpush2.bf16.msra.mxu0 %v1062
      %1354 = vmatprep.subr.bf16.mxu0 0
      %1355 = vmatpush2.bf16.msra.mxu0 %v1061
      %1356 = vmatprep.subr.bf16.mxu0 0
      %1357 = vmatpush2.bf16.msra.mxu0 %v1060
      %1358 = vmatprep.subr.bf16.mxu0 0
      %1359 = vmatpush2.bf16.msra.mxu0 %v1059
      %1360 = vmatprep.subr.bf16.mxu0 0
      %1361 = vmatpush2.bf16.msra.mxu0 %v1058
      %1362 = vmatprep.subr.bf16.mxu0 0
      %1363 = vmatpush2.bf16.msra.mxu0 %v1057
      %1364 = vmatprep.subr.bf16.mxu0 0
      %1365 = vmatpush2.bf16.msra.mxu0 %v1056
      %1366 = vmatprep.subr.bf16.mxu0 0
      %1367 = vmatpush2.bf16.msra.mxu0 %v1055
      %1368 = vmatprep.mubr.bf16.mxu0 %v548
      %1369 = vmatmul.mubr.bf16.gmra.mxu0 %v547
      %v1370 = vpop.f32.mrf.mxu0
      %v1371 = vadd.f32 %v1210, %v1370
      %v1372 = vpop.f32.mrf.mxu0
      %v1373 = vpop.f32.mrf.mxu0
      %v1374 = vadd.f32 %v1213, %v1373
      %v1375 = vpop.f32.mrf.mxu0
      %1376 = vmatprep.mubr.bf16.mxu0 %v551
      %1377 = vmatmul.mubr.bf16.gmra.mxu0 %v550
      %v1378 = vpop.f32.mrf.mxu0
      %v1379 = vadd.f32 %v1218, %v1378
      %v1380 = vpop.f32.mrf.mxu0
      %v1381 = vpop.f32.mrf.mxu0
      %v1382 = vadd.f32 %v1221, %v1381
      %v1383 = vpop.f32.mrf.mxu0
      %1384 = vmatprep.mubr.bf16.mxu0 %v554
      %1385 = vmatmul.mubr.bf16.gmra.mxu0 %v553
      %v1386 = vpop.f32.mrf.mxu0
      %v1387 = vadd.f32 %v1226, %v1386
      %v1388 = vpop.f32.mrf.mxu0
      %v1389 = vpop.f32.mrf.mxu0
      %v1390 = vadd.f32 %v1229, %v1389
      %v1391 = vpop.f32.mrf.mxu0
      %1392 = vmatprep.mubr.bf16.mxu0 %v557
      %1393 = vmatmul.mubr.bf16.gmra.mxu0 %v556
      %v1394 = vpop.f32.mrf.mxu0
      %v1395 = vadd.f32 %v1234, %v1394
      %v1396 = vpop.f32.mrf.mxu0
      %v1397 = vpop.f32.mrf.mxu0
      %v1398 = vadd.f32 %v1237, %v1397
      %v1399 = vpop.f32.mrf.mxu0
      %1400 = vmatprep.mubr.bf16.mxu0 %v560
      %1401 = vmatmul.mubr.bf16.gmra.mxu0 %v559
      %v1402 = vpop.f32.mrf.mxu0
      %v1403 = vadd.f32 %v1242, %v1402
      %v1404 = vpop.f32.mrf.mxu0
      %v1405 = vpop.f32.mrf.mxu0
      %v1406 = vadd.f32 %v1245, %v1405
      %v1407 = vpop.f32.mrf.mxu0
      %1408 = vmatprep.mubr.bf16.mxu0 %v563
      %1409 = vmatmul.mubr.bf16.gmra.mxu0 %v562
      %v1410 = vpop.f32.mrf.mxu0
      %v1411 = vadd.f32 %v1250, %v1410
      %v1412 = vpop.f32.mrf.mxu0
      %v1413 = vpop.f32.mrf.mxu0
      %v1414 = vadd.f32 %v1253, %v1413
      %v1415 = vpop.f32.mrf.mxu0
      %1416 = vmatprep.mubr.bf16.mxu0 %v566
      %1417 = vmatmul.mubr.bf16.gmra.mxu0 %v565
      %v1418 = vpop.f32.mrf.mxu0
      %v1419 = vadd.f32 %v1258, %v1418
      %v1420 = vpop.f32.mrf.mxu0
      %v1421 = vpop.f32.mrf.mxu0
      %v1422 = vadd.f32 %v1261, %v1421
      %v1423 = vpop.f32.mrf.mxu0
      %1424 = vmatprep.mubr.bf16.mxu0 %v569
      %1425 = vmatmul.mubr.bf16.gmra.mxu0 %v568
      %v1426 = vpop.f32.mrf.mxu0
      %v1427 = vadd.f32 %v1266, %v1426
      %v1428 = vpop.f32.mrf.mxu0
      %v1429 = vpop.f32.mrf.mxu0
      %v1430 = vadd.f32 %v1269, %v1429
      %v1431 = vpop.f32.mrf.mxu0
      %1432 = vmatprep.mubr.bf16.mxu0 %v572
      %1433 = vmatmul.mubr.bf16.gmra.mxu0 %v571
      %v1434 = vpop.f32.mrf.mxu0
      %v1435 = vadd.f32 %v1274, %v1434
      %v1436 = vpop.f32.mrf.mxu0
      %v1437 = vpop.f32.mrf.mxu0
      %v1438 = vadd.f32 %v1277, %v1437
      %v1439 = vpop.f32.mrf.mxu0
      %1440 = vmatprep.mubr.bf16.mxu0 %v575
      %1441 = vmatmul.mubr.bf16.gmra.mxu0 %v574
      %v1442 = vpop.f32.mrf.mxu0
      %v1443 = vadd.f32 %v1282, %v1442
      %v1444 = vpop.f32.mrf.mxu0
      %v1445 = vpop.f32.mrf.mxu0
      %v1446 = vadd.f32 %v1285, %v1445
      %v1447 = vpop.f32.mrf.mxu0
      %1448 = vmatprep.mubr.bf16.mxu0 %v578
      %1449 = vmatmul.mubr.bf16.gmra.mxu0 %v577
      %v1450 = vpop.f32.mrf.mxu0
      %v1451 = vadd.f32 %v1290, %v1450
      %v1452 = vpop.f32.mrf.mxu0
      %v1453 = vpop.f32.mrf.mxu0
      %v1454 = vadd.f32 %v1293, %v1453
      %v1455 = vpop.f32.mrf.mxu0
      %1456 = vmatprep.mubr.bf16.mxu0 %v581
      %1457 = vmatmul.mubr.bf16.gmra.mxu0 %v580
      %v1458 = vpop.f32.mrf.mxu0
      %v1459 = vadd.f32 %v1298, %v1458
      %v1460 = vpop.f32.mrf.mxu0
      %v1461 = vpop.f32.mrf.mxu0
      %v1462 = vadd.f32 %v1301, %v1461
      %v1463 = vpop.f32.mrf.mxu0
      %1464 = vmatprep.mubr.bf16.mxu0 %v584
      %1465 = vmatmul.mubr.bf16.gmra.mxu0 %v583
      %v1466 = vpop.f32.mrf.mxu0
      %v1467 = vadd.f32 %v1306, %v1466
      %v1468 = vpop.f32.mrf.mxu0
      %v1469 = vpop.f32.mrf.mxu0
      %v1470 = vadd.f32 %v1309, %v1469
      %v1471 = vpop.f32.mrf.mxu0
      %1472 = vmatprep.mubr.bf16.mxu0 %v587
      %1473 = vmatmul.mubr.bf16.gmra.mxu0 %v586
      %v1474 = vpop.f32.mrf.mxu0
      %v1475 = vadd.f32 %v1314, %v1474
      %v1476 = vpop.f32.mrf.mxu0
      %v1477 = vpop.f32.mrf.mxu0
      %v1478 = vadd.f32 %v1317, %v1477
      %v1479 = vpop.f32.mrf.mxu0
      %1480 = vmatprep.mubr.bf16.mxu0 %v590
      %1481 = vmatmul.mubr.bf16.gmra.mxu0 %v589
      %v1482 = vpop.f32.mrf.mxu0
      %v1483 = vadd.f32 %v1322, %v1482
      %v1484 = vpop.f32.mrf.mxu0
      %v1485 = vpop.f32.mrf.mxu0
      %v1486 = vadd.f32 %v1325, %v1485
      %v1487 = vpop.f32.mrf.mxu0
      %1488 = vmatprep.mubr.bf16.mxu0 %v593
      %1489 = vmatmul.mubr.bf16.gmra.mxu0 %v592
      %v1490 = vpop.f32.mrf.mxu0
      %v1491 = vadd.f32 %v1330, %v1490
      %v1492 = vpop.f32.mrf.mxu0
      %v1493 = vpop.f32.mrf.mxu0
      %v1494 = vadd.f32 %v1333, %v1493
      %v1495 = vpop.f32.mrf.mxu0
      %1496 = vdwg.mxu0
      %1497 = vmatprep.subr.bf16.mxu0 0
      %1498 = vmatpush1.bf16.msra.mxu0 %v1070
      %1499 = vmatprep.subr.bf16.mxu0 0
      %1500 = vmatpush1.bf16.msra.mxu0 %v1069
      %1501 = vmatprep.subr.bf16.mxu0 0
      %1502 = vmatpush1.bf16.msra.mxu0 %v1068
      %1503 = vmatprep.subr.bf16.mxu0 0
      %1504 = vmatpush1.bf16.msra.mxu0 %v1067
      %1505 = vmatprep.subr.bf16.mxu0 0
      %1506 = vmatpush1.bf16.msra.mxu0 %v1066
      %1507 = vmatprep.subr.bf16.mxu0 0
      %1508 = vmatpush1.bf16.msra.mxu0 %v1065
      %1509 = vmatprep.subr.bf16.mxu0 0
      %1510 = vmatpush1.bf16.msra.mxu0 %v1064
      %1511 = vmatprep.subr.bf16.mxu0 0
      %1512 = vmatpush1.bf16.msra.mxu0 %v1063
      %1513 = vmatprep.subr.bf16.mxu0 0
      %1514 = vmatpush2.bf16.msra.mxu0 %v1078
      %1515 = vmatprep.subr.bf16.mxu0 0
      %1516 = vmatpush2.bf16.msra.mxu0 %v1077
      %1517 = vmatprep.subr.bf16.mxu0 0
      %1518 = vmatpush2.bf16.msra.mxu0 %v1076
      %1519 = vmatprep.subr.bf16.mxu0 0
      %1520 = vmatpush2.bf16.msra.mxu0 %v1075
      %1521 = vmatprep.subr.bf16.mxu0 0
      %1522 = vmatpush2.bf16.msra.mxu0 %v1074
      %1523 = vmatprep.subr.bf16.mxu0 0
      %1524 = vmatpush2.bf16.msra.mxu0 %v1073
      %1525 = vmatprep.subr.bf16.mxu0 0
      %1526 = vmatpush2.bf16.msra.mxu0 %v1072
      %1527 = vmatprep.subr.bf16.mxu0 0
      %1528 = vmatpush2.bf16.msra.mxu0 %v1071
      %1529 = vmatprep.mubr.bf16.mxu0 %v550
      %1530 = vmatmul.mubr.bf16.gmra.mxu0 %v549
      %v1531 = vpop.f32.mrf.mxu0
      %v1532 = vadd.f32 %v1371, %v1531
      %v1533 = vpop.f32.mrf.mxu0
      %v1534 = vpop.f32.mrf.mxu0
      %v1535 = vadd.f32 %v1374, %v1534
      %v1536 = vpop.f32.mrf.mxu0
      %1537 = vmatprep.mubr.bf16.mxu0 %v553
      %1538 = vmatmul.mubr.bf16.gmra.mxu0 %v552
      %v1539 = vpop.f32.mrf.mxu0
      %v1540 = vadd.f32 %v1379, %v1539
      %v1541 = vpop.f32.mrf.mxu0
      %v1542 = vpop.f32.mrf.mxu0
      %v1543 = vadd.f32 %v1382, %v1542
      %v1544 = vpop.f32.mrf.mxu0
      %1545 = vmatprep.mubr.bf16.mxu0 %v556
      %1546 = vmatmul.mubr.bf16.gmra.mxu0 %v555
      %v1547 = vpop.f32.mrf.mxu0
      %v1548 = vadd.f32 %v1387, %v1547
      %v1549 = vpop.f32.mrf.mxu0
      %v1550 = vpop.f32.mrf.mxu0
      %v1551 = vadd.f32 %v1390, %v1550
      %v1552 = vpop.f32.mrf.mxu0
      %1553 = vmatprep.mubr.bf16.mxu0 %v559
      %1554 = vmatmul.mubr.bf16.gmra.mxu0 %v558
      %v1555 = vpop.f32.mrf.mxu0
      %v1556 = vadd.f32 %v1395, %v1555
      %v1557 = vpop.f32.mrf.mxu0
      %v1558 = vpop.f32.mrf.mxu0
      %v1559 = vadd.f32 %v1398, %v1558
      %v1560 = vpop.f32.mrf.mxu0
      %1561 = vmatprep.mubr.bf16.mxu0 %v562
      %1562 = vmatmul.mubr.bf16.gmra.mxu0 %v561
      %v1563 = vpop.f32.mrf.mxu0
      %v1564 = vadd.f32 %v1403, %v1563
      %v1565 = vpop.f32.mrf.mxu0
      %v1566 = vpop.f32.mrf.mxu0
      %v1567 = vadd.f32 %v1406, %v1566
      %v1568 = vpop.f32.mrf.mxu0
      %1569 = vmatprep.mubr.bf16.mxu0 %v565
      %1570 = vmatmul.mubr.bf16.gmra.mxu0 %v564
      %v1571 = vpop.f32.mrf.mxu0
      %v1572 = vadd.f32 %v1411, %v1571
      %v1573 = vpop.f32.mrf.mxu0
      %v1574 = vpop.f32.mrf.mxu0
      %v1575 = vadd.f32 %v1414, %v1574
      %v1576 = vpop.f32.mrf.mxu0
      %1577 = vmatprep.mubr.bf16.mxu0 %v568
      %1578 = vmatmul.mubr.bf16.gmra.mxu0 %v567
      %v1579 = vpop.f32.mrf.mxu0
      %v1580 = vadd.f32 %v1419, %v1579
      %v1581 = vpop.f32.mrf.mxu0
      %v1582 = vpop.f32.mrf.mxu0
      %v1583 = vadd.f32 %v1422, %v1582
      %v1584 = vpop.f32.mrf.mxu0
      %1585 = vmatprep.mubr.bf16.mxu0 %v571
      %1586 = vmatmul.mubr.bf16.gmra.mxu0 %v570
      %v1587 = vpop.f32.mrf.mxu0
      %v1588 = vadd.f32 %v1427, %v1587
      %v1589 = vpop.f32.mrf.mxu0
      %v1590 = vpop.f32.mrf.mxu0
      %v1591 = vadd.f32 %v1430, %v1590
      %v1592 = vpop.f32.mrf.mxu0
      %1593 = vmatprep.mubr.bf16.mxu0 %v574
      %1594 = vmatmul.mubr.bf16.gmra.mxu0 %v573
      %v1595 = vpop.f32.mrf.mxu0
      %v1596 = vadd.f32 %v1435, %v1595
      %v1597 = vpop.f32.mrf.mxu0
      %v1598 = vpop.f32.mrf.mxu0
      %v1599 = vadd.f32 %v1438, %v1598
      %v1600 = vpop.f32.mrf.mxu0
      %1601 = vmatprep.mubr.bf16.mxu0 %v577
      %1602 = vmatmul.mubr.bf16.gmra.mxu0 %v576
      %v1603 = vpop.f32.mrf.mxu0
      %v1604 = vadd.f32 %v1443, %v1603
      %v1605 = vpop.f32.mrf.mxu0
      %v1606 = vpop.f32.mrf.mxu0
      %v1607 = vadd.f32 %v1446, %v1606
      %v1608 = vpop.f32.mrf.mxu0
      %1609 = vmatprep.mubr.bf16.mxu0 %v580
      %1610 = vmatmul.mubr.bf16.gmra.mxu0 %v579
      %v1611 = vpop.f32.mrf.mxu0
      %v1612 = vadd.f32 %v1451, %v1611
      %v1613 = vpop.f32.mrf.mxu0
      %v1614 = vpop.f32.mrf.mxu0
      %v1615 = vadd.f32 %v1454, %v1614
      %v1616 = vpop.f32.mrf.mxu0
      %1617 = vmatprep.mubr.bf16.mxu0 %v583
      %1618 = vmatmul.mubr.bf16.gmra.mxu0 %v582
      %v1619 = vpop.f32.mrf.mxu0
      %v1620 = vadd.f32 %v1459, %v1619
      %v1621 = vpop.f32.mrf.mxu0
      %v1622 = vpop.f32.mrf.mxu0
      %v1623 = vadd.f32 %v1462, %v1622
      %v1624 = vpop.f32.mrf.mxu0
      %1625 = vmatprep.mubr.bf16.mxu0 %v586
      %1626 = vmatmul.mubr.bf16.gmra.mxu0 %v585
      %v1627 = vpop.f32.mrf.mxu0
      %v1628 = vadd.f32 %v1467, %v1627
      %v1629 = vpop.f32.mrf.mxu0
      %v1630 = vpop.f32.mrf.mxu0
      %v1631 = vadd.f32 %v1470, %v1630
      %v1632 = vpop.f32.mrf.mxu0
      %1633 = vmatprep.mubr.bf16.mxu0 %v589
      %1634 = vmatmul.mubr.bf16.gmra.mxu0 %v588
      %v1635 = vpop.f32.mrf.mxu0
      %v1636 = vadd.f32 %v1475, %v1635
      %v1637 = vpop.f32.mrf.mxu0
      %v1638 = vpop.f32.mrf.mxu0
      %v1639 = vadd.f32 %v1478, %v1638
      %v1640 = vpop.f32.mrf.mxu0
      %1641 = vmatprep.mubr.bf16.mxu0 %v592
      %1642 = vmatmul.mubr.bf16.gmra.mxu0 %v591
      %v1643 = vpop.f32.mrf.mxu0
      %v1644 = vadd.f32 %v1483, %v1643
      %v1645 = vpop.f32.mrf.mxu0
      %v1646 = vpop.f32.mrf.mxu0
      %v1647 = vadd.f32 %v1486, %v1646
      %v1648 = vpop.f32.mrf.mxu0
      %1649 = vmatprep.mubr.bf16.mxu0 %v595
      %1650 = vmatmul.mubr.bf16.gmra.mxu0 %v594
      %v1651 = vpop.f32.mrf.mxu0
      %v1652 = vadd.f32 %v1491, %v1651
      %v1653 = vpop.f32.mrf.mxu0
      %v1654 = vpop.f32.mrf.mxu0
      %v1655 = vadd.f32 %v1494, %v1654
      %v1656 = vpop.f32.mrf.mxu0
      %1657 = vdwg.mxu0
      %1658 = vmatprep.subr.bf16.mxu0 0
      %1659 = vmatpush1.bf16.msra.mxu0 %v1086
      %1660 = vmatprep.subr.bf16.mxu0 0
      %1661 = vmatpush1.bf16.msra.mxu0 %v1085
      %1662 = vmatprep.subr.bf16.mxu0 0
      %1663 = vmatpush1.bf16.msra.mxu0 %v1084
      %1664 = vmatprep.subr.bf16.mxu0 0
      %1665 = vmatpush1.bf16.msra.mxu0 %v1083
      %1666 = vmatprep.subr.bf16.mxu0 0
      %1667 = vmatpush1.bf16.msra.mxu0 %v1082
      %1668 = vmatprep.subr.bf16.mxu0 0
      %1669 = vmatpush1.bf16.msra.mxu0 %v1081
      %1670 = vmatprep.subr.bf16.mxu0 0
      %1671 = vmatpush1.bf16.msra.mxu0 %v1080
      %1672 = vmatprep.subr.bf16.mxu0 0
      %1673 = vmatpush1.bf16.msra.mxu0 %v1079
      %1674 = vmatprep.subr.bf16.mxu0 0
      %1675 = vmatpush2.bf16.msra.mxu0 %v1094
      %1676 = vmatprep.subr.bf16.mxu0 0
      %1677 = vmatpush2.bf16.msra.mxu0 %v1093
      %1678 = vmatprep.subr.bf16.mxu0 0
      %1679 = vmatpush2.bf16.msra.mxu0 %v1092
      %1680 = vmatprep.subr.bf16.mxu0 0
      %1681 = vmatpush2.bf16.msra.mxu0 %v1091
      %1682 = vmatprep.subr.bf16.mxu0 0
      %1683 = vmatpush2.bf16.msra.mxu0 %v1090
      %1684 = vmatprep.subr.bf16.mxu0 0
      %1685 = vmatpush2.bf16.msra.mxu0 %v1089
      %1686 = vmatprep.subr.bf16.mxu0 0
      %1687 = vmatpush2.bf16.msra.mxu0 %v1088
      %1688 = vmatprep.subr.bf16.mxu0 0
      %1689 = vmatpush2.bf16.msra.mxu0 %v1087
      %1690 = vmatprep.mubr.bf16.mxu0 %v552
      %1691 = vmatmul.mubr.bf16.gmra.mxu0 %v551
      %v1692 = vpop.f32.mrf.mxu0
      %v1693 = vadd.f32 %v1532, %v1692
      %v1694 = vpop.f32.mrf.mxu0
      %v1695 = vpop.f32.mrf.mxu0
      %v1696 = vadd.f32 %v1535, %v1695
      %v1697 = vpop.f32.mrf.mxu0
      %1698 = vmatprep.mubr.bf16.mxu0 %v555
      %1699 = vmatmul.mubr.bf16.gmra.mxu0 %v554
      %v1700 = vpop.f32.mrf.mxu0
      %v1701 = vadd.f32 %v1540, %v1700
      %v1702 = vpop.f32.mrf.mxu0
      %v1703 = vpop.f32.mrf.mxu0
      %v1704 = vadd.f32 %v1543, %v1703
      %v1705 = vpop.f32.mrf.mxu0
      %1706 = vmatprep.mubr.bf16.mxu0 %v558
      %1707 = vmatmul.mubr.bf16.gmra.mxu0 %v557
      %v1708 = vpop.f32.mrf.mxu0
      %v1709 = vadd.f32 %v1548, %v1708
      %v1710 = vpop.f32.mrf.mxu0
      %v1711 = vpop.f32.mrf.mxu0
      %v1712 = vadd.f32 %v1551, %v1711
      %v1713 = vpop.f32.mrf.mxu0
      %1714 = vmatprep.mubr.bf16.mxu0 %v561
      %1715 = vmatmul.mubr.bf16.gmra.mxu0 %v560
      %v1716 = vpop.f32.mrf.mxu0
      %v1717 = vadd.f32 %v1556, %v1716
      %v1718 = vpop.f32.mrf.mxu0
      %v1719 = vpop.f32.mrf.mxu0
      %v1720 = vadd.f32 %v1559, %v1719
      %v1721 = vpop.f32.mrf.mxu0
      %1722 = vmatprep.mubr.bf16.mxu0 %v564
      %1723 = vmatmul.mubr.bf16.gmra.mxu0 %v563
      %v1724 = vpop.f32.mrf.mxu0
      %v1725 = vadd.f32 %v1564, %v1724
      %v1726 = vpop.f32.mrf.mxu0
      %v1727 = vpop.f32.mrf.mxu0
      %v1728 = vadd.f32 %v1567, %v1727
      %v1729 = vpop.f32.mrf.mxu0
      %1730 = vmatprep.mubr.bf16.mxu0 %v567
      %1731 = vmatmul.mubr.bf16.gmra.mxu0 %v566
      %v1732 = vpop.f32.mrf.mxu0
      %v1733 = vadd.f32 %v1572, %v1732
      %v1734 = vpop.f32.mrf.mxu0
      %v1735 = vpop.f32.mrf.mxu0
      %v1736 = vadd.f32 %v1575, %v1735
      %v1737 = vpop.f32.mrf.mxu0
      %1738 = vmatprep.mubr.bf16.mxu0 %v570
      %1739 = vmatmul.mubr.bf16.gmra.mxu0 %v569
      %v1740 = vpop.f32.mrf.mxu0
      %v1741 = vadd.f32 %v1580, %v1740
      %v1742 = vpop.f32.mrf.mxu0
      %v1743 = vpop.f32.mrf.mxu0
      %v1744 = vadd.f32 %v1583, %v1743
      %v1745 = vpop.f32.mrf.mxu0
      %1746 = vmatprep.mubr.bf16.mxu0 %v573
      %1747 = vmatmul.mubr.bf16.gmra.mxu0 %v572
      %v1748 = vpop.f32.mrf.mxu0
      %v1749 = vadd.f32 %v1588, %v1748
      %v1750 = vpop.f32.mrf.mxu0
      %v1751 = vpop.f32.mrf.mxu0
      %v1752 = vadd.f32 %v1591, %v1751
      %v1753 = vpop.f32.mrf.mxu0
      %1754 = vmatprep.mubr.bf16.mxu0 %v576
      %1755 = vmatmul.mubr.bf16.gmra.mxu0 %v575
      %v1756 = vpop.f32.mrf.mxu0
      %v1757 = vadd.f32 %v1596, %v1756
      %v1758 = vpop.f32.mrf.mxu0
      %v1759 = vpop.f32.mrf.mxu0
      %v1760 = vadd.f32 %v1599, %v1759
      %v1761 = vpop.f32.mrf.mxu0
      %1762 = vmatprep.mubr.bf16.mxu0 %v579
      %1763 = vmatmul.mubr.bf16.gmra.mxu0 %v578
      %v1764 = vpop.f32.mrf.mxu0
      %v1765 = vadd.f32 %v1604, %v1764
      %v1766 = vpop.f32.mrf.mxu0
      %v1767 = vpop.f32.mrf.mxu0
      %v1768 = vadd.f32 %v1607, %v1767
      %v1769 = vpop.f32.mrf.mxu0
      %1770 = vmatprep.mubr.bf16.mxu0 %v582
      %1771 = vmatmul.mubr.bf16.gmra.mxu0 %v581
      %v1772 = vpop.f32.mrf.mxu0
      %v1773 = vadd.f32 %v1612, %v1772
      %v1774 = vpop.f32.mrf.mxu0
      %v1775 = vpop.f32.mrf.mxu0
      %v1776 = vadd.f32 %v1615, %v1775
      %v1777 = vpop.f32.mrf.mxu0
      %1778 = vmatprep.mubr.bf16.mxu0 %v585
      %1779 = vmatmul.mubr.bf16.gmra.mxu0 %v584
      %v1780 = vpop.f32.mrf.mxu0
      %v1781 = vadd.f32 %v1620, %v1780
      %v1782 = vpop.f32.mrf.mxu0
      %v1783 = vpop.f32.mrf.mxu0
      %v1784 = vadd.f32 %v1623, %v1783
      %v1785 = vpop.f32.mrf.mxu0
      %1786 = vmatprep.mubr.bf16.mxu0 %v588
      %1787 = vmatmul.mubr.bf16.gmra.mxu0 %v587
      %v1788 = vpop.f32.mrf.mxu0
      %v1789 = vadd.f32 %v1628, %v1788
      %v1790 = vpop.f32.mrf.mxu0
      %v1791 = vpop.f32.mrf.mxu0
      %v1792 = vadd.f32 %v1631, %v1791
      %v1793 = vpop.f32.mrf.mxu0
      %1794 = vmatprep.mubr.bf16.mxu0 %v591
      %1795 = vmatmul.mubr.bf16.gmra.mxu0 %v590
      %v1796 = vpop.f32.mrf.mxu0
      %v1797 = vadd.f32 %v1636, %v1796
      %v1798 = vpop.f32.mrf.mxu0
      %v1799 = vpop.f32.mrf.mxu0
      %v1800 = vadd.f32 %v1639, %v1799
      %v1801 = vpop.f32.mrf.mxu0
      %1802 = vmatprep.mubr.bf16.mxu0 %v594
      %1803 = vmatmul.mubr.bf16.gmra.mxu0 %v593
      %v1804 = vpop.f32.mrf.mxu0
      %v1805 = vadd.f32 %v1644, %v1804
      %v1806 = vpop.f32.mrf.mxu0
      %v1807 = vpop.f32.mrf.mxu0
      %v1808 = vadd.f32 %v1647, %v1807
      %v1809 = vpop.f32.mrf.mxu0
      %1810 = vmatprep.mubr.bf16.mxu0 %v597
      %1811 = vmatmul.mubr.bf16.gmra.mxu0 %v596
      %v1812 = vpop.f32.mrf.mxu0
      %v1813 = vadd.f32 %v1652, %v1812
      %v1814 = vpop.f32.mrf.mxu0
      %v1815 = vpop.f32.mrf.mxu0
      %v1816 = vadd.f32 %v1655, %v1815
      %v1817 = vpop.f32.mrf.mxu0
      %1818 = vdwg.mxu0
      %1819 = vmatprep.subr.bf16.mxu0 0
      %1820 = vmatpush1.bf16.msra.mxu0 %v1102
      %1821 = vmatprep.subr.bf16.mxu0 0
      %1822 = vmatpush1.bf16.msra.mxu0 %v1101
      %1823 = vmatprep.subr.bf16.mxu0 0
      %1824 = vmatpush1.bf16.msra.mxu0 %v1100
      %1825 = vmatprep.subr.bf16.mxu0 0
      %1826 = vmatpush1.bf16.msra.mxu0 %v1099
      %1827 = vmatprep.subr.bf16.mxu0 0
      %1828 = vmatpush1.bf16.msra.mxu0 %v1098
      %1829 = vmatprep.subr.bf16.mxu0 0
      %1830 = vmatpush1.bf16.msra.mxu0 %v1097
      %1831 = vmatprep.subr.bf16.mxu0 0
      %1832 = vmatpush1.bf16.msra.mxu0 %v1096
      %1833 = vmatprep.subr.bf16.mxu0 0
      %1834 = vmatpush1.bf16.msra.mxu0 %v1095
      %1835 = vmatprep.subr.bf16.mxu0 0
      %1836 = vmatpush2.bf16.msra.mxu0 0
      %1837 = vmatprep.subr.bf16.mxu0 0
      %1838 = vmatpush2.bf16.msra.mxu0 0
      %1839 = vmatprep.subr.bf16.mxu0 0
      %1840 = vmatpush2.bf16.msra.mxu0 0
      %1841 = vmatprep.subr.bf16.mxu0 0
      %1842 = vmatpush2.bf16.msra.mxu0 0
      %1843 = vmatprep.subr.bf16.mxu0 0
      %1844 = vmatpush2.bf16.msra.mxu0 0
      %1845 = vmatprep.subr.bf16.mxu0 0
      %1846 = vmatpush2.bf16.msra.mxu0 0
      %1847 = vmatprep.subr.bf16.mxu0 0
      %1848 = vmatpush2.bf16.msra.mxu0 0
      %1849 = vmatprep.subr.bf16.mxu0 0
      %1850 = vmatpush2.bf16.msra.mxu0 0
      %1851 = vmatprep.mubr.bf16.mxu0 0
      %1852 = vmatmul.mubr.bf16.gmra.mxu0 %v553
      %v1853 = vpop.f32.mrf.mxu0
      %v1854 = vadd.f32 %v1693, %v1853
      %v1855 = vpop.f32.mrf.mxu0
      %v1856 = vpop.f32.mrf.mxu0
      %v1857 = vadd.f32 %v1696, %v1856
      %v1858 = vpop.f32.mrf.mxu0
      %1859 = vmatprep.mubr.bf16.mxu0 0
      %1860 = vmatmul.mubr.bf16.gmra.mxu0 %v556
      %v1861 = vpop.f32.mrf.mxu0
      %v1862 = vadd.f32 %v1701, %v1861
      %v1863 = vpop.f32.mrf.mxu0
      %v1864 = vpop.f32.mrf.mxu0
      %v1865 = vadd.f32 %v1704, %v1864
      %v1866 = vpop.f32.mrf.mxu0
      %1867 = vmatprep.mubr.bf16.mxu0 0
      %1868 = vmatmul.mubr.bf16.gmra.mxu0 %v559
      %v1869 = vpop.f32.mrf.mxu0
      %v1870 = vadd.f32 %v1709, %v1869
      %v1871 = vpop.f32.mrf.mxu0
      %v1872 = vpop.f32.mrf.mxu0
      %v1873 = vadd.f32 %v1712, %v1872
      %v1874 = vpop.f32.mrf.mxu0
      %1875 = vmatprep.mubr.bf16.mxu0 0
      %1876 = vmatmul.mubr.bf16.gmra.mxu0 %v562
      %v1877 = vpop.f32.mrf.mxu0
      %v1878 = vadd.f32 %v1717, %v1877
      %v1879 = vpop.f32.mrf.mxu0
      %v1880 = vpop.f32.mrf.mxu0
      %v1881 = vadd.f32 %v1720, %v1880
      %v1882 = vpop.f32.mrf.mxu0
      %1883 = vmatprep.mubr.bf16.mxu0 0
      %1884 = vmatmul.mubr.bf16.gmra.mxu0 %v565
      %v1885 = vpop.f32.mrf.mxu0
      %v1886 = vadd.f32 %v1725, %v1885
      %v1887 = vpop.f32.mrf.mxu0
      %v1888 = vpop.f32.mrf.mxu0
      %v1889 = vadd.f32 %v1728, %v1888
      %v1890 = vpop.f32.mrf.mxu0
      %1891 = vmatprep.mubr.bf16.mxu0 0
      %1892 = vmatmul.mubr.bf16.gmra.mxu0 %v568
      %v1893 = vpop.f32.mrf.mxu0
      %v1894 = vadd.f32 %v1733, %v1893
      %v1895 = vpop.f32.mrf.mxu0
      %v1896 = vpop.f32.mrf.mxu0
      %v1897 = vadd.f32 %v1736, %v1896
      %v1898 = vpop.f32.mrf.mxu0
      %1899 = vmatprep.mubr.bf16.mxu0 0
      %1900 = vmatmul.mubr.bf16.gmra.mxu0 %v571
      %v1901 = vpop.f32.mrf.mxu0
      %v1902 = vadd.f32 %v1741, %v1901
      %v1903 = vpop.f32.mrf.mxu0
      %v1904 = vpop.f32.mrf.mxu0
      %v1905 = vadd.f32 %v1744, %v1904
      %v1906 = vpop.f32.mrf.mxu0
      %1907 = vmatprep.mubr.bf16.mxu0 0
      %1908 = vmatmul.mubr.bf16.gmra.mxu0 %v574
      %v1909 = vpop.f32.mrf.mxu0
      %v1910 = vadd.f32 %v1749, %v1909
      %v1911 = vpop.f32.mrf.mxu0
      %v1912 = vpop.f32.mrf.mxu0
      %v1913 = vadd.f32 %v1752, %v1912
      %v1914 = vpop.f32.mrf.mxu0
      %1915 = vmatprep.mubr.bf16.mxu0 0
      %1916 = vmatmul.mubr.bf16.gmra.mxu0 %v577
      %v1917 = vpop.f32.mrf.mxu0
      %v1918 = vadd.f32 %v1757, %v1917
      %v1919 = vpop.f32.mrf.mxu0
      %v1920 = vpop.f32.mrf.mxu0
      %v1921 = vadd.f32 %v1760, %v1920
      %v1922 = vpop.f32.mrf.mxu0
      %1923 = vmatprep.mubr.bf16.mxu0 0
      %1924 = vmatmul.mubr.bf16.gmra.mxu0 %v580
      %v1925 = vpop.f32.mrf.mxu0
      %v1926 = vadd.f32 %v1765, %v1925
      %v1927 = vpop.f32.mrf.mxu0
      %v1928 = vpop.f32.mrf.mxu0
      %v1929 = vadd.f32 %v1768, %v1928
      %v1930 = vpop.f32.mrf.mxu0
      %1931 = vmatprep.mubr.bf16.mxu0 0
      %1932 = vmatmul.mubr.bf16.gmra.mxu0 %v583
      %v1933 = vpop.f32.mrf.mxu0
      %v1934 = vadd.f32 %v1773, %v1933
      %v1935 = vpop.f32.mrf.mxu0
      %v1936 = vpop.f32.mrf.mxu0
      %v1937 = vadd.f32 %v1776, %v1936
      %v1938 = vpop.f32.mrf.mxu0
      %1939 = vmatprep.mubr.bf16.mxu0 0
      %1940 = vmatmul.mubr.bf16.gmra.mxu0 %v586
      %v1941 = vpop.f32.mrf.mxu0
      %v1942 = vadd.f32 %v1781, %v1941
      %v1943 = vpop.f32.mrf.mxu0
      %v1944 = vpop.f32.mrf.mxu0
      %v1945 = vadd.f32 %v1784, %v1944
      %v1946 = vpop.f32.mrf.mxu0
      %1947 = vmatprep.mubr.bf16.mxu0 0
      %1948 = vmatmul.mubr.bf16.gmra.mxu0 %v589
      %v1949 = vpop.f32.mrf.mxu0
      %v1950 = vadd.f32 %v1789, %v1949
      %v1951 = vpop.f32.mrf.mxu0
      %v1952 = vpop.f32.mrf.mxu0
      %v1953 = vadd.f32 %v1792, %v1952
      %v1954 = vpop.f32.mrf.mxu0
      %1955 = vmatprep.mubr.bf16.mxu0 0
      %1956 = vmatmul.mubr.bf16.gmra.mxu0 %v592
      %v1957 = vpop.f32.mrf.mxu0
      %v1958 = vadd.f32 %v1797, %v1957
      %v1959 = vpop.f32.mrf.mxu0
      %v1960 = vpop.f32.mrf.mxu0
      %v1961 = vadd.f32 %v1800, %v1960
      %v1962 = vpop.f32.mrf.mxu0
      %1963 = vmatprep.mubr.bf16.mxu0 0
      %1964 = vmatmul.mubr.bf16.gmra.mxu0 %v595
      %v1965 = vpop.f32.mrf.mxu0
      %v1966 = vadd.f32 %v1805, %v1965
      %v1967 = vpop.f32.mrf.mxu0
      %v1968 = vpop.f32.mrf.mxu0
      %v1969 = vadd.f32 %v1808, %v1968
      %v1970 = vpop.f32.mrf.mxu0
      %1971 = vmatprep.mubr.bf16.mxu0 0
      %1972 = vmatmul.mubr.bf16.gmra.mxu0 %v598
      %v1973 = vpop.f32.mrf.mxu0
      %v1974 = vadd.f32 %v1813, %v1973
      %v1975 = vpop.f32.mrf.mxu0
      %v1976 = vpop.f32.mrf.mxu0
      %v1977 = vadd.f32 %v1816, %v1976
      %v1978 = vpop.f32.mrf.mxu0
      %1979 = vdwg.mxu0
      %1980 = vst [vmem:[%s177] sm:$0xff] %v1854
      %1981 = vst [vmem:[%s177 + $0x8] sm:$0xff] %v1857
      %1982 = vst [vmem:[%s177 + $0x10] sm:$0xff] %v1862
      %1983 = vst [vmem:[%s177 + $0x18] sm:$0xff] %v1865
      %1984 = vst [vmem:[%s177 + $0x20] sm:$0xff] %v1870
      %1985 = vst [vmem:[%s177 + $0x28] sm:$0xff] %v1873
      %1986 = vst [vmem:[%s177 + $0x30] sm:$0xff] %v1878
      %1987 = vst [vmem:[%s177 + $0x38] sm:$0xff] %v1881
      %1988 = vst [vmem:[%s177 + $0x40] sm:$0xff] %v1886
      %1989 = vst [vmem:[%s177 + $0x48] sm:$0xff] %v1889
      %1990 = vst [vmem:[%s177 + $0x50] sm:$0xff] %v1894
      %1991 = vst [vmem:[%s177 + $0x58] sm:$0xff] %v1897
      %1992 = vst [vmem:[%s177 + $0x60] sm:$0xff] %v1902
      %1993 = vst [vmem:[%s177 + $0x68] sm:$0xff] %v1905
      %1994 = vst [vmem:[%s177 + $0x70] sm:$0xff] %v1910
      %1995 = vst [vmem:[%s177 + $0x78] sm:$0xff] %v1913
      %1996 = vst [vmem:[%s177 + $0x80] sm:$0xff] %v1918
      %1997 = vst [vmem:[%s177 + $0x88] sm:$0xff] %v1921
      %1998 = vst [vmem:[%s177 + $0x90] sm:$0xff] %v1926
      %1999 = vst [vmem:[%s177 + $0x98] sm:$0xff] %v1929
      %2000 = vst [vmem:[%s177 + $0xa0] sm:$0xff] %v1934
      %2001 = vst [vmem:[%s177 + $0xa8] sm:$0xff] %v1937
      %2002 = vst [vmem:[%s177 + $0xb0] sm:$0xff] %v1942
      %2003 = vst [vmem:[%s177 + $0xb8] sm:$0xff] %v1945
      %2004 = vst [vmem:[%s177 + $0xc0] sm:$0xff] %v1950
      %2005 = vst [vmem:[%s177 + $0xc8] sm:$0xff] %v1953
      %2006 = vst [vmem:[%s177 + $0xd0] sm:$0xff] %v1958
      %2007 = vst [vmem:[%s177 + $0xd8] sm:$0xff] %v1961
      %2008 = vst [vmem:[%s177 + $0xe0] sm:$0xff] %v1966
      %2009 = vst [vmem:[%s177 + $0xe8] sm:$0xff] %v1969
      %2010 = vst [vmem:[%s177 + $0xf0] sm:$0xff] %v1974
      %2011 = vst [vmem:[%s177 + $0xf8] sm:$0xff] %v1977
      %v2012 = vadd.f32 %v1854, %v1857
      %v2013 = vadd.f32 %v2012, %v1862
      %v2014 = vadd.f32 %v2013, %v1865
      %v2015 = vadd.f32 %v2014, %v1870
      %v2016 = vadd.f32 %v2015, %v1873
      %v2017 = vadd.f32 %v2016, %v1878
      %v2018 = vadd.f32 %v2017, %v1881
      %v2019 = vadd.f32 %v2018, %v1886
      %v2020 = vadd.f32 %v2019, %v1889
      %v2021 = vadd.f32 %v2020, %v1894
      %v2022 = vadd.f32 %v2021, %v1897
      %v2023 = vadd.f32 %v2022, %v1902
      %v2024 = vadd.f32 %v2023, %v1905
      %v2025 = vadd.f32 %v2024, %v1910
      %v2026 = vadd.f32 %v2025, %v1913
      %v2027 = vadd.f32 %v2026, %v1918
      %v2028 = vadd.f32 %v2027, %v1921
      %v2029 = vadd.f32 %v2028, %v1926
      %v2030 = vadd.f32 %v2029, %v1929
      %v2031 = vadd.f32 %v2030, %v1934
      %v2032 = vadd.f32 %v2031, %v1937
      %v2033 = vadd.f32 %v2032, %v1942
      %v2034 = vadd.f32 %v2033, %v1945
      %v2035 = vadd.f32 %v2034, %v1950
      %v2036 = vadd.f32 %v2035, %v1953
      %v2037 = vadd.f32 %v2036, %v1958
      %v2038 = vadd.f32 %v2037, %v1961
      %v2039 = vadd.f32 %v2038, %v1966
      %v2040 = vadd.f32 %v2039, %v1969
      %v2041 = vadd.f32 %v2040, %v1974
      %v2042 = vadd.f32 %v2041, %v1977
      %v2043 = vrot.slane %v2042, 4
      %v2044 = vadd.f32 %v2042, %v2043
      %v2045 = vrot.slane %v2044, 2
      %v2046 = vadd.f32 %v2044, %v2045
      %v2047 = vrot.slane %v2046, 1
      %v2048 = vadd.f32 %v2046, %v2047
      %v2049 = vmul.f32 %v1854, %v1854
      %v2050 = vmul.f32 %v1857, %v1857
      %v2051 = vmul.f32 %v1862, %v1862
      %v2052 = vmul.f32 %v1865, %v1865
      %v2053 = vmul.f32 %v1870, %v1870
      %v2054 = vmul.f32 %v1873, %v1873
      %v2055 = vmul.f32 %v1878, %v1878
      %v2056 = vmul.f32 %v1881, %v1881
      %v2057 = vmul.f32 %v1886, %v1886
      %v2058 = vmul.f32 %v1889, %v1889
      %v2059 = vmul.f32 %v1894, %v1894
      %v2060 = vmul.f32 %v1897, %v1897
      %v2061 = vmul.f32 %v1902, %v1902
      %v2062 = vmul.f32 %v1905, %v1905
      %v2063 = vmul.f32 %v1910, %v1910
      %v2064 = vmul.f32 %v1913, %v1913
      %v2065 = vmul.f32 %v1918, %v1918
      %v2066 = vmul.f32 %v1921, %v1921
      %v2067 = vmul.f32 %v1926, %v1926
      %v2068 = vmul.f32 %v1929, %v1929
      %v2069 = vmul.f32 %v1934, %v1934
      %v2070 = vmul.f32 %v1937, %v1937
      %v2071 = vmul.f32 %v1942, %v1942
      %v2072 = vmul.f32 %v1945, %v1945
      %v2073 = vmul.f32 %v1950, %v1950
      %v2074 = vmul.f32 %v1953, %v1953
      %v2075 = vmul.f32 %v1958, %v1958
      %v2076 = vmul.f32 %v1961, %v1961
      %v2077 = vmul.f32 %v1966, %v1966
      %v2078 = vmul.f32 %v1969, %v1969
      %v2079 = vmul.f32 %v1974, %v1974
      %v2080 = vmul.f32 %v1977, %v1977
      %v2081 = vadd.f32 %v2049, %v2050
      %v2082 = vadd.f32 %v2081, %v2051
      %v2083 = vadd.f32 %v2082, %v2052
      %v2084 = vadd.f32 %v2083, %v2053
      %v2085 = vadd.f32 %v2084, %v2054
      %v2086 = vadd.f32 %v2085, %v2055
      %v2087 = vadd.f32 %v2086, %v2056
      %v2088 = vadd.f32 %v2087, %v2057
      %v2089 = vadd.f32 %v2088, %v2058
      %v2090 = vadd.f32 %v2089, %v2059
      %v2091 = vadd.f32 %v2090, %v2060
      %v2092 = vadd.f32 %v2091, %v2061
      %v2093 = vadd.f32 %v2092, %v2062
      %v2094 = vadd.f32 %v2093, %v2063
      %v2095 = vadd.f32 %v2094, %v2064
      %v2096 = vadd.f32 %v2095, %v2065
      %v2097 = vadd.f32 %v2096, %v2066
      %v2098 = vadd.f32 %v2097, %v2067
      %v2099 = vadd.f32 %v2098, %v2068
      %v2100 = vadd.f32 %v2099, %v2069
      %v2101 = vadd.f32 %v2100, %v2070
      %v2102 = vadd.f32 %v2101, %v2071
      %v2103 = vadd.f32 %v2102, %v2072
      %v2104 = vadd.f32 %v2103, %v2073
      %v2105 = vadd.f32 %v2104, %v2074
      %v2106 = vadd.f32 %v2105, %v2075
      %v2107 = vadd.f32 %v2106, %v2076
      %v2108 = vadd.f32 %v2107, %v2077
      %v2109 = vadd.f32 %v2108, %v2078
      %v2110 = vadd.f32 %v2109, %v2079
      %v2111 = vadd.f32 %v2110, %v2080
      %v2112 = vrot.slane %v2111, 4
      %v2113 = vadd.f32 %v2111, %v2112
      %v2114 = vrot.slane %v2113, 2
      %v2115 = vadd.f32 %v2113, %v2114
      %v2116 = vrot.slane %v2115, 1
      %v2117 = vadd.f32 %v2115, %v2116
      %vm2118 = vcmask 1040384
      %v2119 = vsel %vm2118, %v2048, %v2117
      %2120 = vst [vmem:[%s181] sm:$0x3] %v2119
      %p2121 = scmp.lt.s32.totalorder %s15, 1
      %s2122 = scalar_select %p2121, %s15, 1
      %s2123 = smul.addr %s2122, 32
      %s2124 = smul.addr %s2123, 8
      %s2125 = scalar_lea.vmem %s2, %s2124
      %p2126 = scmp.lt.s32.totalorder %s15, 1
      %s2127 = scalar_select %p2126, %s15, 1
      %s2128 = smul.addr %s2127, 2
      %s2129 = scalar_lea.vmem %s3, %s2128
      // Predicated region
      $region29: #{upblock_attention_forward.6} parent=27 // pred_check
        %p2130 = pneg %p80
      $region30: #{upblock_attention_forward.6} parent=27 // pred_check_branch
        %2132 = sbr.rel (%p2130) target = $region32
      $region31: #{upblock_attention_forward.6} parent=27 // pred_region
        _
      $region32: #{upblock_attention_forward.6} parent=27 // pred_fallthru
        _
      // Predicated region
      $region33: #{upblock_attention_forward.6} parent=27 // pred_check
        %p2133 = pneg %p106
      $region34: #{upblock_attention_forward.6} parent=27 // pred_check_branch
        %2135 = sbr.rel (%p2133) target = $region36
      $region35: #{upblock_attention_forward.6} parent=27 // pred_region
        _
      $region36: #{upblock_attention_forward.6} parent=27 // pred_fallthru
        _
    $region28: #{upblock_attention_forward.6} parent=5 // pred_fallthru
      _
    %p2136 = scmp.le.s32.totalorder 2, %s10
    // Predicated region
    $region37: #{upblock_attention_forward.6} parent=5 // pred_check
      %p2137 = pneg %p2136
    $region38: #{upblock_attention_forward.6} parent=5 // pred_check_branch
      %2139 = sbr.rel (%p2137) target = $region40
    $region39: #{upblock_attention_forward.6} parent=5 // pred_region
      %s2140 = ssub.s32 %s10, 2
      // Predicated region
      $region41: #{upblock_attention_forward.6} parent=39 // pred_check
        %p2141 = pneg %p86
      $region42: #{upblock_attention_forward.6} parent=39 // pred_check_branch
        %2143 = sbr.rel (%p2141) target = $region44
      $region43: #{upblock_attention_forward.6} parent=39 // pred_region
        %p2144 = scmp.lt.s32.totalorder %s16, 1
        %s2145 = scalar_select %p2144, %s16, 1
        %s2146 = smul.addr %s2145, 32
        %s2147 = smul.addr %s2146, 8
        %s2148 = scalar_lea.vmem %s2, %s2147
      $region44: #{upblock_attention_forward.6} parent=39 // pred_fallthru
        _
      // Predicated region
      $region45: #{upblock_attention_forward.6} parent=39 // pred_check
        %p2149 = pneg %p112
      $region46: #{upblock_attention_forward.6} parent=39 // pred_check_branch
        %2151 = sbr.rel (%p2149) target = $region48
      $region47: #{upblock_attention_forward.6} parent=39 // pred_region
        %p2152 = scmp.lt.s32.totalorder %s16, 1
        %s2153 = scalar_select %p2152, %s16, 1
        %s2154 = smul.addr %s2153, 2
        %s2155 = scalar_lea.vmem %s3, %s2154
      $region48: #{upblock_attention_forward.6} parent=39 // pred_fallthru
        _
    $region40: #{upblock_attention_forward.6} parent=5 // pred_fallthru
      _
  $region6: #{upblock_attention_forward.6} parent=0 // loop_footer
    %s14 = sadd.s32 1, %s10
  $region7: #{upblock_attention_forward.6} parent=0 // loop_footer_branch
    %9 = sbr.rel target = $region3
  $region8: #{upblock_attention_forward.6} parent=0 // loop_exit
    _

</llo_original>
